<compile_context>
chip_gen: v6e
topology: v6e:2x2x1
jax: 0.10.0
libtpu: 0.0.40
codegen_flags: <defaults>
</compile_context>

<pallas_src>
import jax
import jax.numpy as jnp
import numpy as np
from jax import lax
from jax.experimental import pallas as pl
from jax.experimental.pallas import tpu as pltpu

ATOMS = 14
CUTOFF = 6.0
_HIGH = lax.Precision.HIGHEST


def atom_interaction_mask_batch(pos14, ppi_code, cutoff=CUTOFF):
    # TODO(synk): atom_interaction_mask_batch is not defined in the reference
    # snippet; assumed semantics: atoms interact iff their distance < cutoff
    # and their residues belong to different interaction partners.  This mask
    # is symmetric, which the kernel's Term1 relies on.  For very large M the
    # O(M^2) mask should be generated in-kernel per row-tile instead of being
    # materialized and DMA'd (see TODO in _pipool_pool).
    N, L, A, _ = pos14.shape
    pos = pos14.reshape(N, L * A, 3)
    d2 = jnp.sum((pos[:, :, None, :] - pos[:, None, :, :]) ** 2, axis=-1)
    code = jnp.repeat(ppi_code, A, axis=1)                      # (N, L*A)
    cross = code[:, :, None] != code[:, None, :]
    return (d2 < cutoff * cutoff) & cross                       # (N, M, M) bool


def _pipool_kernel(featsT_ref, mask_ref, pt_ref, vabT_ref, scal_ref, out_ref):
    f32 = jnp.float32
    pt = pt_ref[...]                           # (14, M) f32, exact 0/1 class indicators
    ptb = pt.astype(jnp.bfloat16)              # bf16 copy for the big mask matmul (exact)
    vabT = vabT_ref[...]                       # (2, D)  f32, rows: W1a@w2, W1b@w2
    scal = scal_ref[...]                       # (1, 2)  f32, [b1.w2, b2]
    c1c = scal[:, 0:1]                         # (1, 1)
    b2 = scal[:, 1:2]                          # (1, 1)
    nb = out_ref.shape[0]
    dn = (((1,), (1,)), ((), ()))              # contract over the lane (atom) axis

    for b in range(nb):                        # static unroll over the batch block
        mask = mask_ref[b]                     # (M, M) bf16, 0/1
        featsT = featsT_ref[b]                 # (D, M) f32

        # C[c, j] = number of class-c atoms interacting with atom j (lane-dense).
        # Single bf16 MXU pass, exact for 0/1 inputs, f32 accumulation.
        C = jnp.dot(ptb, mask, preferred_element_type=f32)                     # (14, M)

        # Per-atom folded projections: a_j = f_j.va + b1.w2 ; b_j = f_j.vb.
        ab = jnp.dot(vabT, featsT, preferred_element_type=f32, precision=_HIGH)  # (2, M)
        a_row = ab[0:1, :] + c1c               # (1, M)
        b_row = ab[1:2, :]                     # (1, M)

        # logits[c1,c2] = sum_{i%14=c1, j%14=c2} mask[i,j]*(a_i + b_j) + b2
        # Term1 uses mask symmetry (rowsum == colsum == C); Term2/count are exact.
        t1 = lax.dot_general(pt * a_row, C, dn,
                             precision=_HIGH, preferred_element_type=f32)      # (14,14) [c1,c2]
        t2 = lax.dot_general(C, pt * b_row, dn,
                             precision=_HIGH, preferred_element_type=f32)      # (14,14) [c1,c2]
        count = lax.dot_general(C, pt, dn,
                                precision=_HIGH, preferred_element_type=f32)   # (14,14)

        logits = t1 + t2 + b2
        logits = jnp.where(count > 0.5, logits, f32(-1e5))
        m = jnp.max(logits, axis=-1, keepdims=True)
        e = jnp.exp(logits - m)
        s = jnp.sum(e, axis=-1, keepdims=True)
        out_ref[b] = e * pl.reciprocal(s, approx=True)


def _pipool_pool(feats, mask_bool, consts, batch_block=8):
    """One _get_edge_feats + _get_cnt_feats pass; returns (N, 196)."""
    N, M, D = feats.shape
    nb = int(min(batch_block, N))
    featsT = jnp.swapaxes(feats, 1, 2)               # (N, D, M), lane-dense in atoms
    mask_bf = mask_bool.astype(jnp.bfloat16)         # (N, M, M), half the f32 traffic

    def cspec(arr):
        nd = arr.ndim
        return pl.BlockSpec(arr.shape, lambda n, _nd=nd: (0,) * _nd)

    # TODO(synk): for very large M (mask block ~ nb*M*M*2B double-buffered) add a
    # second grid axis that row-tiles the mask and accumulates C in a VMEM
    # scratch with pl.when init/finalize (needed to fit v7x's 64 MiB VMEM).
    out = pl.pallas_call(
        _pipool_kernel,
        out_shape=jax.ShapeDtypeStruct((N, ATOMS, ATOMS), jnp.float32),
        grid=(pl.cdiv(N, nb),),
        in_specs=[
            pl.BlockSpec((nb, D, M), lambda n: (n, 0, 0)),    # featsT, batch block
            pl.BlockSpec((nb, M, M), lambda n: (n, 0, 0)),    # mask,   batch block
            cspec(consts["pt"]),
            cspec(consts["vabT"]),
            cspec(consts["scal"]),
        ],
        out_specs=pl.BlockSpec((nb, ATOMS, ATOMS), lambda n: (n, 0, 0)),
        compiler_params=pltpu.CompilerParams(dimension_semantics=("parallel",)),
    )(featsT, mask_bf, consts["pt"], consts["vabT"], consts["scal"])
    return out.reshape(N, ATOMS * ATOMS)


def pi_pooling_softmax_forward(consts, feats_wt, feats_mut, pos14_wt, pos14_mut,
                               ppi_code_wt, ppi_code_mut):
    mask_wt = atom_interaction_mask_batch(pos14_wt, ppi_code_wt)
    mask_mut = atom_interaction_mask_batch(pos14_mut, ppi_code_mut)
    cnt_wt = _pipool_pool(feats_wt, mask_wt, consts)
    cnt_mut = _pipool_pool(feats_mut, mask_mut, consts)
    return cnt_mut - cnt_wt


def make_consts(feat_dim, hidden_dim, M, key):
    """nn.Linear(2D,H)/nn.Linear(H,1)-style params + pre-folded kernel constants."""
    D, H = feat_dim, hidden_dim
    k1, k2, k3, k4 = jax.random.split(key, 4)
    lim1 = 1.0 / np.sqrt(2 * D)
    W1 = jax.random.uniform(k1, (2 * D, H), jnp.float32, -lim1, lim1)   # (in, out)
    b1 = jax.random.uniform(k2, (H,), jnp.float32, -lim1, lim1)
    lim2 = 1.0 / np.sqrt(H)
    w2 = jax.random.uniform(k3, (H,), jnp.float32, -lim2, lim2)
    b2 = jax.random.uniform(k4, (), jnp.float32, -lim2, lim2)

    # Folded weights (H eliminated): va = W1a @ w2, vb = W1b @ w2, c1 = b1.w2.
    va = jnp.matmul(W1[:D], w2, precision=_HIGH)
    vb = jnp.matmul(W1[D:], w2, precision=_HIGH)
    c1const = jnp.dot(b1, w2, precision=_HIGH)
    vabT = jnp.stack([va, vb], axis=0)                                  # (2, D)
    scal = jnp.stack([c1const, b2]).reshape(1, 2).astype(jnp.float32)   # (1, 2)

    cidx = jnp.arange(M) % ATOMS
    Pt = (jnp.arange(ATOMS)[:, None] == cidx[None, :]).astype(jnp.float32)  # (14, M)

    return dict(pt=Pt, vabT=vabT, scal=scal,
                # dense copies for the pure-JAX reference check
                W1=W1, b1=b1, w2=w2, b2=b2)


# -------- pure-JAX dense reference (mirrors the PyTorch code literally) --------
def _pool_reference(consts, feats, mask_bool):
    N, M, D = feats.shape
    L = M // ATOMS
    fi = jnp.broadcast_to(feats[:, :, None, :], (N, M, M, D))
    fj = jnp.broadcast_to(feats[:, None, :, :], (N, M, M, D))
    ef = jnp.matmul(jnp.concatenate([fi, fj], axis=-1), consts["W1"],
                    precision=_HIGH) + consts["b1"]
    ef = jnp.where(mask_bool[..., None], ef, 0.0)
    cf = ef.reshape(N, L, ATOMS, L, ATOMS, -1).sum(axis=(1, 3))
    logits = jnp.matmul(cf, consts["w2"], precision=_HIGH) + consts["b2"]
    cmask = mask_bool.reshape(N, L, ATOMS, L, ATOMS).sum(axis=(1, 3)) > 0
    logits = jnp.where(cmask, logits, jnp.float32(-1e5))
    return jax.nn.softmax(logits, axis=-1).reshape(N, ATOMS * ATOMS)


def forward_reference(consts, fw, fm, pw, pm, cw, cm):
    return (_pool_reference(consts, fm, atom_interaction_mask_batch(pm, cm))
            - _pool_reference(consts, fw, atom_interaction_mask_batch(pw, cw)))


if __name__ == "__main__":
    N, L, D, H = 2, 4, 16, 32          # batch, residues, feat_dim, hidden_dim
    M = L * ATOMS                       # 56 atoms per complex
    key = jax.random.PRNGKey(0)
    kf1, kf2, kp1, kp2, kparam = jax.random.split(key, 5)

    feats_wt = jax.random.normal(kf1, (N, M, D), jnp.float32)
    feats_mut = jax.random.normal(kf2, (N, M, D), jnp.float32)
    pos14_wt = 4.0 * jax.random.normal(kp1, (N, L, ATOMS, 3), jnp.float32)
    pos14_mut = pos14_wt + 0.5 * jax.random.normal(kp2, (N, L, ATOMS, 3), jnp.float32)
    ppi_code_wt = jnp.tile(jnp.array([0, 0, 1, 1], jnp.int32), (N, 1))
    ppi_code_mut = ppi_code_wt

    consts = make_consts(D, H, M, kparam)

    fwd = jax.jit(pi_pooling_softmax_forward)
    out = jax.block_until_ready(
        fwd(consts, feats_wt, feats_mut, pos14_wt, pos14_mut,
            ppi_code_wt, ppi_code_mut))

    ref = jax.block_until_ready(
        forward_reference(consts, feats_wt, feats_mut, pos14_wt, pos14_mut,
                          ppi_code_wt, ppi_code_mut))

    assert out.shape == (N, ATOMS * ATOMS)
    np.testing.assert_allclose(np.asarray(out), np.asarray(ref), atol=2e-3, rtol=1e-2)
    print("KERNEL_OK")
</pallas_src>

<mosaic_0001>
module attributes {stable_mosaic.version = 11 : i64} {
  func.func @_pipool_kernel(%arg0: i32, %arg1: memref<2x16x56xf32, #tpu.memory_space<vmem>>, %arg2: memref<2x56x56xbf16, #tpu.memory_space<vmem>>, %arg3: memref<14x56xf32, #tpu.memory_space<vmem>>, %arg4: memref<2x16xf32, #tpu.memory_space<vmem>>, %arg5: memref<1x2xf32, #tpu.memory_space<vmem>>, %arg6: memref<2x14x14xf32, #tpu.memory_space<vmem>>) attributes {dimension_semantics = [#tpu.dimension_semantics<parallel>], iteration_bounds = array<i64: 1>, scalar_prefetch = 0 : i64, scratch_operands = 0 : i64, tpu.core_type = #tpu.core_type<tc>, window_params = [{transform_indices = @transform_0, window_bounds = array<i64: 2, 16, 56>}, {transform_indices = @transform_1, window_bounds = array<i64: 2, 56, 56>}, {pipeline_mode = #tpu.pipeline_mode<synchronous>, transform_indices = @transform_2, window_bounds = array<i64: 14, 56>}, {pipeline_mode = #tpu.pipeline_mode<synchronous>, transform_indices = @transform_3, window_bounds = array<i64: 2, 16>}, {pipeline_mode = #tpu.pipeline_mode<synchronous>, transform_indices = @transform_4, window_bounds = array<i64: 1, 2>}, {transform_indices = @transform_5, window_bounds = array<i64: 2, 14, 14>}]} {
    %c0 = arith.constant 0 : index
    %c0_0 = arith.constant 0 : index
    %0 = vector.load %arg3[%c0, %c0_0] : memref<14x56xf32, #tpu.memory_space<vmem>>, vector<14x56xf32>
    %1 = arith.truncf %0 : vector<14x56xf32> to vector<14x56xbf16>
    %c0_1 = arith.constant 0 : index
    %c0_2 = arith.constant 0 : index
    %2 = vector.load %arg4[%c0_1, %c0_2] : memref<2x16xf32, #tpu.memory_space<vmem>>, vector<2x16xf32>
    %c0_3 = arith.constant 0 : index
    %c0_4 = arith.constant 0 : index
    %3 = vector.load %arg5[%c0_3, %c0_4] : memref<1x2xf32, #tpu.memory_space<vmem>>, vector<1x2xf32>
    %4 = vector.extract_strided_slice %3 {offsets = [0, 0], sizes = [1, 1], strides = [1, 1]} : vector<1x2xf32> to vector<1x1xf32>
    %5 = vector.extract_strided_slice %3 {offsets = [0, 1], sizes = [1, 1], strides = [1, 1]} : vector<1x2xf32> to vector<1x1xf32>
    %c0_5 = arith.constant 0 : index
    %c0_6 = arith.constant 0 : index
    %c0_7 = arith.constant 0 : index
    %6 = vector.load %arg2[%c0_5, %c0_6, %c0_7] : memref<2x56x56xbf16, #tpu.memory_space<vmem>>, vector<1x56x56xbf16>
    %7 = vector.shape_cast %6 : vector<1x56x56xbf16> to vector<56x56xbf16>
    %c0_8 = arith.constant 0 : index
    %c0_9 = arith.constant 0 : index
    %c0_10 = arith.constant 0 : index
    %8 = vector.load %arg1[%c0_8, %c0_9, %c0_10] : memref<2x16x56xf32, #tpu.memory_space<vmem>>, vector<1x16x56xf32>
    %9 = vector.shape_cast %8 : vector<1x16x56xf32> to vector<16x56xf32>
    %cst = arith.constant dense<0.000000e+00> : vector<14x56xf32>
    %10 = tpu.matmul %1, %7, %cst {dimension_numbers = #tpu.dot_dimension_numbers<[1], [0], [0], [1], [0, 0, 1, 1], [], []>} : vector<14x56xbf16>, vector<56x56xbf16>, vector<14x56xf32> -> vector<14x56xf32>
    %cst_11 = arith.constant dense<0.000000e+00> : vector<2x56xf32>
    %11 = tpu.matmul %2, %9, %cst_11 {dimension_numbers = #tpu.dot_dimension_numbers<[1], [0], [0], [1], [0, 0, 1, 1], [], []>, precision = #tpu.contract_precision<fp32>} : vector<2x16xf32>, vector<16x56xf32>, vector<2x56xf32> -> vector<2x56xf32>
    %12 = vector.extract_strided_slice %11 {offsets = [0, 0], sizes = [1, 56], strides = [1, 1]} : vector<2x56xf32> to vector<1x56xf32>
    %13 = vector.broadcast %4 : vector<1x1xf32> to vector<1x56xf32>
    %14 = arith.addf %12, %13 : vector<1x56xf32>
    %15 = vector.extract_strided_slice %11 {offsets = [1, 0], sizes = [1, 56], strides = [1, 1]} : vector<2x56xf32> to vector<1x56xf32>
    %16 = vector.broadcast %14 : vector<1x56xf32> to vector<14x56xf32>
    %17 = arith.mulf %0, %16 : vector<14x56xf32>
    %cst_12 = arith.constant dense<0.000000e+00> : vector<14x14xf32>
    %18 = tpu.matmul %17, %10, %cst_12 {dimension_numbers = #tpu.dot_dimension_numbers<[1], [1], [0], [0], [0, 0, 1, 0], [], []>, precision = #tpu.contract_precision<fp32>} : vector<14x56xf32>, vector<14x56xf32>, vector<14x14xf32> -> vector<14x14xf32>
    %19 = vector.broadcast %15 : vector<1x56xf32> to vector<14x56xf32>
    %20 = arith.mulf %0, %19 : vector<14x56xf32>
    %cst_13 = arith.constant dense<0.000000e+00> : vector<14x14xf32>
    %21 = tpu.matmul %10, %20, %cst_13 {dimension_numbers = #tpu.dot_dimension_numbers<[1], [1], [0], [0], [0, 0, 1, 0], [], []>, precision = #tpu.contract_precision<fp32>} : vector<14x56xf32>, vector<14x56xf32>, vector<14x14xf32> -> vector<14x14xf32>
    %cst_14 = arith.constant dense<0.000000e+00> : vector<14x14xf32>
    %22 = tpu.matmul %10, %0, %cst_14 {dimension_numbers = #tpu.dot_dimension_numbers<[1], [1], [0], [0], [0, 0, 1, 0], [], []>, precision = #tpu.contract_precision<fp32>} : vector<14x56xf32>, vector<14x56xf32>, vector<14x14xf32> -> vector<14x14xf32>
    %23 = arith.addf %18, %21 : vector<14x14xf32>
    %24 = vector.broadcast %5 : vector<1x1xf32> to vector<14x14xf32>
    %25 = arith.addf %23, %24 : vector<14x14xf32>
    %cst_15 = arith.constant 5.000000e-01 : f32
    %26 = vector.broadcast %cst_15 : f32 to vector<14x14xf32>
    %27 = arith.cmpf ogt, %22, %26 : vector<14x14xf32>
    %cst_16 = arith.constant -1.000000e+05 : f32
    %28 = vector.broadcast %cst_16 : f32 to vector<14x14xf32>
    %29 = arith.select %27, %25, %28 : vector<14x14xi1>, vector<14x14xf32>
    %cst_17 = arith.constant dense<0xFF800000> : vector<14xf32>
    %30 = vector.multi_reduction <maximumf>, %29, %cst_17 [1] : vector<14x14xf32> to vector<14xf32>
    %31 = vector.shape_cast %30 : vector<14xf32> to vector<14x1xf32>
    %32 = vector.broadcast %31 : vector<14x1xf32> to vector<14x14xf32>
    %33 = arith.subf %29, %32 : vector<14x14xf32>
    %34 = math.exp %33 : vector<14x14xf32>
    %cst_18 = arith.constant dense<0.000000e+00> : vector<14xf32>
    %35 = vector.multi_reduction <add>, %34, %cst_18 [1] : vector<14x14xf32> to vector<14xf32>
    %36 = vector.shape_cast %35 : vector<14xf32> to vector<14x1xf32>
    %37 = tpu.reciprocal %36 {approx = true} : vector<14x1xf32> -> vector<14x1xf32>
    %38 = vector.broadcast %37 : vector<14x1xf32> to vector<14x14xf32>
    %39 = arith.mulf %34, %38 : vector<14x14xf32>
    %c0_19 = arith.constant 0 : index
    %c0_20 = arith.constant 0 : index
    %c0_21 = arith.constant 0 : index
    %40 = vector.load %arg6[%c0_19, %c0_20, %c0_21] : memref<2x14x14xf32, #tpu.memory_space<vmem>>, vector<1x14x14xf32>
    %41 = vector.shape_cast %40 : vector<1x14x14xf32> to vector<14x14xf32>
    %42 = vector.shape_cast %39 : vector<14x14xf32> to vector<1x14x14xf32>
    tpu.vector_store %arg6[%c0_19, %c0_20, %c0_21], %42 {strides = array<i32>} : memref<2x14x14xf32, #tpu.memory_space<vmem>>, vector<1x14x14xf32>,
    %c1 = arith.constant 1 : index
    %c0_22 = arith.constant 0 : index
    %c0_23 = arith.constant 0 : index
    %43 = vector.load %arg2[%c1, %c0_22, %c0_23] : memref<2x56x56xbf16, #tpu.memory_space<vmem>>, vector<1x56x56xbf16>
    %44 = vector.shape_cast %43 : vector<1x56x56xbf16> to vector<56x56xbf16>
    %c1_24 = arith.constant 1 : index
    %c0_25 = arith.constant 0 : index
    %c0_26 = arith.constant 0 : index
    %45 = vector.load %arg1[%c1_24, %c0_25, %c0_26] : memref<2x16x56xf32, #tpu.memory_space<vmem>>, vector<1x16x56xf32>
    %46 = vector.shape_cast %45 : vector<1x16x56xf32> to vector<16x56xf32>
    %cst_27 = arith.constant dense<0.000000e+00> : vector<14x56xf32>
    %47 = tpu.matmul %1, %44, %cst_27 {dimension_numbers = #tpu.dot_dimension_numbers<[1], [0], [0], [1], [0, 0, 1, 1], [], []>} : vector<14x56xbf16>, vector<56x56xbf16>, vector<14x56xf32> -> vector<14x56xf32>
    %cst_28 = arith.constant dense<0.000000e+00> : vector<2x56xf32>
    %48 = tpu.matmul %2, %46, %cst_28 {dimension_numbers = #tpu.dot_dimension_numbers<[1], [0], [0], [1], [0, 0, 1, 1], [], []>, precision = #tpu.contract_precision<fp32>} : vector<2x16xf32>, vector<16x56xf32>, vector<2x56xf32> -> vector<2x56xf32>
    %49 = vector.extract_strided_slice %48 {offsets = [0, 0], sizes = [1, 56], strides = [1, 1]} : vector<2x56xf32> to vector<1x56xf32>
    %50 = vector.broadcast %4 : vector<1x1xf32> to vector<1x56xf32>
    %51 = arith.addf %49, %50 : vector<1x56xf32>
    %52 = vector.extract_strided_slice %48 {offsets = [1, 0], sizes = [1, 56], strides = [1, 1]} : vector<2x56xf32> to vector<1x56xf32>
    %53 = vector.broadcast %51 : vector<1x56xf32> to vector<14x56xf32>
    %54 = arith.mulf %0, %53 : vector<14x56xf32>
    %cst_29 = arith.constant dense<0.000000e+00> : vector<14x14xf32>
    %55 = tpu.matmul %54, %47, %cst_29 {dimension_numbers = #tpu.dot_dimension_numbers<[1], [1], [0], [0], [0, 0, 1, 0], [], []>, precision = #tpu.contract_precision<fp32>} : vector<14x56xf32>, vector<14x56xf32>, vector<14x14xf32> -> vector<14x14xf32>
    %56 = vector.broadcast %52 : vector<1x56xf32> to vector<14x56xf32>
    %57 = arith.mulf %0, %56 : vector<14x56xf32>
    %cst_30 = arith.constant dense<0.000000e+00> : vector<14x14xf32>
    %58 = tpu.matmul %47, %57, %cst_30 {dimension_numbers = #tpu.dot_dimension_numbers<[1], [1], [0], [0], [0, 0, 1, 0], [], []>, precision = #tpu.contract_precision<fp32>} : vector<14x56xf32>, vector<14x56xf32>, vector<14x14xf32> -> vector<14x14xf32>
    %cst_31 = arith.constant dense<0.000000e+00> : vector<14x14xf32>
    %59 = tpu.matmul %47, %0, %cst_31 {dimension_numbers = #tpu.dot_dimension_numbers<[1], [1], [0], [0], [0, 0, 1, 0], [], []>, precision = #tpu.contract_precision<fp32>} : vector<14x56xf32>, vector<14x56xf32>, vector<14x14xf32> -> vector<14x14xf32>
    %60 = arith.addf %55, %58 : vector<14x14xf32>
    %61 = vector.broadcast %5 : vector<1x1xf32> to vector<14x14xf32>
    %62 = arith.addf %60, %61 : vector<14x14xf32>
    %cst_32 = arith.constant 5.000000e-01 : f32
    %63 = vector.broadcast %cst_32 : f32 to vector<14x14xf32>
    %64 = arith.cmpf ogt, %59, %63 : vector<14x14xf32>
    %cst_33 = arith.constant -1.000000e+05 : f32
    %65 = vector.broadcast %cst_33 : f32 to vector<14x14xf32>
    %66 = arith.select %64, %62, %65 : vector<14x14xi1>, vector<14x14xf32>
    %cst_34 = arith.constant dense<0xFF800000> : vector<14xf32>
    %67 = vector.multi_reduction <maximumf>, %66, %cst_34 [1] : vector<14x14xf32> to vector<14xf32>
    %68 = vector.shape_cast %67 : vector<14xf32> to vector<14x1xf32>
    %69 = vector.broadcast %68 : vector<14x1xf32> to vector<14x14xf32>
    %70 = arith.subf %66, %69 : vector<14x14xf32>
    %71 = math.exp %70 : vector<14x14xf32>
    %cst_35 = arith.constant dense<0.000000e+00> : vector<14xf32>
    %72 = vector.multi_reduction <add>, %71, %cst_35 [1] : vector<14x14xf32> to vector<14xf32>
    %73 = vector.shape_cast %72 : vector<14xf32> to vector<14x1xf32>
    %74 = tpu.reciprocal %73 {approx = true} : vector<14x1xf32> -> vector<14x1xf32>
    %75 = vector.broadcast %74 : vector<14x1xf32> to vector<14x14xf32>
    %76 = arith.mulf %71, %75 : vector<14x14xf32>
    %c1_36 = arith.constant 1 : index
    %c0_37 = arith.constant 0 : index
    %c0_38 = arith.constant 0 : index
    %77 = vector.load %arg6[%c1_36, %c0_37, %c0_38] : memref<2x14x14xf32, #tpu.memory_space<vmem>>, vector<1x14x14xf32>
    %78 = vector.shape_cast %77 : vector<1x14x14xf32> to vector<14x14xf32>
    %79 = vector.shape_cast %76 : vector<14x14xf32> to vector<1x14x14xf32>
    tpu.vector_store %arg6[%c1_36, %c0_37, %c0_38], %79 {strides = array<i32>} : memref<2x14x14xf32, #tpu.memory_space<vmem>>, vector<1x14x14xf32>,
    return
  }
  func.func @transform_0(%arg0: i32) -> (i32, i32, i32) {
    %c0_i32 = arith.constant 0 : i32
    %c0_i32_0 = arith.constant 0 : i32
    %c0_i32_1 = arith.constant 0 : i32
    return %arg0, %c0_i32, %c0_i32_0 : i32, i32, i32
  }
  func.func @transform_1(%arg0: i32) -> (i32, i32, i32) {
    %c0_i32 = arith.constant 0 : i32
    %c0_i32_0 = arith.constant 0 : i32
    %c0_i32_1 = arith.constant 0 : i32
    return %arg0, %c0_i32, %c0_i32_0 : i32, i32, i32
  }
  func.func @transform_2(%arg0: i32) -> (i32, i32) {
    %c0_i32 = arith.constant 0 : i32
    %c0_i32_0 = arith.constant 0 : i32
    %c0_i32_1 = arith.constant 0 : i32
    return %c0_i32, %c0_i32_0 : i32, i32
  }
  func.func @transform_3(%arg0: i32) -> (i32, i32) {
    %c0_i32 = arith.constant 0 : i32
    %c0_i32_0 = arith.constant 0 : i32
    %c0_i32_1 = arith.constant 0 : i32
    return %c0_i32, %c0_i32_0 : i32, i32
  }
  func.func @transform_4(%arg0: i32) -> (i32, i32) {
    %c0_i32 = arith.constant 0 : i32
    %c0_i32_0 = arith.constant 0 : i32
    %c0_i32_1 = arith.constant 0 : i32
    return %c0_i32, %c0_i32_0 : i32, i32
  }
  func.func @transform_5(%arg0: i32) -> (i32, i32, i32) {
    %c0_i32 = arith.constant 0 : i32
    %c0_i32_0 = arith.constant 0 : i32
    %c0_i32_1 = arith.constant 0 : i32
    return %arg0, %c0_i32, %c0_i32_0 : i32, i32, i32
  }
}

</mosaic_0001>

<llo_original>
// kernel: ne.15
$region0: #{ne.15}
  %s0 = inlined_call_operand.vmem [shape: s32[2,4,14], index: 0, kind: input, shape index: {}]
  %s1 = inlined_call_operand.vmem [shape: s32[2,56], index: 1, kind: output, shape index: {}]
  $region1: #{ne.15} parent=0
    #allocation0 [shape = 'u8[4096]{0}', space=vmem, size = 0x1000, scoped, tag = 'scoped mem for output reshape']
    #allocation1 [shape = 'u8[8192]{0}', space=vmem, size = 0x2000, scoped, tag = 'scoped mem for input reshape']
    %s3 = sshll.u32 1, 4
    %s4 = ssub.s32 %s3, 1
    %s5 = scalar_lea.vmem %s0, 4
    %v6 = vld [vmem:[%s5] sm:%s4]
    %s7 = scalar_lea.vmem [#allocation1], 8
    %8 = vst [vmem:[%s7] sm:%s4] %v6
    %v9 = vld [vmem:[%s0] sm:%s4]
    %10 = vst [vmem:[#allocation1] sm:%s4] %v9
    %s11 = smov 3
    %v12 = vld [vmem:[#allocation1] ss:$8 sm:%s11]
    %vm13 = vcmask 113664
    %14 = vst.msk [vmem:[#allocation0] sm:$0x3] %vm13, %v12
    %s15 = scalar_lea.vmem [#allocation1], 3
    %s16 = smov 3
    %v17 = vld [vmem:[%s15] ss:$8 sm:%s16]
    %18 = vrot.lane.b32.xlu0 %v17, 42
    %v19 = vpop.permute.xlu0 %18
    %vm20 = vcmask 458064
    %21 = vst.msk [vmem:[#allocation0] sm:$0x3] %vm20, %v19
    %s22 = scalar_lea.vmem [#allocation1], 2
    %s23 = smov 3
    %v24 = vld [vmem:[%s22] ss:$8 sm:%s23]
    %25 = vrot.lane.b32.xlu0 %v24, 28
    %v26 = vpop.permute.xlu0 %25
    %vm27 = vcmask 343264
    %28 = vst.msk [vmem:[#allocation0] sm:$0x3] %vm27, %v26
    %s29 = scalar_lea.vmem [#allocation1], 1
    %s30 = smov 3
    %v31 = vld [vmem:[%s29] ss:$8 sm:%s30]
    %32 = vrot.lane.b32.xlu0 %v31, 14
    %v33 = vpop.permute.xlu0 %32
    %vm34 = vcmask 228464
    %35 = vst.msk [vmem:[#allocation0] sm:$0x3] %vm34, %v33
    %s37 = sshll.u32 1, 2
    %s38 = ssub.s32 %s37, 1
    %v40 = vld [vmem:[#allocation0] sm:%s38]
    %s41 = sshll.u32 1, 2
    %s42 = ssub.s32 %s41, 1
    %43 = vst [vmem:[%s1] sm:%s42] %v40

// kernel: sub.0
$region0: #{sub.0}
  #allocation0 [shape = 's32[1]{0}', space=sflag, size = 0x4, scoped, tag = 'scoped memory for sub.0']
  %s0 = inlined_call_operand.vmem [shape: f32[2,14,14], index: 0, kind: input, shape index: {}]
  %s1 = inlined_call_operand.vmem [shape: f32[2,14,14], index: 1, kind: input, shape index: {}]
  %s2 = inlined_call_operand.vmem [shape: f32[2,14,14], index: 2, kind: output, shape index: {}]
  %v3 = vld [vmem:[%s0] sm:$0xff]
  %v4 = vld [vmem:[%s1] sm:$0xff]
  %5 = xla_tuple %v3, %v4
  %6 = xla_tuple %5
  %v7 = vsub.f32 %v3, %v4
  %8 = xla_tuple %v7
  %9 = vst [vmem:[%s2] sm:$0xff] %v7
  %s10 = scalar_lea.vmem %s0, 16
  %v11 = vld [vmem:[%s10] sm:$0xff]
  %s12 = scalar_lea.vmem %s1, 16
  %v13 = vld [vmem:[%s12] sm:$0xff]
  %14 = xla_tuple %v11, %v13
  %15 = xla_tuple %14
  %v16 = vsub.f32 %v11, %v13
  %17 = xla_tuple %v16
  %s18 = scalar_lea.vmem %s2, 16
  %19 = vst [vmem:[%s18] sm:$0xff] %v16
  %s20 = scalar_lea.vmem %s0, 8
  %v21 = vld [vmem:[%s20] sm:$0xff]
  %s22 = scalar_lea.vmem %s1, 8
  %v23 = vld [vmem:[%s22] sm:$0xff]
  %24 = xla_tuple %v21, %v23
  %25 = xla_tuple %24
  %v26 = vsub.f32 %v21, %v23
  %27 = xla_tuple %v26
  %s28 = scalar_lea.vmem %s2, 8
  %29 = vst [vmem:[%s28] sm:$0xff] %v26
  %s30 = scalar_lea.vmem %s0, 24
  %v31 = vld [vmem:[%s30] sm:$0xff]
  %s32 = scalar_lea.vmem %s1, 24
  %v33 = vld [vmem:[%s32] sm:$0xff]
  %34 = xla_tuple %v31, %v33
  %35 = xla_tuple %34
  %v36 = vsub.f32 %v31, %v33
  %37 = xla_tuple %v36
  %s38 = scalar_lea.vmem %s2, 24
  %39 = vst [vmem:[%s38] sm:$0xff] %v36

// kernel: pi_pooling_softmax_forward.3
$region0: #{pi_pooling_softmax_forward.3}
  #allocation0 [shape = 'u32[]', space=smem, size = 0x4, offset = 0x4, fixed_abs, tag = 'smem constant byte address 0x4 - core index']
  #allocation1 [shape = 'u32[144,128]{1,0:T(1,128)}', space=vmem, size = 0x12000, scoped, tag = 'internal scratch']
  %s0 = inlined_call_operand.vmem [shape: f32[2,16,56], index: 0, kind: input, shape index: {}]
  %s1 = inlined_call_operand.vmem [shape: bf16[2,56,56], index: 1, kind: input, shape index: {}]
  %s2 = inlined_call_operand.vmem [shape: f32[14,56], index: 2, kind: input, shape index: {}]
  %s3 = inlined_call_operand.vmem [shape: f32[2,16], index: 3, kind: input, shape index: {}]
  %s4 = inlined_call_operand.vmem [shape: f32[1,2], index: 4, kind: input, shape index: {}]
  %s5 = inlined_call_operand.vmem [shape: f32[2,14,14], index: 5, kind: output, shape index: {}]
  %s6 = sld [smem:[#allocation0]]
  $region30: #{pi_pooling_softmax_forward.3} parent=0
    _
  %s8 = ssub.s32 1, %s6
  %s9 = scalar_select 0, %s8, %s6
  // Predicated region
  $region2: #{pi_pooling_softmax_forward.3} parent=0 // pred_check
    _
  $region3: #{pi_pooling_softmax_forward.3} parent=0 // pred_check_branch
    %11 = sbr.rel (0) target = $region5
  $region4: #{pi_pooling_softmax_forward.3} parent=0 // pred_region
    _
  $region5: #{pi_pooling_softmax_forward.3} parent=0 // pred_fallthru
    _
  // Predicated region
  $region6: #{pi_pooling_softmax_forward.3} parent=0 // pred_check
    _
  $region7: #{pi_pooling_softmax_forward.3} parent=0 // pred_check_branch
    %13 = sbr.rel (0) target = $region9
  $region8: #{pi_pooling_softmax_forward.3} parent=0 // pred_region
    _
  $region9: #{pi_pooling_softmax_forward.3} parent=0 // pred_fallthru
    _
  // Predicated region
  $region10: #{pi_pooling_softmax_forward.3} parent=0 // pred_check
    _
  $region11: #{pi_pooling_softmax_forward.3} parent=0 // pred_check_branch
    %15 = sbr.rel (0) target = $region13
  $region12: #{pi_pooling_softmax_forward.3} parent=0 // pred_region
    _
  $region13: #{pi_pooling_softmax_forward.3} parent=0 // pred_fallthru
    _
  // Predicated region
  $region14: #{pi_pooling_softmax_forward.3} parent=0 // pred_check
    _
  $region15: #{pi_pooling_softmax_forward.3} parent=0 // pred_check_branch
    %17 = sbr.rel (0) target = $region17
  $region16: #{pi_pooling_softmax_forward.3} parent=0 // pred_region
    _
  $region17: #{pi_pooling_softmax_forward.3} parent=0 // pred_fallthru
    _
  // Predicated region
  $region18: #{pi_pooling_softmax_forward.3} parent=0 // pred_check
    _
  $region19: #{pi_pooling_softmax_forward.3} parent=0 // pred_check_branch
    %19 = sbr.rel (0) target = $region21
  $region20: #{pi_pooling_softmax_forward.3} parent=0 // pred_region
    _
  $region21: #{pi_pooling_softmax_forward.3} parent=0 // pred_fallthru
    _
  %v21 = vld [vmem:[%s2] sm:$0xff]
  %v22 = vld [vmem:[%s2 + $0x8] sm:$0x3f]
  %v23 = vpack.c.bf16 %v22, %v21
  %v24 = vld [vmem:[%s3] sm:$0x3]
  %v25 = vld [vmem:[%s4] sm:$0x1]
  %v26 = vld [vmem:[%s1] sm:$0xf]
  %v27 = vld [vmem:[%s1 + $0x4] sm:$0xf]
  %v28 = vld [vmem:[%s1 + $0x8] sm:$0xf]
  %v29 = vld [vmem:[%s1 + $0xc] sm:$0xf]
  %v30 = vld [vmem:[%s1 + $0x10] sm:$0xf]
  %v31 = vld [vmem:[%s1 + $0x14] sm:$0xf]
  %v32 = vld [vmem:[%s1 + $0x18] sm:$0xf]
  %v33 = vld [vmem:[%s0] sm:$0xff]
  %v34 = vld [vmem:[%s0 + $0x8] sm:$0xff]
  %v42 = vunpack.c.l.b16 %v26
  %v43 = vunpack.c.l.b16 %v27
  %v44 = vunpack.c.l.b16 %v28
  %v45 = vunpack.c.l.b16 %v29
  %v46 = vunpack.c.l.b16 %v30
  %v47 = vunpack.c.l.b16 %v31
  %v48 = vunpack.c.l.b16 %v32
  %v49 = vpack.c.b16 %v43, %v42
  %v50 = vpack.c.b16 %v45, %v44
  %v51 = vpack.c.b16 %v47, %v46
  %v52 = vpack.c.b16 %v48, %v48
  %vm56 = vcmask 457728
  %v58 = vsel %vm56, %v23, 0
  %vm60 = vcmask 1043456
  %v62 = vsel %vm60, %v52, 0
  %64 = vmatprep.subr.bf16.mxu0 0
  %65 = vmatpush1.bf16.msra.mxu0 0
  %66 = vmatprep.subr.bf16.mxu0 0
  %67 = vmatpush1.bf16.msra.mxu0 0
  %68 = vmatprep.subr.bf16.mxu0 0
  %69 = vmatpush1.bf16.msra.mxu0 0
  %70 = vmatprep.subr.bf16.mxu0 0
  %71 = vmatpush1.bf16.msra.mxu0 0
  %72 = vmatprep.subr.bf16.mxu0 0
  %73 = vmatpush1.bf16.msra.mxu0 %v62
  %74 = vmatprep.subr.bf16.mxu0 0
  %75 = vmatpush1.bf16.msra.mxu0 %v51
  %76 = vmatprep.subr.bf16.mxu0 0
  %77 = vmatpush1.bf16.msra.mxu0 %v50
  %78 = vmatprep.subr.bf16.mxu0 0
  %79 = vmatpush1.bf16.msra.mxu0 %v49
  %80 = vmatprep.subr.bf16.mxu0 0
  %81 = vmatpush2.bf16.msra.mxu0 0
  %82 = vmatprep.subr.bf16.mxu0 0
  %83 = vmatpush2.bf16.msra.mxu0 0
  %84 = vmatprep.subr.bf16.mxu0 0
  %85 = vmatpush2.bf16.msra.mxu0 0
  %86 = vmatprep.subr.bf16.mxu0 0
  %87 = vmatpush2.bf16.msra.mxu0 0
  %88 = vmatprep.subr.bf16.mxu0 0
  %89 = vmatpush2.bf16.msra.mxu0 0
  %90 = vmatprep.subr.bf16.mxu0 0
  %91 = vmatpush2.bf16.msra.mxu0 0
  %92 = vmatprep.subr.bf16.mxu0 0
  %93 = vmatpush2.bf16.msra.mxu0 0
  %94 = vmatprep.subr.bf16.mxu0 0
  %95 = vmatpush2.bf16.msra.mxu0 0
  %96 = vmatprep.mubr.bf16.mxu0 0
  %97 = vmatmul.mubr.bf16.gmra.mxu0 %v58
  %v98 = vpop.f32.mrf.mxu0
  %v99 = vadd.f32 0.0, %v98
  %v100 = vpop.f32.mrf.mxu0
  %v101 = vpop.f32.mrf.mxu0
  %v102 = vadd.f32 0.0, %v101
  %v103 = vpop.f32.mrf.mxu0
  %104 = vdwg.mxu0
  %vm105 = vcmask 130048
  %v107 = vsel %vm105, %v24, 0
  %109 = vmatprep.subr.mxu0 0.0
  %110 = vmatpush1.msra.mxu0 0.0
  %111 = vmatprep.subr.mxu0 0.0
  %112 = vmatpush1.msra.mxu0 0.0
  %113 = vmatprep.subr.mxu0 0.0
  %114 = vmatpush1.msra.mxu0 0.0
  %115 = vmatprep.subr.mxu0 0.0
  %116 = vmatpush1.msra.mxu0 0.0
  %117 = vmatprep.subr.mxu0 0.0
  %118 = vmatpush1.msra.mxu0 0.0
  %119 = vmatprep.subr.mxu0 0.0
  %120 = vmatpush1.msra.mxu0 0.0
  %121 = vmatprep.subr.mxu0 0.0
  %122 = vmatpush1.msra.mxu0 0.0
  %123 = vmatprep.subr.mxu0 0.0
  %124 = vmatpush1.msra.mxu0 0.0
  %125 = vmatprep.subr.mxu0 0.0
  %126 = vmatpush1.msra.mxu0 0.0
  %127 = vmatprep.subr.mxu0 0.0
  %128 = vmatpush1.msra.mxu0 0.0
  %129 = vmatprep.subr.mxu0 0.0
  %130 = vmatpush1.msra.mxu0 0.0
  %131 = vmatprep.subr.mxu0 0.0
  %132 = vmatpush1.msra.mxu0 0.0
  %133 = vmatprep.subr.mxu0 0.0
  %134 = vmatpush1.msra.mxu0 0.0
  %135 = vmatprep.subr.mxu0 0.0
  %136 = vmatpush1.msra.mxu0 0.0
  %137 = vmatprep.subr.mxu0 0.0
  %v138 = vand.u32 %v34, 4294901760
  %139 = vmatpush1.msra.mxu0 %v138
  %140 = vmatprep.subr.mxu0 0.0
  %v141 = vand.u32 %v33, 4294901760
  %142 = vmatpush1.msra.mxu0 %v141
  %143 = vmatprep.subr.mxu0 0.0
  %144 = vmatpush2.msra.mxu0 0.0
  %145 = vmatprep.subr.mxu0 0.0
  %146 = vmatpush2.msra.mxu0 0.0
  %147 = vmatprep.subr.mxu0 0.0
  %148 = vmatpush2.msra.mxu0 0.0
  %149 = vmatprep.subr.mxu0 0.0
  %150 = vmatpush2.msra.mxu0 0.0
  %151 = vmatprep.subr.mxu0 0.0
  %152 = vmatpush2.msra.mxu0 0.0
  %153 = vmatprep.subr.mxu0 0.0
  %154 = vmatpush2.msra.mxu0 0.0
  %155 = vmatprep.subr.mxu0 0.0
  %156 = vmatpush2.msra.mxu0 0.0
  %157 = vmatprep.subr.mxu0 0.0
  %158 = vmatpush2.msra.mxu0 0.0
  %159 = vmatprep.subr.mxu0 0.0
  %160 = vmatpush2.msra.mxu0 0.0
  %161 = vmatprep.subr.mxu0 0.0
  %162 = vmatpush2.msra.mxu0 0.0
  %163 = vmatprep.subr.mxu0 0.0
  %164 = vmatpush2.msra.mxu0 0.0
  %165 = vmatprep.subr.mxu0 0.0
  %166 = vmatpush2.msra.mxu0 0.0
  %167 = vmatprep.subr.mxu0 0.0
  %168 = vmatpush2.msra.mxu0 0.0
  %169 = vmatprep.subr.mxu0 0.0
  %170 = vmatpush2.msra.mxu0 0.0
  %171 = vmatprep.subr.mxu0 0.0
  %172 = vmatpush2.msra.mxu0 0.0
  %173 = vmatprep.subr.mxu0 0.0
  %174 = vmatpush2.msra.mxu0 0.0
  %175 = vmatprep.mubr.f32.mxu0 0.0
  %v176 = vand.u32 %v107, 4294901760
  %v177 = vsub.f32 %v107, %v176
  %v178 = vand.u32 %v177, 4294901760
  %v179 = vsub.f32 %v177, %v178
  %v180 = vand.u32 %v179, 4294901760
  %181 = vmatmul.mubr.f32.gmra.mxu0 %v180
  %v182 = vpop.f32.mrf.mxu0
  %v183 = vadd.f32 0.0, %v182
  %v184 = vpop.f32.mrf.mxu0
  %185 = vdwg.mxu0
  %186 = vmatprep.subr.mxu0 0.0
  %187 = vmatpush1.msra.mxu0 0.0
  %188 = vmatprep.subr.mxu0 0.0
  %189 = vmatpush1.msra.mxu0 0.0
  %190 = vmatprep.subr.mxu0 0.0
  %191 = vmatpush1.msra.mxu0 0.0
  %192 = vmatprep.subr.mxu0 0.0
  %193 = vmatpush1.msra.mxu0 0.0
  %194 = vmatprep.subr.mxu0 0.0
  %195 = vmatpush1.msra.mxu0 0.0
  %196 = vmatprep.subr.mxu0 0.0
  %197 = vmatpush1.msra.mxu0 0.0
  %198 = vmatprep.subr.mxu0 0.0
  %199 = vmatpush1.msra.mxu0 0.0
  %200 = vmatprep.subr.mxu0 0.0
  %201 = vmatpush1.msra.mxu0 0.0
  %202 = vmatprep.subr.mxu0 0.0
  %203 = vmatpush1.msra.mxu0 0.0
  %204 = vmatprep.subr.mxu0 0.0
  %205 = vmatpush1.msra.mxu0 0.0
  %206 = vmatprep.subr.mxu0 0.0
  %207 = vmatpush1.msra.mxu0 0.0
  %208 = vmatprep.subr.mxu0 0.0
  %209 = vmatpush1.msra.mxu0 0.0
  %210 = vmatprep.subr.mxu0 0.0
  %211 = vmatpush1.msra.mxu0 0.0
  %212 = vmatprep.subr.mxu0 0.0
  %213 = vmatpush1.msra.mxu0 0.0
  %214 = vmatprep.subr.mxu0 0.0
  %v215 = vand.u32 %v34, 4294901760
  %v216 = vsub.f32 %v34, %v215
  %v217 = vand.u32 %v216, 4294901760
  %v218 = vsub.f32 %v216, %v217
  %v219 = vand.u32 %v218, 4294901760
  %220 = vmatpush1.msra.mxu0 %v219
  %221 = vmatprep.subr.mxu0 0.0
  %v222 = vand.u32 %v33, 4294901760
  %v223 = vsub.f32 %v33, %v222
  %v224 = vand.u32 %v223, 4294901760
  %v225 = vsub.f32 %v223, %v224
  %v226 = vand.u32 %v225, 4294901760
  %227 = vmatpush1.msra.mxu0 %v226
  %228 = vmatprep.subr.mxu0 0.0
  %229 = vmatpush2.msra.mxu0 0.0
  %230 = vmatprep.subr.mxu0 0.0
  %231 = vmatpush2.msra.mxu0 0.0
  %232 = vmatprep.subr.mxu0 0.0
  %233 = vmatpush2.msra.mxu0 0.0
  %234 = vmatprep.subr.mxu0 0.0
  %235 = vmatpush2.msra.mxu0 0.0
  %236 = vmatprep.subr.mxu0 0.0
  %237 = vmatpush2.msra.mxu0 0.0
  %238 = vmatprep.subr.mxu0 0.0
  %239 = vmatpush2.msra.mxu0 0.0
  %240 = vmatprep.subr.mxu0 0.0
  %241 = vmatpush2.msra.mxu0 0.0
  %242 = vmatprep.subr.mxu0 0.0
  %243 = vmatpush2.msra.mxu0 0.0
  %244 = vmatprep.subr.mxu0 0.0
  %245 = vmatpush2.msra.mxu0 0.0
  %246 = vmatprep.subr.mxu0 0.0
  %247 = vmatpush2.msra.mxu0 0.0
  %248 = vmatprep.subr.mxu0 0.0
  %249 = vmatpush2.msra.mxu0 0.0
  %250 = vmatprep.subr.mxu0 0.0
  %251 = vmatpush2.msra.mxu0 0.0
  %252 = vmatprep.subr.mxu0 0.0
  %253 = vmatpush2.msra.mxu0 0.0
  %254 = vmatprep.subr.mxu0 0.0
  %255 = vmatpush2.msra.mxu0 0.0
  %256 = vmatprep.subr.mxu0 0.0
  %257 = vmatpush2.msra.mxu0 0.0
  %258 = vmatprep.subr.mxu0 0.0
  %259 = vmatpush2.msra.mxu0 0.0
  %260 = vmatprep.mubr.f32.mxu0 0.0
  %v261 = vand.u32 %v107, 4294901760
  %262 = vmatmul.mubr.f32.gmra.mxu0 %v261
  %v263 = vpop.f32.mrf.mxu0
  %v264 = vadd.f32 %v183, %v263
  %v265 = vpop.f32.mrf.mxu0
  %266 = vdwg.mxu0
  %267 = vmatprep.subr.mxu0 0.0
  %268 = vmatpush1.msra.mxu0 0.0
  %269 = vmatprep.subr.mxu0 0.0
  %270 = vmatpush1.msra.mxu0 0.0
  %271 = vmatprep.subr.mxu0 0.0
  %272 = vmatpush1.msra.mxu0 0.0
  %273 = vmatprep.subr.mxu0 0.0
  %274 = vmatpush1.msra.mxu0 0.0
  %275 = vmatprep.subr.mxu0 0.0
  %276 = vmatpush1.msra.mxu0 0.0
  %277 = vmatprep.subr.mxu0 0.0
  %278 = vmatpush1.msra.mxu0 0.0
  %279 = vmatprep.subr.mxu0 0.0
  %280 = vmatpush1.msra.mxu0 0.0
  %281 = vmatprep.subr.mxu0 0.0
  %282 = vmatpush1.msra.mxu0 0.0
  %283 = vmatprep.subr.mxu0 0.0
  %284 = vmatpush1.msra.mxu0 0.0
  %285 = vmatprep.subr.mxu0 0.0
  %286 = vmatpush1.msra.mxu0 0.0
  %287 = vmatprep.subr.mxu0 0.0
  %288 = vmatpush1.msra.mxu0 0.0
  %289 = vmatprep.subr.mxu0 0.0
  %290 = vmatpush1.msra.mxu0 0.0
  %291 = vmatprep.subr.mxu0 0.0
  %292 = vmatpush1.msra.mxu0 0.0
  %293 = vmatprep.subr.mxu0 0.0
  %294 = vmatpush1.msra.mxu0 0.0
  %295 = vmatprep.subr.mxu0 0.0
  %v296 = vand.u32 %v34, 4294901760
  %v297 = vsub.f32 %v34, %v296
  %298 = vmatpush1.msra.mxu0 %v297
  %299 = vmatprep.subr.mxu0 0.0
  %v300 = vand.u32 %v33, 4294901760
  %v301 = vsub.f32 %v33, %v300
  %302 = vmatpush1.msra.mxu0 %v301
  %303 = vmatprep.subr.mxu0 0.0
  %304 = vmatpush2.msra.mxu0 0.0
  %305 = vmatprep.subr.mxu0 0.0
  %306 = vmatpush2.msra.mxu0 0.0
  %307 = vmatprep.subr.mxu0 0.0
  %308 = vmatpush2.msra.mxu0 0.0
  %309 = vmatprep.subr.mxu0 0.0
  %310 = vmatpush2.msra.mxu0 0.0
  %311 = vmatprep.subr.mxu0 0.0
  %312 = vmatpush2.msra.mxu0 0.0
  %313 = vmatprep.subr.mxu0 0.0
  %314 = vmatpush2.msra.mxu0 0.0
  %315 = vmatprep.subr.mxu0 0.0
  %316 = vmatpush2.msra.mxu0 0.0
  %317 = vmatprep.subr.mxu0 0.0
  %318 = vmatpush2.msra.mxu0 0.0
  %319 = vmatprep.subr.mxu0 0.0
  %320 = vmatpush2.msra.mxu0 0.0
  %321 = vmatprep.subr.mxu0 0.0
  %322 = vmatpush2.msra.mxu0 0.0
  %323 = vmatprep.subr.mxu0 0.0
  %324 = vmatpush2.msra.mxu0 0.0
  %325 = vmatprep.subr.mxu0 0.0
  %326 = vmatpush2.msra.mxu0 0.0
  %327 = vmatprep.subr.mxu0 0.0
  %328 = vmatpush2.msra.mxu0 0.0
  %329 = vmatprep.subr.mxu0 0.0
  %330 = vmatpush2.msra.mxu0 0.0
  %331 = vmatprep.subr.mxu0 0.0
  %332 = vmatpush2.msra.mxu0 0.0
  %333 = vmatprep.subr.mxu0 0.0
  %334 = vmatpush2.msra.mxu0 0.0
  %335 = vmatprep.mubr.f32.mxu0 0.0
  %v336 = vand.u32 %v107, 4294901760
  %v337 = vsub.f32 %v107, %v336
  %338 = vmatmul.mubr.f32.gmra.mxu0 %v337
  %v339 = vpop.f32.mrf.mxu0
  %v340 = vadd.f32 %v264, %v339
  %v341 = vpop.f32.mrf.mxu0
  %342 = vdwg.mxu0
  %343 = vmatprep.subr.mxu0 0.0
  %344 = vmatpush1.msra.mxu0 0.0
  %345 = vmatprep.subr.mxu0 0.0
  %346 = vmatpush1.msra.mxu0 0.0
  %347 = vmatprep.subr.mxu0 0.0
  %348 = vmatpush1.msra.mxu0 0.0
  %349 = vmatprep.subr.mxu0 0.0
  %350 = vmatpush1.msra.mxu0 0.0
  %351 = vmatprep.subr.mxu0 0.0
  %352 = vmatpush1.msra.mxu0 0.0
  %353 = vmatprep.subr.mxu0 0.0
  %354 = vmatpush1.msra.mxu0 0.0
  %355 = vmatprep.subr.mxu0 0.0
  %356 = vmatpush1.msra.mxu0 0.0
  %357 = vmatprep.subr.mxu0 0.0
  %358 = vmatpush1.msra.mxu0 0.0
  %359 = vmatprep.subr.mxu0 0.0
  %360 = vmatpush1.msra.mxu0 0.0
  %361 = vmatprep.subr.mxu0 0.0
  %362 = vmatpush1.msra.mxu0 0.0
  %363 = vmatprep.subr.mxu0 0.0
  %364 = vmatpush1.msra.mxu0 0.0
  %365 = vmatprep.subr.mxu0 0.0
  %366 = vmatpush1.msra.mxu0 0.0
  %367 = vmatprep.subr.mxu0 0.0
  %368 = vmatpush1.msra.mxu0 0.0
  %369 = vmatprep.subr.mxu0 0.0
  %370 = vmatpush1.msra.mxu0 0.0
  %371 = vmatprep.subr.mxu0 0.0
  %v372 = vand.u32 %v34, 4294901760
  %373 = vmatpush1.msra.mxu0 %v372
  %374 = vmatprep.subr.mxu0 0.0
  %v375 = vand.u32 %v33, 4294901760
  %376 = vmatpush1.msra.mxu0 %v375
  %377 = vmatprep.subr.mxu0 0.0
  %378 = vmatpush2.msra.mxu0 0.0
  %379 = vmatprep.subr.mxu0 0.0
  %380 = vmatpush2.msra.mxu0 0.0
  %381 = vmatprep.subr.mxu0 0.0
  %382 = vmatpush2.msra.mxu0 0.0
  %383 = vmatprep.subr.mxu0 0.0
  %384 = vmatpush2.msra.mxu0 0.0
  %385 = vmatprep.subr.mxu0 0.0
  %386 = vmatpush2.msra.mxu0 0.0
  %387 = vmatprep.subr.mxu0 0.0
  %388 = vmatpush2.msra.mxu0 0.0
  %389 = vmatprep.subr.mxu0 0.0
  %390 = vmatpush2.msra.mxu0 0.0
  %391 = vmatprep.subr.mxu0 0.0
  %392 = vmatpush2.msra.mxu0 0.0
  %393 = vmatprep.subr.mxu0 0.0
  %394 = vmatpush2.msra.mxu0 0.0
  %395 = vmatprep.subr.mxu0 0.0
  %396 = vmatpush2.msra.mxu0 0.0
  %397 = vmatprep.subr.mxu0 0.0
  %398 = vmatpush2.msra.mxu0 0.0
  %399 = vmatprep.subr.mxu0 0.0
  %400 = vmatpush2.msra.mxu0 0.0
  %401 = vmatprep.subr.mxu0 0.0
  %402 = vmatpush2.msra.mxu0 0.0
  %403 = vmatprep.subr.mxu0 0.0
  %404 = vmatpush2.msra.mxu0 0.0
  %405 = vmatprep.subr.mxu0 0.0
  %406 = vmatpush2.msra.mxu0 0.0
  %407 = vmatprep.subr.mxu0 0.0
  %408 = vmatpush2.msra.mxu0 0.0
  %409 = vmatprep.mubr.f32.mxu0 0.0
  %v410 = vand.u32 %v107, 4294901760
  %v411 = vsub.f32 %v107, %v410
  %v412 = vand.u32 %v411, 4294901760
  %413 = vmatmul.mubr.f32.gmra.mxu0 %v412
  %v414 = vpop.f32.mrf.mxu0
  %v415 = vadd.f32 %v340, %v414
  %v416 = vpop.f32.mrf.mxu0
  %417 = vdwg.mxu0
  %418 = vmatprep.subr.mxu0 0.0
  %419 = vmatpush1.msra.mxu0 0.0
  %420 = vmatprep.subr.mxu0 0.0
  %421 = vmatpush1.msra.mxu0 0.0
  %422 = vmatprep.subr.mxu0 0.0
  %423 = vmatpush1.msra.mxu0 0.0
  %424 = vmatprep.subr.mxu0 0.0
  %425 = vmatpush1.msra.mxu0 0.0
  %426 = vmatprep.subr.mxu0 0.0
  %427 = vmatpush1.msra.mxu0 0.0
  %428 = vmatprep.subr.mxu0 0.0
  %429 = vmatpush1.msra.mxu0 0.0
  %430 = vmatprep.subr.mxu0 0.0
  %431 = vmatpush1.msra.mxu0 0.0
  %432 = vmatprep.subr.mxu0 0.0
  %433 = vmatpush1.msra.mxu0 0.0
  %434 = vmatprep.subr.mxu0 0.0
  %435 = vmatpush1.msra.mxu0 0.0
  %436 = vmatprep.subr.mxu0 0.0
  %437 = vmatpush1.msra.mxu0 0.0
  %438 = vmatprep.subr.mxu0 0.0
  %439 = vmatpush1.msra.mxu0 0.0
  %440 = vmatprep.subr.mxu0 0.0
  %441 = vmatpush1.msra.mxu0 0.0
  %442 = vmatprep.subr.mxu0 0.0
  %443 = vmatpush1.msra.mxu0 0.0
  %444 = vmatprep.subr.mxu0 0.0
  %445 = vmatpush1.msra.mxu0 0.0
  %446 = vmatprep.subr.mxu0 0.0
  %v447 = vand.u32 %v34, 4294901760
  %v448 = vsub.f32 %v34, %v447
  %v449 = vand.u32 %v448, 4294901760
  %450 = vmatpush1.msra.mxu0 %v449
  %451 = vmatprep.subr.mxu0 0.0
  %v452 = vand.u32 %v33, 4294901760
  %v453 = vsub.f32 %v33, %v452
  %v454 = vand.u32 %v453, 4294901760
  %455 = vmatpush1.msra.mxu0 %v454
  %456 = vmatprep.subr.mxu0 0.0
  %457 = vmatpush2.msra.mxu0 0.0
  %458 = vmatprep.subr.mxu0 0.0
  %459 = vmatpush2.msra.mxu0 0.0
  %460 = vmatprep.subr.mxu0 0.0
  %461 = vmatpush2.msra.mxu0 0.0
  %462 = vmatprep.subr.mxu0 0.0
  %463 = vmatpush2.msra.mxu0 0.0
  %464 = vmatprep.subr.mxu0 0.0
  %465 = vmatpush2.msra.mxu0 0.0
  %466 = vmatprep.subr.mxu0 0.0
  %467 = vmatpush2.msra.mxu0 0.0
  %468 = vmatprep.subr.mxu0 0.0
  %469 = vmatpush2.msra.mxu0 0.0
  %470 = vmatprep.subr.mxu0 0.0
  %471 = vmatpush2.msra.mxu0 0.0
  %472 = vmatprep.subr.mxu0 0.0
  %473 = vmatpush2.msra.mxu0 0.0
  %474 = vmatprep.subr.mxu0 0.0
  %475 = vmatpush2.msra.mxu0 0.0
  %476 = vmatprep.subr.mxu0 0.0
  %477 = vmatpush2.msra.mxu0 0.0
  %478 = vmatprep.subr.mxu0 0.0
  %479 = vmatpush2.msra.mxu0 0.0
  %480 = vmatprep.subr.mxu0 0.0
  %481 = vmatpush2.msra.mxu0 0.0
  %482 = vmatprep.subr.mxu0 0.0
  %483 = vmatpush2.msra.mxu0 0.0
  %484 = vmatprep.subr.mxu0 0.0
  %485 = vmatpush2.msra.mxu0 0.0
  %486 = vmatprep.subr.mxu0 0.0
  %487 = vmatpush2.msra.mxu0 0.0
  %488 = vmatprep.mubr.f32.mxu0 0.0
  %v489 = vand.u32 %v107, 4294901760
  %490 = vmatmul.mubr.f32.gmra.mxu0 %v489
  %v491 = vpop.f32.mrf.mxu0
  %v492 = vadd.f32 %v415, %v491
  %v493 = vpop.f32.mrf.mxu0
  %494 = vdwg.mxu0
  %495 = vmatprep.subr.mxu0 0.0
  %496 = vmatpush1.msra.mxu0 0.0
  %497 = vmatprep.subr.mxu0 0.0
  %498 = vmatpush1.msra.mxu0 0.0
  %499 = vmatprep.subr.mxu0 0.0
  %500 = vmatpush1.msra.mxu0 0.0
  %501 = vmatprep.subr.mxu0 0.0
  %502 = vmatpush1.msra.mxu0 0.0
  %503 = vmatprep.subr.mxu0 0.0
  %504 = vmatpush1.msra.mxu0 0.0
  %505 = vmatprep.subr.mxu0 0.0
  %506 = vmatpush1.msra.mxu0 0.0
  %507 = vmatprep.subr.mxu0 0.0
  %508 = vmatpush1.msra.mxu0 0.0
  %509 = vmatprep.subr.mxu0 0.0
  %510 = vmatpush1.msra.mxu0 0.0
  %511 = vmatprep.subr.mxu0 0.0
  %512 = vmatpush1.msra.mxu0 0.0
  %513 = vmatprep.subr.mxu0 0.0
  %514 = vmatpush1.msra.mxu0 0.0
  %515 = vmatprep.subr.mxu0 0.0
  %516 = vmatpush1.msra.mxu0 0.0
  %517 = vmatprep.subr.mxu0 0.0
  %518 = vmatpush1.msra.mxu0 0.0
  %519 = vmatprep.subr.mxu0 0.0
  %520 = vmatpush1.msra.mxu0 0.0
  %521 = vmatprep.subr.mxu0 0.0
  %522 = vmatpush1.msra.mxu0 0.0
  %523 = vmatprep.subr.mxu0 0.0
  %v524 = vand.u32 %v34, 4294901760
  %525 = vmatpush1.msra.mxu0 %v524
  %526 = vmatprep.subr.mxu0 0.0
  %v527 = vand.u32 %v33, 4294901760
  %528 = vmatpush1.msra.mxu0 %v527
  %529 = vmatprep.subr.mxu0 0.0
  %530 = vmatpush2.msra.mxu0 0.0
  %531 = vmatprep.subr.mxu0 0.0
  %532 = vmatpush2.msra.mxu0 0.0
  %533 = vmatprep.subr.mxu0 0.0
  %534 = vmatpush2.msra.mxu0 0.0
  %535 = vmatprep.subr.mxu0 0.0
  %536 = vmatpush2.msra.mxu0 0.0
  %537 = vmatprep.subr.mxu0 0.0
  %538 = vmatpush2.msra.mxu0 0.0
  %539 = vmatprep.subr.mxu0 0.0
  %540 = vmatpush2.msra.mxu0 0.0
  %541 = vmatprep.subr.mxu0 0.0
  %542 = vmatpush2.msra.mxu0 0.0
  %543 = vmatprep.subr.mxu0 0.0
  %544 = vmatpush2.msra.mxu0 0.0
  %545 = vmatprep.subr.mxu0 0.0
  %546 = vmatpush2.msra.mxu0 0.0
  %547 = vmatprep.subr.mxu0 0.0
  %548 = vmatpush2.msra.mxu0 0.0
  %549 = vmatprep.subr.mxu0 0.0
  %550 = vmatpush2.msra.mxu0 0.0
  %551 = vmatprep.subr.mxu0 0.0
  %552 = vmatpush2.msra.mxu0 0.0
  %553 = vmatprep.subr.mxu0 0.0
  %554 = vmatpush2.msra.mxu0 0.0
  %555 = vmatprep.subr.mxu0 0.0
  %556 = vmatpush2.msra.mxu0 0.0
  %557 = vmatprep.subr.mxu0 0.0
  %558 = vmatpush2.msra.mxu0 0.0
  %559 = vmatprep.subr.mxu0 0.0
  %560 = vmatpush2.msra.mxu0 0.0
  %561 = vmatprep.mubr.f32.mxu0 0.0
  %v562 = vand.u32 %v107, 4294901760
  %563 = vmatmul.mubr.f32.gmra.mxu0 %v562
  %v564 = vpop.f32.mrf.mxu0
  %v565 = vadd.f32 %v492, %v564
  %v566 = vpop.f32.mrf.mxu0
  %567 = vdwg.mxu0
  %569 = vset.pattern.permute.xlu0 0
  %570 = vperm.xlu0 %569, %v25
  %v571 = vpop.permute.xlu0 %570
  %v573 = vlaneseq
  %v574 = vshrl.u32 %v573, 7
  %v575 = vsub.s32 0, %v574
  %v576 = vrot.slane %v571, %v575
  %v577 = vadd.f32 %v565, %v576
  %v578 = vlaneseq
  %v579 = vshrl.u32 %v578, 7
  %v580 = vsub.s32 0, %v579
  %v581 = vrot.slane %v577, %v580
  %v582 = vmul.f32 %v21, %v581
  %v583 = vmul.f32 %v22, %v581
  %v584 = vlaneseq
  %v585 = vshrl.u32 %v584, 7
  %v586 = vsub.s32 1, %v585
  %v587 = vrot.slane %v565, %v586
  %v588 = vmul.f32 %v21, %v587
  %v589 = vmul.f32 %v22, %v587
  %v591 = vsel %vm56, %v99, 0
  %v594 = vsel %vm56, %v102, 0
  %v597 = vsel %vm56, %v588, 0
  %v600 = vsel %vm56, %v589, 0
  %602 = vmatprep.subr.mxu0 0.0
  %603 = vmatpush1.xpose.msra.mxu0 0.0
  %604 = vmatprep.subr.mxu0 0.0
  %605 = vmatpush1.xpose.msra.mxu0 0.0
  %606 = vmatprep.subr.mxu0 0.0
  %607 = vmatpush1.xpose.msra.mxu0 0.0
  %608 = vmatprep.subr.mxu0 0.0
  %609 = vmatpush1.xpose.msra.mxu0 0.0
  %610 = vmatprep.subr.mxu0 0.0
  %611 = vmatpush1.xpose.msra.mxu0 0.0
  %612 = vmatprep.subr.mxu0 0.0
  %613 = vmatpush1.xpose.msra.mxu0 0.0
  %614 = vmatprep.subr.mxu0 0.0
  %615 = vmatpush1.xpose.msra.mxu0 0.0
  %616 = vmatprep.subr.mxu0 0.0
  %617 = vmatpush1.xpose.msra.mxu0 0.0
  %618 = vmatprep.subr.mxu0 0.0
  %619 = vmatpush1.xpose.msra.mxu0 0.0
  %620 = vmatprep.subr.mxu0 0.0
  %621 = vmatpush1.xpose.msra.mxu0 0.0
  %622 = vmatprep.subr.mxu0 0.0
  %623 = vmatpush1.xpose.msra.mxu0 0.0
  %624 = vmatprep.subr.mxu0 0.0
  %625 = vmatpush1.xpose.msra.mxu0 0.0
  %626 = vmatprep.subr.mxu0 0.0
  %627 = vmatpush1.xpose.msra.mxu0 0.0
  %628 = vmatprep.subr.mxu0 0.0
  %629 = vmatpush1.xpose.msra.mxu0 0.0
  %630 = vmatprep.subr.mxu0 0.0
  %v631 = vand.u32 %v600, 4294901760
  %632 = vmatpush1.xpose.msra.mxu0 %v631
  %633 = vmatprep.subr.mxu0 0.0
  %v634 = vand.u32 %v597, 4294901760
  %635 = vmatpush1.xpose.msra.mxu0 %v634
  %636 = vmatprep.subr.mxu0 0.0
  %637 = vmatpush2.xpose.msra.mxu0 0.0
  %638 = vmatprep.subr.mxu0 0.0
  %639 = vmatpush2.xpose.msra.mxu0 0.0
  %640 = vmatprep.subr.mxu0 0.0
  %641 = vmatpush2.xpose.msra.mxu0 0.0
  %642 = vmatprep.subr.mxu0 0.0
  %643 = vmatpush2.xpose.msra.mxu0 0.0
  %644 = vmatprep.subr.mxu0 0.0
  %645 = vmatpush2.xpose.msra.mxu0 0.0
  %646 = vmatprep.subr.mxu0 0.0
  %647 = vmatpush2.xpose.msra.mxu0 0.0
  %648 = vmatprep.subr.mxu0 0.0
  %649 = vmatpush2.xpose.msra.mxu0 0.0
  %650 = vmatprep.subr.mxu0 0.0
  %651 = vmatpush2.xpose.msra.mxu0 0.0
  %652 = vmatprep.subr.mxu0 0.0
  %653 = vmatpush2.xpose.msra.mxu0 0.0
  %654 = vmatprep.subr.mxu0 0.0
  %655 = vmatpush2.xpose.msra.mxu0 0.0
  %656 = vmatprep.subr.mxu0 0.0
  %657 = vmatpush2.xpose.msra.mxu0 0.0
  %658 = vmatprep.subr.mxu0 0.0
  %659 = vmatpush2.xpose.msra.mxu0 0.0
  %660 = vmatprep.subr.mxu0 0.0
  %661 = vmatpush2.xpose.msra.mxu0 0.0
  %662 = vmatprep.subr.mxu0 0.0
  %663 = vmatpush2.xpose.msra.mxu0 0.0
  %664 = vmatprep.subr.mxu0 0.0
  %665 = vmatpush2.xpose.msra.mxu0 0.0
  %666 = vmatprep.subr.mxu0 0.0
  %667 = vmatpush2.xpose.msra.mxu0 0.0
  %668 = vmatprep.mubr.f32.mxu0 0.0
  %v669 = vand.u32 %v591, 4294901760
  %v670 = vsub.f32 %v591, %v669
  %v671 = vand.u32 %v670, 4294901760
  %v672 = vsub.f32 %v670, %v671
  %v673 = vand.u32 %v672, 4294901760
  %674 = vmatmul.mubr.f32.gmra.mxu0 %v673
  %v675 = vpop.f32.mrf.mxu0
  %v676 = vadd.f32 0.0, %v675
  %v677 = vpop.f32.mrf.mxu0
  %678 = vmatprep.mubr.f32.mxu0 0.0
  %v679 = vand.u32 %v594, 4294901760
  %v680 = vsub.f32 %v594, %v679
  %v681 = vand.u32 %v680, 4294901760
  %v682 = vsub.f32 %v680, %v681
  %v683 = vand.u32 %v682, 4294901760
  %684 = vmatmul.mubr.f32.gmra.mxu0 %v683
  %v685 = vpop.f32.mrf.mxu0
  %v686 = vadd.f32 0.0, %v685
  %v687 = vpop.f32.mrf.mxu0
  %688 = vdwg.mxu0
  %689 = vmatprep.subr.mxu0 0.0
  %690 = vmatpush1.xpose.msra.mxu0 0.0
  %691 = vmatprep.subr.mxu0 0.0
  %692 = vmatpush1.xpose.msra.mxu0 0.0
  %693 = vmatprep.subr.mxu0 0.0
  %694 = vmatpush1.xpose.msra.mxu0 0.0
  %695 = vmatprep.subr.mxu0 0.0
  %696 = vmatpush1.xpose.msra.mxu0 0.0
  %697 = vmatprep.subr.mxu0 0.0
  %698 = vmatpush1.xpose.msra.mxu0 0.0
  %699 = vmatprep.subr.mxu0 0.0
  %700 = vmatpush1.xpose.msra.mxu0 0.0
  %701 = vmatprep.subr.mxu0 0.0
  %702 = vmatpush1.xpose.msra.mxu0 0.0
  %703 = vmatprep.subr.mxu0 0.0
  %704 = vmatpush1.xpose.msra.mxu0 0.0
  %705 = vmatprep.subr.mxu0 0.0
  %706 = vmatpush1.xpose.msra.mxu0 0.0
  %707 = vmatprep.subr.mxu0 0.0
  %708 = vmatpush1.xpose.msra.mxu0 0.0
  %709 = vmatprep.subr.mxu0 0.0
  %710 = vmatpush1.xpose.msra.mxu0 0.0
  %711 = vmatprep.subr.mxu0 0.0
  %712 = vmatpush1.xpose.msra.mxu0 0.0
  %713 = vmatprep.subr.mxu0 0.0
  %714 = vmatpush1.xpose.msra.mxu0 0.0
  %715 = vmatprep.subr.mxu0 0.0
  %716 = vmatpush1.xpose.msra.mxu0 0.0
  %717 = vmatprep.subr.mxu0 0.0
  %v718 = vand.u32 %v600, 4294901760
  %v719 = vsub.f32 %v600, %v718
  %v720 = vand.u32 %v719, 4294901760
  %v721 = vsub.f32 %v719, %v720
  %v722 = vand.u32 %v721, 4294901760
  %723 = vmatpush1.xpose.msra.mxu0 %v722
  %724 = vmatprep.subr.mxu0 0.0
  %v725 = vand.u32 %v597, 4294901760
  %v726 = vsub.f32 %v597, %v725
  %v727 = vand.u32 %v726, 4294901760
  %v728 = vsub.f32 %v726, %v727
  %v729 = vand.u32 %v728, 4294901760
  %730 = vmatpush1.xpose.msra.mxu0 %v729
  %731 = vmatprep.subr.mxu0 0.0
  %732 = vmatpush2.xpose.msra.mxu0 0.0
  %733 = vmatprep.subr.mxu0 0.0
  %734 = vmatpush2.xpose.msra.mxu0 0.0
  %735 = vmatprep.subr.mxu0 0.0
  %736 = vmatpush2.xpose.msra.mxu0 0.0
  %737 = vmatprep.subr.mxu0 0.0
  %738 = vmatpush2.xpose.msra.mxu0 0.0
  %739 = vmatprep.subr.mxu0 0.0
  %740 = vmatpush2.xpose.msra.mxu0 0.0
  %741 = vmatprep.subr.mxu0 0.0
  %742 = vmatpush2.xpose.msra.mxu0 0.0
  %743 = vmatprep.subr.mxu0 0.0
  %744 = vmatpush2.xpose.msra.mxu0 0.0
  %745 = vmatprep.subr.mxu0 0.0
  %746 = vmatpush2.xpose.msra.mxu0 0.0
  %747 = vmatprep.subr.mxu0 0.0
  %748 = vmatpush2.xpose.msra.mxu0 0.0
  %749 = vmatprep.subr.mxu0 0.0
  %750 = vmatpush2.xpose.msra.mxu0 0.0
  %751 = vmatprep.subr.mxu0 0.0
  %752 = vmatpush2.xpose.msra.mxu0 0.0
  %753 = vmatprep.subr.mxu0 0.0
  %754 = vmatpush2.xpose.msra.mxu0 0.0
  %755 = vmatprep.subr.mxu0 0.0
  %756 = vmatpush2.xpose.msra.mxu0 0.0
  %757 = vmatprep.subr.mxu0 0.0
  %758 = vmatpush2.xpose.msra.mxu0 0.0
  %759 = vmatprep.subr.mxu0 0.0
  %760 = vmatpush2.xpose.msra.mxu0 0.0
  %761 = vmatprep.subr.mxu0 0.0
  %762 = vmatpush2.xpose.msra.mxu0 0.0
  %763 = vmatprep.mubr.f32.mxu0 0.0
  %v764 = vand.u32 %v591, 4294901760
  %765 = vmatmul.mubr.f32.gmra.mxu0 %v764
  %v766 = vpop.f32.mrf.mxu0
  %v767 = vadd.f32 %v676, %v766
  %v768 = vpop.f32.mrf.mxu0
  %769 = vmatprep.mubr.f32.mxu0 0.0
  %v770 = vand.u32 %v594, 4294901760
  %771 = vmatmul.mubr.f32.gmra.mxu0 %v770
  %v772 = vpop.f32.mrf.mxu0
  %v773 = vadd.f32 %v686, %v772
  %v774 = vpop.f32.mrf.mxu0
  %775 = vdwg.mxu0
  %776 = vmatprep.subr.mxu0 0.0
  %777 = vmatpush1.xpose.msra.mxu0 0.0
  %778 = vmatprep.subr.mxu0 0.0
  %779 = vmatpush1.xpose.msra.mxu0 0.0
  %780 = vmatprep.subr.mxu0 0.0
  %781 = vmatpush1.xpose.msra.mxu0 0.0
  %782 = vmatprep.subr.mxu0 0.0
  %783 = vmatpush1.xpose.msra.mxu0 0.0
  %784 = vmatprep.subr.mxu0 0.0
  %785 = vmatpush1.xpose.msra.mxu0 0.0
  %786 = vmatprep.subr.mxu0 0.0
  %787 = vmatpush1.xpose.msra.mxu0 0.0
  %788 = vmatprep.subr.mxu0 0.0
  %789 = vmatpush1.xpose.msra.mxu0 0.0
  %790 = vmatprep.subr.mxu0 0.0
  %791 = vmatpush1.xpose.msra.mxu0 0.0
  %792 = vmatprep.subr.mxu0 0.0
  %793 = vmatpush1.xpose.msra.mxu0 0.0
  %794 = vmatprep.subr.mxu0 0.0
  %795 = vmatpush1.xpose.msra.mxu0 0.0
  %796 = vmatprep.subr.mxu0 0.0
  %797 = vmatpush1.xpose.msra.mxu0 0.0
  %798 = vmatprep.subr.mxu0 0.0
  %799 = vmatpush1.xpose.msra.mxu0 0.0
  %800 = vmatprep.subr.mxu0 0.0
  %801 = vmatpush1.xpose.msra.mxu0 0.0
  %802 = vmatprep.subr.mxu0 0.0
  %803 = vmatpush1.xpose.msra.mxu0 0.0
  %804 = vmatprep.subr.mxu0 0.0
  %v805 = vand.u32 %v600, 4294901760
  %v806 = vsub.f32 %v600, %v805
  %807 = vmatpush1.xpose.msra.mxu0 %v806
  %808 = vmatprep.subr.mxu0 0.0
  %v809 = vand.u32 %v597, 4294901760
  %v810 = vsub.f32 %v597, %v809
  %811 = vmatpush1.xpose.msra.mxu0 %v810
  %812 = vmatprep.subr.mxu0 0.0
  %813 = vmatpush2.xpose.msra.mxu0 0.0
  %814 = vmatprep.subr.mxu0 0.0
  %815 = vmatpush2.xpose.msra.mxu0 0.0
  %816 = vmatprep.subr.mxu0 0.0
  %817 = vmatpush2.xpose.msra.mxu0 0.0
  %818 = vmatprep.subr.mxu0 0.0
  %819 = vmatpush2.xpose.msra.mxu0 0.0
  %820 = vmatprep.subr.mxu0 0.0
  %821 = vmatpush2.xpose.msra.mxu0 0.0
  %822 = vmatprep.subr.mxu0 0.0
  %823 = vmatpush2.xpose.msra.mxu0 0.0
  %824 = vmatprep.subr.mxu0 0.0
  %825 = vmatpush2.xpose.msra.mxu0 0.0
  %826 = vmatprep.subr.mxu0 0.0
  %827 = vmatpush2.xpose.msra.mxu0 0.0
  %828 = vmatprep.subr.mxu0 0.0
  %829 = vmatpush2.xpose.msra.mxu0 0.0
  %830 = vmatprep.subr.mxu0 0.0
  %831 = vmatpush2.xpose.msra.mxu0 0.0
  %832 = vmatprep.subr.mxu0 0.0
  %833 = vmatpush2.xpose.msra.mxu0 0.0
  %834 = vmatprep.subr.mxu0 0.0
  %835 = vmatpush2.xpose.msra.mxu0 0.0
  %836 = vmatprep.subr.mxu0 0.0
  %837 = vmatpush2.xpose.msra.mxu0 0.0
  %838 = vmatprep.subr.mxu0 0.0
  %839 = vmatpush2.xpose.msra.mxu0 0.0
  %840 = vmatprep.subr.mxu0 0.0
  %841 = vmatpush2.xpose.msra.mxu0 0.0
  %842 = vmatprep.subr.mxu0 0.0
  %843 = vmatpush2.xpose.msra.mxu0 0.0
  %844 = vmatprep.mubr.f32.mxu0 0.0
  %v845 = vand.u32 %v591, 4294901760
  %v846 = vsub.f32 %v591, %v845
  %847 = vmatmul.mubr.f32.gmra.mxu0 %v846
  %v848 = vpop.f32.mrf.mxu0
  %v849 = vadd.f32 %v767, %v848
  %v850 = vpop.f32.mrf.mxu0
  %851 = vmatprep.mubr.f32.mxu0 0.0
  %v852 = vand.u32 %v594, 4294901760
  %v853 = vsub.f32 %v594, %v852
  %854 = vmatmul.mubr.f32.gmra.mxu0 %v853
  %v855 = vpop.f32.mrf.mxu0
  %v856 = vadd.f32 %v773, %v855
  %v857 = vpop.f32.mrf.mxu0
  %858 = vdwg.mxu0
  %859 = vmatprep.subr.mxu0 0.0
  %860 = vmatpush1.xpose.msra.mxu0 0.0
  %861 = vmatprep.subr.mxu0 0.0
  %862 = vmatpush1.xpose.msra.mxu0 0.0
  %863 = vmatprep.subr.mxu0 0.0
  %864 = vmatpush1.xpose.msra.mxu0 0.0
  %865 = vmatprep.subr.mxu0 0.0
  %866 = vmatpush1.xpose.msra.mxu0 0.0
  %867 = vmatprep.subr.mxu0 0.0
  %868 = vmatpush1.xpose.msra.mxu0 0.0
  %869 = vmatprep.subr.mxu0 0.0
  %870 = vmatpush1.xpose.msra.mxu0 0.0
  %871 = vmatprep.subr.mxu0 0.0
  %872 = vmatpush1.xpose.msra.mxu0 0.0
  %873 = vmatprep.subr.mxu0 0.0
  %874 = vmatpush1.xpose.msra.mxu0 0.0
  %875 = vmatprep.subr.mxu0 0.0
  %876 = vmatpush1.xpose.msra.mxu0 0.0
  %877 = vmatprep.subr.mxu0 0.0
  %878 = vmatpush1.xpose.msra.mxu0 0.0
  %879 = vmatprep.subr.mxu0 0.0
  %880 = vmatpush1.xpose.msra.mxu0 0.0
  %881 = vmatprep.subr.mxu0 0.0
  %882 = vmatpush1.xpose.msra.mxu0 0.0
  %883 = vmatprep.subr.mxu0 0.0
  %884 = vmatpush1.xpose.msra.mxu0 0.0
  %885 = vmatprep.subr.mxu0 0.0
  %886 = vmatpush1.xpose.msra.mxu0 0.0
  %887 = vmatprep.subr.mxu0 0.0
  %v888 = vand.u32 %v600, 4294901760
  %889 = vmatpush1.xpose.msra.mxu0 %v888
  %890 = vmatprep.subr.mxu0 0.0
  %v891 = vand.u32 %v597, 4294901760
  %892 = vmatpush1.xpose.msra.mxu0 %v891
  %893 = vmatprep.subr.mxu0 0.0
  %894 = vmatpush2.xpose.msra.mxu0 0.0
  %895 = vmatprep.subr.mxu0 0.0
  %896 = vmatpush2.xpose.msra.mxu0 0.0
  %897 = vmatprep.subr.mxu0 0.0
  %898 = vmatpush2.xpose.msra.mxu0 0.0
  %899 = vmatprep.subr.mxu0 0.0
  %900 = vmatpush2.xpose.msra.mxu0 0.0
  %901 = vmatprep.subr.mxu0 0.0
  %902 = vmatpush2.xpose.msra.mxu0 0.0
  %903 = vmatprep.subr.mxu0 0.0
  %904 = vmatpush2.xpose.msra.mxu0 0.0
  %905 = vmatprep.subr.mxu0 0.0
  %906 = vmatpush2.xpose.msra.mxu0 0.0
  %907 = vmatprep.subr.mxu0 0.0
  %908 = vmatpush2.xpose.msra.mxu0 0.0
  %909 = vmatprep.subr.mxu0 0.0
  %910 = vmatpush2.xpose.msra.mxu0 0.0
  %911 = vmatprep.subr.mxu0 0.0
  %912 = vmatpush2.xpose.msra.mxu0 0.0
  %913 = vmatprep.subr.mxu0 0.0
  %914 = vmatpush2.xpose.msra.mxu0 0.0
  %915 = vmatprep.subr.mxu0 0.0
  %916 = vmatpush2.xpose.msra.mxu0 0.0
  %917 = vmatprep.subr.mxu0 0.0
  %918 = vmatpush2.xpose.msra.mxu0 0.0
  %919 = vmatprep.subr.mxu0 0.0
  %920 = vmatpush2.xpose.msra.mxu0 0.0
  %921 = vmatprep.subr.mxu0 0.0
  %922 = vmatpush2.xpose.msra.mxu0 0.0
  %923 = vmatprep.subr.mxu0 0.0
  %924 = vmatpush2.xpose.msra.mxu0 0.0
  %925 = vmatprep.mubr.f32.mxu0 0.0
  %v926 = vand.u32 %v591, 4294901760
  %v927 = vsub.f32 %v591, %v926
  %v928 = vand.u32 %v927, 4294901760
  %929 = vmatmul.mubr.f32.gmra.mxu0 %v928
  %v930 = vpop.f32.mrf.mxu0
  %v931 = vadd.f32 %v849, %v930
  %v932 = vpop.f32.mrf.mxu0
  %933 = vmatprep.mubr.f32.mxu0 0.0
  %v934 = vand.u32 %v594, 4294901760
  %v935 = vsub.f32 %v594, %v934
  %v936 = vand.u32 %v935, 4294901760
  %937 = vmatmul.mubr.f32.gmra.mxu0 %v936
  %v938 = vpop.f32.mrf.mxu0
  %v939 = vadd.f32 %v856, %v938
  %v940 = vpop.f32.mrf.mxu0
  %941 = vdwg.mxu0
  %942 = vmatprep.subr.mxu0 0.0
  %943 = vmatpush1.xpose.msra.mxu0 0.0
  %944 = vmatprep.subr.mxu0 0.0
  %945 = vmatpush1.xpose.msra.mxu0 0.0
  %946 = vmatprep.subr.mxu0 0.0
  %947 = vmatpush1.xpose.msra.mxu0 0.0
  %948 = vmatprep.subr.mxu0 0.0
  %949 = vmatpush1.xpose.msra.mxu0 0.0
  %950 = vmatprep.subr.mxu0 0.0
  %951 = vmatpush1.xpose.msra.mxu0 0.0
  %952 = vmatprep.subr.mxu0 0.0
  %953 = vmatpush1.xpose.msra.mxu0 0.0
  %954 = vmatprep.subr.mxu0 0.0
  %955 = vmatpush1.xpose.msra.mxu0 0.0
  %956 = vmatprep.subr.mxu0 0.0
  %957 = vmatpush1.xpose.msra.mxu0 0.0
  %958 = vmatprep.subr.mxu0 0.0
  %959 = vmatpush1.xpose.msra.mxu0 0.0
  %960 = vmatprep.subr.mxu0 0.0
  %961 = vmatpush1.xpose.msra.mxu0 0.0
  %962 = vmatprep.subr.mxu0 0.0
  %963 = vmatpush1.xpose.msra.mxu0 0.0
  %964 = vmatprep.subr.mxu0 0.0
  %965 = vmatpush1.xpose.msra.mxu0 0.0
  %966 = vmatprep.subr.mxu0 0.0
  %967 = vmatpush1.xpose.msra.mxu0 0.0
  %968 = vmatprep.subr.mxu0 0.0
  %969 = vmatpush1.xpose.msra.mxu0 0.0
  %970 = vmatprep.subr.mxu0 0.0
  %v971 = vand.u32 %v600, 4294901760
  %v972 = vsub.f32 %v600, %v971
  %v973 = vand.u32 %v972, 4294901760
  %974 = vmatpush1.xpose.msra.mxu0 %v973
  %975 = vmatprep.subr.mxu0 0.0
  %v976 = vand.u32 %v597, 4294901760
  %v977 = vsub.f32 %v597, %v976
  %v978 = vand.u32 %v977, 4294901760
  %979 = vmatpush1.xpose.msra.mxu0 %v978
  %980 = vmatprep.subr.mxu0 0.0
  %981 = vmatpush2.xpose.msra.mxu0 0.0
  %982 = vmatprep.subr.mxu0 0.0
  %983 = vmatpush2.xpose.msra.mxu0 0.0
  %984 = vmatprep.subr.mxu0 0.0
  %985 = vmatpush2.xpose.msra.mxu0 0.0
  %986 = vmatprep.subr.mxu0 0.0
  %987 = vmatpush2.xpose.msra.mxu0 0.0
  %988 = vmatprep.subr.mxu0 0.0
  %989 = vmatpush2.xpose.msra.mxu0 0.0
  %990 = vmatprep.subr.mxu0 0.0
  %991 = vmatpush2.xpose.msra.mxu0 0.0
  %992 = vmatprep.subr.mxu0 0.0
  %993 = vmatpush2.xpose.msra.mxu0 0.0
  %994 = vmatprep.subr.mxu0 0.0
  %995 = vmatpush2.xpose.msra.mxu0 0.0
  %996 = vmatprep.subr.mxu0 0.0
  %997 = vmatpush2.xpose.msra.mxu0 0.0
  %998 = vmatprep.subr.mxu0 0.0
  %999 = vmatpush2.xpose.msra.mxu0 0.0
  %1000 = vmatprep.subr.mxu0 0.0
  %1001 = vmatpush2.xpose.msra.mxu0 0.0
  %1002 = vmatprep.subr.mxu0 0.0
  %1003 = vmatpush2.xpose.msra.mxu0 0.0
  %1004 = vmatprep.subr.mxu0 0.0
  %1005 = vmatpush2.xpose.msra.mxu0 0.0
  %1006 = vmatprep.subr.mxu0 0.0
  %1007 = vmatpush2.xpose.msra.mxu0 0.0
  %1008 = vmatprep.subr.mxu0 0.0
  %1009 = vmatpush2.xpose.msra.mxu0 0.0
  %1010 = vmatprep.subr.mxu0 0.0
  %1011 = vmatpush2.xpose.msra.mxu0 0.0
  %1012 = vmatprep.mubr.f32.mxu0 0.0
  %v1013 = vand.u32 %v591, 4294901760
  %1014 = vmatmul.mubr.f32.gmra.mxu0 %v1013
  %v1015 = vpop.f32.mrf.mxu0
  %v1016 = vadd.f32 %v931, %v1015
  %v1017 = vpop.f32.mrf.mxu0
  %1018 = vmatprep.mubr.f32.mxu0 0.0
  %v1019 = vand.u32 %v594, 4294901760
  %1020 = vmatmul.mubr.f32.gmra.mxu0 %v1019
  %v1021 = vpop.f32.mrf.mxu0
  %v1022 = vadd.f32 %v939, %v1021
  %v1023 = vpop.f32.mrf.mxu0
  %1024 = vdwg.mxu0
  %1025 = vmatprep.subr.mxu0 0.0
  %1026 = vmatpush1.xpose.msra.mxu0 0.0
  %1027 = vmatprep.subr.mxu0 0.0
  %1028 = vmatpush1.xpose.msra.mxu0 0.0
  %1029 = vmatprep.subr.mxu0 0.0
  %1030 = vmatpush1.xpose.msra.mxu0 0.0
  %1031 = vmatprep.subr.mxu0 0.0
  %1032 = vmatpush1.xpose.msra.mxu0 0.0
  %1033 = vmatprep.subr.mxu0 0.0
  %1034 = vmatpush1.xpose.msra.mxu0 0.0
  %1035 = vmatprep.subr.mxu0 0.0
  %1036 = vmatpush1.xpose.msra.mxu0 0.0
  %1037 = vmatprep.subr.mxu0 0.0
  %1038 = vmatpush1.xpose.msra.mxu0 0.0
  %1039 = vmatprep.subr.mxu0 0.0
  %1040 = vmatpush1.xpose.msra.mxu0 0.0
  %1041 = vmatprep.subr.mxu0 0.0
  %1042 = vmatpush1.xpose.msra.mxu0 0.0
  %1043 = vmatprep.subr.mxu0 0.0
  %1044 = vmatpush1.xpose.msra.mxu0 0.0
  %1045 = vmatprep.subr.mxu0 0.0
  %1046 = vmatpush1.xpose.msra.mxu0 0.0
  %1047 = vmatprep.subr.mxu0 0.0
  %1048 = vmatpush1.xpose.msra.mxu0 0.0
  %1049 = vmatprep.subr.mxu0 0.0
  %1050 = vmatpush1.xpose.msra.mxu0 0.0
  %1051 = vmatprep.subr.mxu0 0.0
  %1052 = vmatpush1.xpose.msra.mxu0 0.0
  %1053 = vmatprep.subr.mxu0 0.0
  %v1054 = vand.u32 %v600, 4294901760
  %1055 = vmatpush1.xpose.msra.mxu0 %v1054
  %1056 = vmatprep.subr.mxu0 0.0
  %v1057 = vand.u32 %v597, 4294901760
  %1058 = vmatpush1.xpose.msra.mxu0 %v1057
  %1059 = vmatprep.subr.mxu0 0.0
  %1060 = vmatpush2.xpose.msra.mxu0 0.0
  %1061 = vmatprep.subr.mxu0 0.0
  %1062 = vmatpush2.xpose.msra.mxu0 0.0
  %1063 = vmatprep.subr.mxu0 0.0
  %1064 = vmatpush2.xpose.msra.mxu0 0.0
  %1065 = vmatprep.subr.mxu0 0.0
  %1066 = vmatpush2.xpose.msra.mxu0 0.0
  %1067 = vmatprep.subr.mxu0 0.0
  %1068 = vmatpush2.xpose.msra.mxu0 0.0
  %1069 = vmatprep.subr.mxu0 0.0
  %1070 = vmatpush2.xpose.msra.mxu0 0.0
  %1071 = vmatprep.subr.mxu0 0.0
  %1072 = vmatpush2.xpose.msra.mxu0 0.0
  %1073 = vmatprep.subr.mxu0 0.0
  %1074 = vmatpush2.xpose.msra.mxu0 0.0
  %1075 = vmatprep.subr.mxu0 0.0
  %1076 = vmatpush2.xpose.msra.mxu0 0.0
  %1077 = vmatprep.subr.mxu0 0.0
  %1078 = vmatpush2.xpose.msra.mxu0 0.0
  %1079 = vmatprep.subr.mxu0 0.0
  %1080 = vmatpush2.xpose.msra.mxu0 0.0
  %1081 = vmatprep.subr.mxu0 0.0
  %1082 = vmatpush2.xpose.msra.mxu0 0.0
  %1083 = vmatprep.subr.mxu0 0.0
  %1084 = vmatpush2.xpose.msra.mxu0 0.0
  %1085 = vmatprep.subr.mxu0 0.0
  %1086 = vmatpush2.xpose.msra.mxu0 0.0
  %1087 = vmatprep.subr.mxu0 0.0
  %1088 = vmatpush2.xpose.msra.mxu0 0.0
  %1089 = vmatprep.subr.mxu0 0.0
  %1090 = vmatpush2.xpose.msra.mxu0 0.0
  %1091 = vmatprep.mubr.f32.mxu0 0.0
  %v1092 = vand.u32 %v591, 4294901760
  %1093 = vmatmul.mubr.f32.gmra.mxu0 %v1092
  %v1094 = vpop.f32.mrf.mxu0
  %v1095 = vadd.f32 %v1016, %v1094
  %v1096 = vpop.f32.mrf.mxu0
  %1097 = vmatprep.mubr.f32.mxu0 0.0
  %v1098 = vand.u32 %v594, 4294901760
  %1099 = vmatmul.mubr.f32.gmra.mxu0 %v1098
  %v1100 = vpop.f32.mrf.mxu0
  %v1101 = vadd.f32 %v1022, %v1100
  %v1102 = vpop.f32.mrf.mxu0
  %1103 = vdwg.mxu0
  %v1105 = vsel %vm56, %v21, 0
  %v1108 = vsel %vm56, %v22, 0
  %1110 = vmatprep.subr.mxu0 0.0
  %1111 = vmatpush1.xpose.msra.mxu0 0.0
  %1112 = vmatprep.subr.mxu0 0.0
  %1113 = vmatpush1.xpose.msra.mxu0 0.0
  %1114 = vmatprep.subr.mxu0 0.0
  %1115 = vmatpush1.xpose.msra.mxu0 0.0
  %1116 = vmatprep.subr.mxu0 0.0
  %1117 = vmatpush1.xpose.msra.mxu0 0.0
  %1118 = vmatprep.subr.mxu0 0.0
  %1119 = vmatpush1.xpose.msra.mxu0 0.0
  %1120 = vmatprep.subr.mxu0 0.0
  %1121 = vmatpush1.xpose.msra.mxu0 0.0
  %1122 = vmatprep.subr.mxu0 0.0
  %1123 = vmatpush1.xpose.msra.mxu0 0.0
  %1124 = vmatprep.subr.mxu0 0.0
  %1125 = vmatpush1.xpose.msra.mxu0 0.0
  %1126 = vmatprep.subr.mxu0 0.0
  %1127 = vmatpush1.xpose.msra.mxu0 0.0
  %1128 = vmatprep.subr.mxu0 0.0
  %1129 = vmatpush1.xpose.msra.mxu0 0.0
  %1130 = vmatprep.subr.mxu0 0.0
  %1131 = vmatpush1.xpose.msra.mxu0 0.0
  %1132 = vmatprep.subr.mxu0 0.0
  %1133 = vmatpush1.xpose.msra.mxu0 0.0
  %1134 = vmatprep.subr.mxu0 0.0
  %1135 = vmatpush1.xpose.msra.mxu0 0.0
  %1136 = vmatprep.subr.mxu0 0.0
  %1137 = vmatpush1.xpose.msra.mxu0 0.0
  %1138 = vmatprep.subr.mxu0 0.0
  %v1139 = vand.u32 %v1108, 4294901760
  %1140 = vmatpush1.xpose.msra.mxu0 %v1139
  %1141 = vmatprep.subr.mxu0 0.0
  %v1142 = vand.u32 %v1105, 4294901760
  %1143 = vmatpush1.xpose.msra.mxu0 %v1142
  %1144 = vmatprep.subr.mxu0 0.0
  %1145 = vmatpush2.xpose.msra.mxu0 0.0
  %1146 = vmatprep.subr.mxu0 0.0
  %1147 = vmatpush2.xpose.msra.mxu0 0.0
  %1148 = vmatprep.subr.mxu0 0.0
  %1149 = vmatpush2.xpose.msra.mxu0 0.0
  %1150 = vmatprep.subr.mxu0 0.0
  %1151 = vmatpush2.xpose.msra.mxu0 0.0
  %1152 = vmatprep.subr.mxu0 0.0
  %1153 = vmatpush2.xpose.msra.mxu0 0.0
  %1154 = vmatprep.subr.mxu0 0.0
  %1155 = vmatpush2.xpose.msra.mxu0 0.0
  %1156 = vmatprep.subr.mxu0 0.0
  %1157 = vmatpush2.xpose.msra.mxu0 0.0
  %1158 = vmatprep.subr.mxu0 0.0
  %1159 = vmatpush2.xpose.msra.mxu0 0.0
  %1160 = vmatprep.subr.mxu0 0.0
  %1161 = vmatpush2.xpose.msra.mxu0 0.0
  %1162 = vmatprep.subr.mxu0 0.0
  %1163 = vmatpush2.xpose.msra.mxu0 0.0
  %1164 = vmatprep.subr.mxu0 0.0
  %1165 = vmatpush2.xpose.msra.mxu0 0.0
  %1166 = vmatprep.subr.mxu0 0.0
  %1167 = vmatpush2.xpose.msra.mxu0 0.0
  %1168 = vmatprep.subr.mxu0 0.0
  %1169 = vmatpush2.xpose.msra.mxu0 0.0
  %1170 = vmatprep.subr.mxu0 0.0
  %1171 = vmatpush2.xpose.msra.mxu0 0.0
  %1172 = vmatprep.subr.mxu0 0.0
  %1173 = vmatpush2.xpose.msra.mxu0 0.0
  %1174 = vmatprep.subr.mxu0 0.0
  %1175 = vmatpush2.xpose.msra.mxu0 0.0
  %1176 = vmatprep.mubr.f32.mxu0 0.0
  %v1177 = vand.u32 %v591, 4294901760
  %v1178 = vsub.f32 %v591, %v1177
  %v1179 = vand.u32 %v1178, 4294901760
  %v1180 = vsub.f32 %v1178, %v1179
  %v1181 = vand.u32 %v1180, 4294901760
  %1182 = vmatmul.mubr.f32.gmra.mxu0 %v1181
  %v1183 = vpop.f32.mrf.mxu0
  %v1184 = vadd.f32 0.0, %v1183
  %v1185 = vpop.f32.mrf.mxu0
  %1186 = vmatprep.mubr.f32.mxu0 0.0
  %v1187 = vand.u32 %v594, 4294901760
  %v1188 = vsub.f32 %v594, %v1187
  %v1189 = vand.u32 %v1188, 4294901760
  %v1190 = vsub.f32 %v1188, %v1189
  %v1191 = vand.u32 %v1190, 4294901760
  %1192 = vmatmul.mubr.f32.gmra.mxu0 %v1191
  %v1193 = vpop.f32.mrf.mxu0
  %v1194 = vadd.f32 0.0, %v1193
  %v1195 = vpop.f32.mrf.mxu0
  %1196 = vdwg.mxu0
  %1197 = vmatprep.subr.mxu0 0.0
  %1198 = vmatpush1.xpose.msra.mxu0 0.0
  %1199 = vmatprep.subr.mxu0 0.0
  %1200 = vmatpush1.xpose.msra.mxu0 0.0
  %1201 = vmatprep.subr.mxu0 0.0
  %1202 = vmatpush1.xpose.msra.mxu0 0.0
  %1203 = vmatprep.subr.mxu0 0.0
  %1204 = vmatpush1.xpose.msra.mxu0 0.0
  %1205 = vmatprep.subr.mxu0 0.0
  %1206 = vmatpush1.xpose.msra.mxu0 0.0
  %1207 = vmatprep.subr.mxu0 0.0
  %1208 = vmatpush1.xpose.msra.mxu0 0.0
  %1209 = vmatprep.subr.mxu0 0.0
  %1210 = vmatpush1.xpose.msra.mxu0 0.0
  %1211 = vmatprep.subr.mxu0 0.0
  %1212 = vmatpush1.xpose.msra.mxu0 0.0
  %1213 = vmatprep.subr.mxu0 0.0
  %1214 = vmatpush1.xpose.msra.mxu0 0.0
  %1215 = vmatprep.subr.mxu0 0.0
  %1216 = vmatpush1.xpose.msra.mxu0 0.0
  %1217 = vmatprep.subr.mxu0 0.0
  %1218 = vmatpush1.xpose.msra.mxu0 0.0
  %1219 = vmatprep.subr.mxu0 0.0
  %1220 = vmatpush1.xpose.msra.mxu0 0.0
  %1221 = vmatprep.subr.mxu0 0.0
  %1222 = vmatpush1.xpose.msra.mxu0 0.0
  %1223 = vmatprep.subr.mxu0 0.0
  %1224 = vmatpush1.xpose.msra.mxu0 0.0
  %1225 = vmatprep.subr.mxu0 0.0
  %v1226 = vand.u32 %v1108, 4294901760
  %v1227 = vsub.f32 %v1108, %v1226
  %v1228 = vand.u32 %v1227, 4294901760
  %v1229 = vsub.f32 %v1227, %v1228
  %v1230 = vand.u32 %v1229, 4294901760
  %1231 = vmatpush1.xpose.msra.mxu0 %v1230
  %1232 = vmatprep.subr.mxu0 0.0
  %v1233 = vand.u32 %v1105, 4294901760
  %v1234 = vsub.f32 %v1105, %v1233
  %v1235 = vand.u32 %v1234, 4294901760
  %v1236 = vsub.f32 %v1234, %v1235
  %v1237 = vand.u32 %v1236, 4294901760
  %1238 = vmatpush1.xpose.msra.mxu0 %v1237
  %1239 = vmatprep.subr.mxu0 0.0
  %1240 = vmatpush2.xpose.msra.mxu0 0.0
  %1241 = vmatprep.subr.mxu0 0.0
  %1242 = vmatpush2.xpose.msra.mxu0 0.0
  %1243 = vmatprep.subr.mxu0 0.0
  %1244 = vmatpush2.xpose.msra.mxu0 0.0
  %1245 = vmatprep.subr.mxu0 0.0
  %1246 = vmatpush2.xpose.msra.mxu0 0.0
  %1247 = vmatprep.subr.mxu0 0.0
  %1248 = vmatpush2.xpose.msra.mxu0 0.0
  %1249 = vmatprep.subr.mxu0 0.0
  %1250 = vmatpush2.xpose.msra.mxu0 0.0
  %1251 = vmatprep.subr.mxu0 0.0
  %1252 = vmatpush2.xpose.msra.mxu0 0.0
  %1253 = vmatprep.subr.mxu0 0.0
  %1254 = vmatpush2.xpose.msra.mxu0 0.0
  %1255 = vmatprep.subr.mxu0 0.0
  %1256 = vmatpush2.xpose.msra.mxu0 0.0
  %1257 = vmatprep.subr.mxu0 0.0
  %1258 = vmatpush2.xpose.msra.mxu0 0.0
  %1259 = vmatprep.subr.mxu0 0.0
  %1260 = vmatpush2.xpose.msra.mxu0 0.0
  %1261 = vmatprep.subr.mxu0 0.0
  %1262 = vmatpush2.xpose.msra.mxu0 0.0
  %1263 = vmatprep.subr.mxu0 0.0
  %1264 = vmatpush2.xpose.msra.mxu0 0.0
  %1265 = vmatprep.subr.mxu0 0.0
  %1266 = vmatpush2.xpose.msra.mxu0 0.0
  %1267 = vmatprep.subr.mxu0 0.0
  %1268 = vmatpush2.xpose.msra.mxu0 0.0
  %1269 = vmatprep.subr.mxu0 0.0
  %1270 = vmatpush2.xpose.msra.mxu0 0.0
  %1271 = vmatprep.mubr.f32.mxu0 0.0
  %v1272 = vand.u32 %v591, 4294901760
  %1273 = vmatmul.mubr.f32.gmra.mxu0 %v1272
  %v1274 = vpop.f32.mrf.mxu0
  %v1275 = vadd.f32 %v1184, %v1274
  %v1276 = vpop.f32.mrf.mxu0
  %1277 = vmatprep.mubr.f32.mxu0 0.0
  %v1278 = vand.u32 %v594, 4294901760
  %1279 = vmatmul.mubr.f32.gmra.mxu0 %v1278
  %v1280 = vpop.f32.mrf.mxu0
  %v1281 = vadd.f32 %v1194, %v1280
  %v1282 = vpop.f32.mrf.mxu0
  %1283 = vdwg.mxu0
  %1284 = vmatprep.subr.mxu0 0.0
  %1285 = vmatpush1.xpose.msra.mxu0 0.0
  %1286 = vmatprep.subr.mxu0 0.0
  %1287 = vmatpush1.xpose.msra.mxu0 0.0
  %1288 = vmatprep.subr.mxu0 0.0
  %1289 = vmatpush1.xpose.msra.mxu0 0.0
  %1290 = vmatprep.subr.mxu0 0.0
  %1291 = vmatpush1.xpose.msra.mxu0 0.0
  %1292 = vmatprep.subr.mxu0 0.0
  %1293 = vmatpush1.xpose.msra.mxu0 0.0
  %1294 = vmatprep.subr.mxu0 0.0
  %1295 = vmatpush1.xpose.msra.mxu0 0.0
  %1296 = vmatprep.subr.mxu0 0.0
  %1297 = vmatpush1.xpose.msra.mxu0 0.0
  %1298 = vmatprep.subr.mxu0 0.0
  %1299 = vmatpush1.xpose.msra.mxu0 0.0
  %1300 = vmatprep.subr.mxu0 0.0
  %1301 = vmatpush1.xpose.msra.mxu0 0.0
  %1302 = vmatprep.subr.mxu0 0.0
  %1303 = vmatpush1.xpose.msra.mxu0 0.0
  %1304 = vmatprep.subr.mxu0 0.0
  %1305 = vmatpush1.xpose.msra.mxu0 0.0
  %1306 = vmatprep.subr.mxu0 0.0
  %1307 = vmatpush1.xpose.msra.mxu0 0.0
  %1308 = vmatprep.subr.mxu0 0.0
  %1309 = vmatpush1.xpose.msra.mxu0 0.0
  %1310 = vmatprep.subr.mxu0 0.0
  %1311 = vmatpush1.xpose.msra.mxu0 0.0
  %1312 = vmatprep.subr.mxu0 0.0
  %v1313 = vand.u32 %v1108, 4294901760
  %v1314 = vsub.f32 %v1108, %v1313
  %1315 = vmatpush1.xpose.msra.mxu0 %v1314
  %1316 = vmatprep.subr.mxu0 0.0
  %v1317 = vand.u32 %v1105, 4294901760
  %v1318 = vsub.f32 %v1105, %v1317
  %1319 = vmatpush1.xpose.msra.mxu0 %v1318
  %1320 = vmatprep.subr.mxu0 0.0
  %1321 = vmatpush2.xpose.msra.mxu0 0.0
  %1322 = vmatprep.subr.mxu0 0.0
  %1323 = vmatpush2.xpose.msra.mxu0 0.0
  %1324 = vmatprep.subr.mxu0 0.0
  %1325 = vmatpush2.xpose.msra.mxu0 0.0
  %1326 = vmatprep.subr.mxu0 0.0
  %1327 = vmatpush2.xpose.msra.mxu0 0.0
  %1328 = vmatprep.subr.mxu0 0.0
  %1329 = vmatpush2.xpose.msra.mxu0 0.0
  %1330 = vmatprep.subr.mxu0 0.0
  %1331 = vmatpush2.xpose.msra.mxu0 0.0
  %1332 = vmatprep.subr.mxu0 0.0
  %1333 = vmatpush2.xpose.msra.mxu0 0.0
  %1334 = vmatprep.subr.mxu0 0.0
  %1335 = vmatpush2.xpose.msra.mxu0 0.0
  %1336 = vmatprep.subr.mxu0 0.0
  %1337 = vmatpush2.xpose.msra.mxu0 0.0
  %1338 = vmatprep.subr.mxu0 0.0
  %1339 = vmatpush2.xpose.msra.mxu0 0.0
  %1340 = vmatprep.subr.mxu0 0.0
  %1341 = vmatpush2.xpose.msra.mxu0 0.0
  %1342 = vmatprep.subr.mxu0 0.0
  %1343 = vmatpush2.xpose.msra.mxu0 0.0
  %1344 = vmatprep.subr.mxu0 0.0
  %1345 = vmatpush2.xpose.msra.mxu0 0.0
  %1346 = vmatprep.subr.mxu0 0.0
  %1347 = vmatpush2.xpose.msra.mxu0 0.0
  %1348 = vmatprep.subr.mxu0 0.0
  %1349 = vmatpush2.xpose.msra.mxu0 0.0
  %1350 = vmatprep.subr.mxu0 0.0
  %1351 = vmatpush2.xpose.msra.mxu0 0.0
  %1352 = vmatprep.mubr.f32.mxu0 0.0
  %v1353 = vand.u32 %v591, 4294901760
  %v1354 = vsub.f32 %v591, %v1353
  %1355 = vmatmul.mubr.f32.gmra.mxu0 %v1354
  %v1356 = vpop.f32.mrf.mxu0
  %v1357 = vadd.f32 %v1275, %v1356
  %v1358 = vpop.f32.mrf.mxu0
  %1359 = vmatprep.mubr.f32.mxu0 0.0
  %v1360 = vand.u32 %v594, 4294901760
  %v1361 = vsub.f32 %v594, %v1360
  %1362 = vmatmul.mubr.f32.gmra.mxu0 %v1361
  %v1363 = vpop.f32.mrf.mxu0
  %v1364 = vadd.f32 %v1281, %v1363
  %v1365 = vpop.f32.mrf.mxu0
  %1366 = vdwg.mxu0
  %1367 = vmatprep.subr.mxu0 0.0
  %1368 = vmatpush1.xpose.msra.mxu0 0.0
  %1369 = vmatprep.subr.mxu0 0.0
  %1370 = vmatpush1.xpose.msra.mxu0 0.0
  %1371 = vmatprep.subr.mxu0 0.0
  %1372 = vmatpush1.xpose.msra.mxu0 0.0
  %1373 = vmatprep.subr.mxu0 0.0
  %1374 = vmatpush1.xpose.msra.mxu0 0.0
  %1375 = vmatprep.subr.mxu0 0.0
  %1376 = vmatpush1.xpose.msra.mxu0 0.0
  %1377 = vmatprep.subr.mxu0 0.0
  %1378 = vmatpush1.xpose.msra.mxu0 0.0
  %1379 = vmatprep.subr.mxu0 0.0
  %1380 = vmatpush1.xpose.msra.mxu0 0.0
  %1381 = vmatprep.subr.mxu0 0.0
  %1382 = vmatpush1.xpose.msra.mxu0 0.0
  %1383 = vmatprep.subr.mxu0 0.0
  %1384 = vmatpush1.xpose.msra.mxu0 0.0
  %1385 = vmatprep.subr.mxu0 0.0
  %1386 = vmatpush1.xpose.msra.mxu0 0.0
  %1387 = vmatprep.subr.mxu0 0.0
  %1388 = vmatpush1.xpose.msra.mxu0 0.0
  %1389 = vmatprep.subr.mxu0 0.0
  %1390 = vmatpush1.xpose.msra.mxu0 0.0
  %1391 = vmatprep.subr.mxu0 0.0
  %1392 = vmatpush1.xpose.msra.mxu0 0.0
  %1393 = vmatprep.subr.mxu0 0.0
  %1394 = vmatpush1.xpose.msra.mxu0 0.0
  %1395 = vmatprep.subr.mxu0 0.0
  %v1396 = vand.u32 %v1108, 4294901760
  %1397 = vmatpush1.xpose.msra.mxu0 %v1396
  %1398 = vmatprep.subr.mxu0 0.0
  %v1399 = vand.u32 %v1105, 4294901760
  %1400 = vmatpush1.xpose.msra.mxu0 %v1399
  %1401 = vmatprep.subr.mxu0 0.0
  %1402 = vmatpush2.xpose.msra.mxu0 0.0
  %1403 = vmatprep.subr.mxu0 0.0
  %1404 = vmatpush2.xpose.msra.mxu0 0.0
  %1405 = vmatprep.subr.mxu0 0.0
  %1406 = vmatpush2.xpose.msra.mxu0 0.0
  %1407 = vmatprep.subr.mxu0 0.0
  %1408 = vmatpush2.xpose.msra.mxu0 0.0
  %1409 = vmatprep.subr.mxu0 0.0
  %1410 = vmatpush2.xpose.msra.mxu0 0.0
  %1411 = vmatprep.subr.mxu0 0.0
  %1412 = vmatpush2.xpose.msra.mxu0 0.0
  %1413 = vmatprep.subr.mxu0 0.0
  %1414 = vmatpush2.xpose.msra.mxu0 0.0
  %1415 = vmatprep.subr.mxu0 0.0
  %1416 = vmatpush2.xpose.msra.mxu0 0.0
  %1417 = vmatprep.subr.mxu0 0.0
  %1418 = vmatpush2.xpose.msra.mxu0 0.0
  %1419 = vmatprep.subr.mxu0 0.0
  %1420 = vmatpush2.xpose.msra.mxu0 0.0
  %1421 = vmatprep.subr.mxu0 0.0
  %1422 = vmatpush2.xpose.msra.mxu0 0.0
  %1423 = vmatprep.subr.mxu0 0.0
  %1424 = vmatpush2.xpose.msra.mxu0 0.0
  %1425 = vmatprep.subr.mxu0 0.0
  %1426 = vmatpush2.xpose.msra.mxu0 0.0
  %1427 = vmatprep.subr.mxu0 0.0
  %1428 = vmatpush2.xpose.msra.mxu0 0.0
  %1429 = vmatprep.subr.mxu0 0.0
  %1430 = vmatpush2.xpose.msra.mxu0 0.0
  %1431 = vmatprep.subr.mxu0 0.0
  %1432 = vmatpush2.xpose.msra.mxu0 0.0
  %1433 = vmatprep.mubr.f32.mxu0 0.0
  %v1434 = vand.u32 %v591, 4294901760
  %v1435 = vsub.f32 %v591, %v1434
  %v1436 = vand.u32 %v1435, 4294901760
  %1437 = vmatmul.mubr.f32.gmra.mxu0 %v1436
  %v1438 = vpop.f32.mrf.mxu0
  %v1439 = vadd.f32 %v1357, %v1438
  %v1440 = vpop.f32.mrf.mxu0
  %1441 = vmatprep.mubr.f32.mxu0 0.0
  %v1442 = vand.u32 %v594, 4294901760
  %v1443 = vsub.f32 %v594, %v1442
  %v1444 = vand.u32 %v1443, 4294901760
  %1445 = vmatmul.mubr.f32.gmra.mxu0 %v1444
  %v1446 = vpop.f32.mrf.mxu0
  %v1447 = vadd.f32 %v1364, %v1446
  %v1448 = vpop.f32.mrf.mxu0
  %1449 = vdwg.mxu0
  %1450 = vmatprep.subr.mxu0 0.0
  %1451 = vmatpush1.xpose.msra.mxu0 0.0
  %1452 = vmatprep.subr.mxu0 0.0
  %1453 = vmatpush1.xpose.msra.mxu0 0.0
  %1454 = vmatprep.subr.mxu0 0.0
  %1455 = vmatpush1.xpose.msra.mxu0 0.0
  %1456 = vmatprep.subr.mxu0 0.0
  %1457 = vmatpush1.xpose.msra.mxu0 0.0
  %1458 = vmatprep.subr.mxu0 0.0
  %1459 = vmatpush1.xpose.msra.mxu0 0.0
  %1460 = vmatprep.subr.mxu0 0.0
  %1461 = vmatpush1.xpose.msra.mxu0 0.0
  %1462 = vmatprep.subr.mxu0 0.0
  %1463 = vmatpush1.xpose.msra.mxu0 0.0
  %1464 = vmatprep.subr.mxu0 0.0
  %1465 = vmatpush1.xpose.msra.mxu0 0.0
  %1466 = vmatprep.subr.mxu0 0.0
  %1467 = vmatpush1.xpose.msra.mxu0 0.0
  %1468 = vmatprep.subr.mxu0 0.0
  %1469 = vmatpush1.xpose.msra.mxu0 0.0
  %1470 = vmatprep.subr.mxu0 0.0
  %1471 = vmatpush1.xpose.msra.mxu0 0.0
  %1472 = vmatprep.subr.mxu0 0.0
  %1473 = vmatpush1.xpose.msra.mxu0 0.0
  %1474 = vmatprep.subr.mxu0 0.0
  %1475 = vmatpush1.xpose.msra.mxu0 0.0
  %1476 = vmatprep.subr.mxu0 0.0
  %1477 = vmatpush1.xpose.msra.mxu0 0.0
  %1478 = vmatprep.subr.mxu0 0.0
  %v1479 = vand.u32 %v1108, 4294901760
  %v1480 = vsub.f32 %v1108, %v1479
  %v1481 = vand.u32 %v1480, 4294901760
  %1482 = vmatpush1.xpose.msra.mxu0 %v1481
  %1483 = vmatprep.subr.mxu0 0.0
  %v1484 = vand.u32 %v1105, 4294901760
  %v1485 = vsub.f32 %v1105, %v1484
  %v1486 = vand.u32 %v1485, 4294901760
  %1487 = vmatpush1.xpose.msra.mxu0 %v1486
  %1488 = vmatprep.subr.mxu0 0.0
  %1489 = vmatpush2.xpose.msra.mxu0 0.0
  %1490 = vmatprep.subr.mxu0 0.0
  %1491 = vmatpush2.xpose.msra.mxu0 0.0
  %1492 = vmatprep.subr.mxu0 0.0
  %1493 = vmatpush2.xpose.msra.mxu0 0.0
  %1494 = vmatprep.subr.mxu0 0.0
  %1495 = vmatpush2.xpose.msra.mxu0 0.0
  %1496 = vmatprep.subr.mxu0 0.0
  %1497 = vmatpush2.xpose.msra.mxu0 0.0
  %1498 = vmatprep.subr.mxu0 0.0
  %1499 = vmatpush2.xpose.msra.mxu0 0.0
  %1500 = vmatprep.subr.mxu0 0.0
  %1501 = vmatpush2.xpose.msra.mxu0 0.0
  %1502 = vmatprep.subr.mxu0 0.0
  %1503 = vmatpush2.xpose.msra.mxu0 0.0
  %1504 = vmatprep.subr.mxu0 0.0
  %1505 = vmatpush2.xpose.msra.mxu0 0.0
  %1506 = vmatprep.subr.mxu0 0.0
  %1507 = vmatpush2.xpose.msra.mxu0 0.0
  %1508 = vmatprep.subr.mxu0 0.0
  %1509 = vmatpush2.xpose.msra.mxu0 0.0
  %1510 = vmatprep.subr.mxu0 0.0
  %1511 = vmatpush2.xpose.msra.mxu0 0.0
  %1512 = vmatprep.subr.mxu0 0.0
  %1513 = vmatpush2.xpose.msra.mxu0 0.0
  %1514 = vmatprep.subr.mxu0 0.0
  %1515 = vmatpush2.xpose.msra.mxu0 0.0
  %1516 = vmatprep.subr.mxu0 0.0
  %1517 = vmatpush2.xpose.msra.mxu0 0.0
  %1518 = vmatprep.subr.mxu0 0.0
  %1519 = vmatpush2.xpose.msra.mxu0 0.0
  %1520 = vmatprep.mubr.f32.mxu0 0.0
  %v1521 = vand.u32 %v591, 4294901760
  %1522 = vmatmul.mubr.f32.gmra.mxu0 %v1521
  %v1523 = vpop.f32.mrf.mxu0
  %v1524 = vadd.f32 %v1439, %v1523
  %v1525 = vpop.f32.mrf.mxu0
  %1526 = vmatprep.mubr.f32.mxu0 0.0
  %v1527 = vand.u32 %v594, 4294901760
  %1528 = vmatmul.mubr.f32.gmra.mxu0 %v1527
  %v1529 = vpop.f32.mrf.mxu0
  %v1530 = vadd.f32 %v1447, %v1529
  %v1531 = vpop.f32.mrf.mxu0
  %1532 = vdwg.mxu0
  %1533 = vmatprep.subr.mxu0 0.0
  %1534 = vmatpush1.xpose.msra.mxu0 0.0
  %1535 = vmatprep.subr.mxu0 0.0
  %1536 = vmatpush1.xpose.msra.mxu0 0.0
  %1537 = vmatprep.subr.mxu0 0.0
  %1538 = vmatpush1.xpose.msra.mxu0 0.0
  %1539 = vmatprep.subr.mxu0 0.0
  %1540 = vmatpush1.xpose.msra.mxu0 0.0
  %1541 = vmatprep.subr.mxu0 0.0
  %1542 = vmatpush1.xpose.msra.mxu0 0.0
  %1543 = vmatprep.subr.mxu0 0.0
  %1544 = vmatpush1.xpose.msra.mxu0 0.0
  %1545 = vmatprep.subr.mxu0 0.0
  %1546 = vmatpush1.xpose.msra.mxu0 0.0
  %1547 = vmatprep.subr.mxu0 0.0
  %1548 = vmatpush1.xpose.msra.mxu0 0.0
  %1549 = vmatprep.subr.mxu0 0.0
  %1550 = vmatpush1.xpose.msra.mxu0 0.0
  %1551 = vmatprep.subr.mxu0 0.0
  %1552 = vmatpush1.xpose.msra.mxu0 0.0
  %1553 = vmatprep.subr.mxu0 0.0
  %1554 = vmatpush1.xpose.msra.mxu0 0.0
  %1555 = vmatprep.subr.mxu0 0.0
  %1556 = vmatpush1.xpose.msra.mxu0 0.0
  %1557 = vmatprep.subr.mxu0 0.0
  %1558 = vmatpush1.xpose.msra.mxu0 0.0
  %1559 = vmatprep.subr.mxu0 0.0
  %1560 = vmatpush1.xpose.msra.mxu0 0.0
  %1561 = vmatprep.subr.mxu0 0.0
  %v1562 = vand.u32 %v1108, 4294901760
  %1563 = vmatpush1.xpose.msra.mxu0 %v1562
  %1564 = vmatprep.subr.mxu0 0.0
  %v1565 = vand.u32 %v1105, 4294901760
  %1566 = vmatpush1.xpose.msra.mxu0 %v1565
  %1567 = vmatprep.subr.mxu0 0.0
  %1568 = vmatpush2.xpose.msra.mxu0 0.0
  %1569 = vmatprep.subr.mxu0 0.0
  %1570 = vmatpush2.xpose.msra.mxu0 0.0
  %1571 = vmatprep.subr.mxu0 0.0
  %1572 = vmatpush2.xpose.msra.mxu0 0.0
  %1573 = vmatprep.subr.mxu0 0.0
  %1574 = vmatpush2.xpose.msra.mxu0 0.0
  %1575 = vmatprep.subr.mxu0 0.0
  %1576 = vmatpush2.xpose.msra.mxu0 0.0
  %1577 = vmatprep.subr.mxu0 0.0
  %1578 = vmatpush2.xpose.msra.mxu0 0.0
  %1579 = vmatprep.subr.mxu0 0.0
  %1580 = vmatpush2.xpose.msra.mxu0 0.0
  %1581 = vmatprep.subr.mxu0 0.0
  %1582 = vmatpush2.xpose.msra.mxu0 0.0
  %1583 = vmatprep.subr.mxu0 0.0
  %1584 = vmatpush2.xpose.msra.mxu0 0.0
  %1585 = vmatprep.subr.mxu0 0.0
  %1586 = vmatpush2.xpose.msra.mxu0 0.0
  %1587 = vmatprep.subr.mxu0 0.0
  %1588 = vmatpush2.xpose.msra.mxu0 0.0
  %1589 = vmatprep.subr.mxu0 0.0
  %1590 = vmatpush2.xpose.msra.mxu0 0.0
  %1591 = vmatprep.subr.mxu0 0.0
  %1592 = vmatpush2.xpose.msra.mxu0 0.0
  %1593 = vmatprep.subr.mxu0 0.0
  %1594 = vmatpush2.xpose.msra.mxu0 0.0
  %1595 = vmatprep.subr.mxu0 0.0
  %1596 = vmatpush2.xpose.msra.mxu0 0.0
  %1597 = vmatprep.subr.mxu0 0.0
  %1598 = vmatpush2.xpose.msra.mxu0 0.0
  %1599 = vmatprep.mubr.f32.mxu0 0.0
  %v1600 = vand.u32 %v591, 4294901760
  %1601 = vmatmul.mubr.f32.gmra.mxu0 %v1600
  %v1602 = vpop.f32.mrf.mxu0
  %v1603 = vadd.f32 %v1524, %v1602
  %v1604 = vpop.f32.mrf.mxu0
  %1605 = vmatprep.mubr.f32.mxu0 0.0
  %v1606 = vand.u32 %v594, 4294901760
  %1607 = vmatmul.mubr.f32.gmra.mxu0 %v1606
  %v1608 = vpop.f32.mrf.mxu0
  %v1609 = vadd.f32 %v1530, %v1608
  %v1610 = vpop.f32.mrf.mxu0
  %1611 = vdwg.mxu0
  %v1613 = vsel %vm56, %v582, 0
  %v1616 = vsel %vm56, %v583, 0
  %1618 = vmatprep.subr.mxu0 0.0
  %1619 = vmatpush1.xpose.msra.mxu0 0.0
  %1620 = vmatprep.subr.mxu0 0.0
  %1621 = vmatpush1.xpose.msra.mxu0 0.0
  %1622 = vmatprep.subr.mxu0 0.0
  %1623 = vmatpush1.xpose.msra.mxu0 0.0
  %1624 = vmatprep.subr.mxu0 0.0
  %1625 = vmatpush1.xpose.msra.mxu0 0.0
  %1626 = vmatprep.subr.mxu0 0.0
  %1627 = vmatpush1.xpose.msra.mxu0 0.0
  %1628 = vmatprep.subr.mxu0 0.0
  %1629 = vmatpush1.xpose.msra.mxu0 0.0
  %1630 = vmatprep.subr.mxu0 0.0
  %1631 = vmatpush1.xpose.msra.mxu0 0.0
  %1632 = vmatprep.subr.mxu0 0.0
  %1633 = vmatpush1.xpose.msra.mxu0 0.0
  %1634 = vmatprep.subr.mxu0 0.0
  %1635 = vmatpush1.xpose.msra.mxu0 0.0
  %1636 = vmatprep.subr.mxu0 0.0
  %1637 = vmatpush1.xpose.msra.mxu0 0.0
  %1638 = vmatprep.subr.mxu0 0.0
  %1639 = vmatpush1.xpose.msra.mxu0 0.0
  %1640 = vmatprep.subr.mxu0 0.0
  %1641 = vmatpush1.xpose.msra.mxu0 0.0
  %1642 = vmatprep.subr.mxu0 0.0
  %1643 = vmatpush1.xpose.msra.mxu0 0.0
  %1644 = vmatprep.subr.mxu0 0.0
  %1645 = vmatpush1.xpose.msra.mxu0 0.0
  %1646 = vmatprep.subr.mxu0 0.0
  %v1647 = vand.u32 %v594, 4294901760
  %1648 = vmatpush1.xpose.msra.mxu0 %v1647
  %1649 = vmatprep.subr.mxu0 0.0
  %v1650 = vand.u32 %v591, 4294901760
  %1651 = vmatpush1.xpose.msra.mxu0 %v1650
  %1652 = vmatprep.subr.mxu0 0.0
  %1653 = vmatpush2.xpose.msra.mxu0 0.0
  %1654 = vmatprep.subr.mxu0 0.0
  %1655 = vmatpush2.xpose.msra.mxu0 0.0
  %1656 = vmatprep.subr.mxu0 0.0
  %1657 = vmatpush2.xpose.msra.mxu0 0.0
  %1658 = vmatprep.subr.mxu0 0.0
  %1659 = vmatpush2.xpose.msra.mxu0 0.0
  %1660 = vmatprep.subr.mxu0 0.0
  %1661 = vmatpush2.xpose.msra.mxu0 0.0
  %1662 = vmatprep.subr.mxu0 0.0
  %1663 = vmatpush2.xpose.msra.mxu0 0.0
  %1664 = vmatprep.subr.mxu0 0.0
  %1665 = vmatpush2.xpose.msra.mxu0 0.0
  %1666 = vmatprep.subr.mxu0 0.0
  %1667 = vmatpush2.xpose.msra.mxu0 0.0
  %1668 = vmatprep.subr.mxu0 0.0
  %1669 = vmatpush2.xpose.msra.mxu0 0.0
  %1670 = vmatprep.subr.mxu0 0.0
  %1671 = vmatpush2.xpose.msra.mxu0 0.0
  %1672 = vmatprep.subr.mxu0 0.0
  %1673 = vmatpush2.xpose.msra.mxu0 0.0
  %1674 = vmatprep.subr.mxu0 0.0
  %1675 = vmatpush2.xpose.msra.mxu0 0.0
  %1676 = vmatprep.subr.mxu0 0.0
  %1677 = vmatpush2.xpose.msra.mxu0 0.0
  %1678 = vmatprep.subr.mxu0 0.0
  %1679 = vmatpush2.xpose.msra.mxu0 0.0
  %1680 = vmatprep.subr.mxu0 0.0
  %1681 = vmatpush2.xpose.msra.mxu0 0.0
  %1682 = vmatprep.subr.mxu0 0.0
  %1683 = vmatpush2.xpose.msra.mxu0 0.0
  %1684 = vmatprep.mubr.f32.mxu0 0.0
  %v1685 = vand.u32 %v1613, 4294901760
  %v1686 = vsub.f32 %v1613, %v1685
  %v1687 = vand.u32 %v1686, 4294901760
  %v1688 = vsub.f32 %v1686, %v1687
  %v1689 = vand.u32 %v1688, 4294901760
  %1690 = vmatmul.mubr.f32.gmra.mxu0 %v1689
  %v1691 = vpop.f32.mrf.mxu0
  %v1692 = vadd.f32 %v1095, %v1691
  %v1693 = vpop.f32.mrf.mxu0
  %1694 = vmatprep.mubr.f32.mxu0 0.0
  %v1695 = vand.u32 %v1616, 4294901760
  %v1696 = vsub.f32 %v1616, %v1695
  %v1697 = vand.u32 %v1696, 4294901760
  %v1698 = vsub.f32 %v1696, %v1697
  %v1699 = vand.u32 %v1698, 4294901760
  %1700 = vmatmul.mubr.f32.gmra.mxu0 %v1699
  %v1701 = vpop.f32.mrf.mxu0
  %v1702 = vadd.f32 %v1101, %v1701
  %v1703 = vpop.f32.mrf.mxu0
  %1704 = vdwg.mxu0
  %1705 = vmatprep.subr.mxu0 0.0
  %1706 = vmatpush1.xpose.msra.mxu0 0.0
  %1707 = vmatprep.subr.mxu0 0.0
  %1708 = vmatpush1.xpose.msra.mxu0 0.0
  %1709 = vmatprep.subr.mxu0 0.0
  %1710 = vmatpush1.xpose.msra.mxu0 0.0
  %1711 = vmatprep.subr.mxu0 0.0
  %1712 = vmatpush1.xpose.msra.mxu0 0.0
  %1713 = vmatprep.subr.mxu0 0.0
  %1714 = vmatpush1.xpose.msra.mxu0 0.0
  %1715 = vmatprep.subr.mxu0 0.0
  %1716 = vmatpush1.xpose.msra.mxu0 0.0
  %1717 = vmatprep.subr.mxu0 0.0
  %1718 = vmatpush1.xpose.msra.mxu0 0.0
  %1719 = vmatprep.subr.mxu0 0.0
  %1720 = vmatpush1.xpose.msra.mxu0 0.0
  %1721 = vmatprep.subr.mxu0 0.0
  %1722 = vmatpush1.xpose.msra.mxu0 0.0
  %1723 = vmatprep.subr.mxu0 0.0
  %1724 = vmatpush1.xpose.msra.mxu0 0.0
  %1725 = vmatprep.subr.mxu0 0.0
  %1726 = vmatpush1.xpose.msra.mxu0 0.0
  %1727 = vmatprep.subr.mxu0 0.0
  %1728 = vmatpush1.xpose.msra.mxu0 0.0
  %1729 = vmatprep.subr.mxu0 0.0
  %1730 = vmatpush1.xpose.msra.mxu0 0.0
  %1731 = vmatprep.subr.mxu0 0.0
  %1732 = vmatpush1.xpose.msra.mxu0 0.0
  %1733 = vmatprep.subr.mxu0 0.0
  %v1734 = vand.u32 %v594, 4294901760
  %v1735 = vsub.f32 %v594, %v1734
  %v1736 = vand.u32 %v1735, 4294901760
  %v1737 = vsub.f32 %v1735, %v1736
  %v1738 = vand.u32 %v1737, 4294901760
  %1739 = vmatpush1.xpose.msra.mxu0 %v1738
  %1740 = vmatprep.subr.mxu0 0.0
  %v1741 = vand.u32 %v591, 4294901760
  %v1742 = vsub.f32 %v591, %v1741
  %v1743 = vand.u32 %v1742, 4294901760
  %v1744 = vsub.f32 %v1742, %v1743
  %v1745 = vand.u32 %v1744, 4294901760
  %1746 = vmatpush1.xpose.msra.mxu0 %v1745
  %1747 = vmatprep.subr.mxu0 0.0
  %1748 = vmatpush2.xpose.msra.mxu0 0.0
  %1749 = vmatprep.subr.mxu0 0.0
  %1750 = vmatpush2.xpose.msra.mxu0 0.0
  %1751 = vmatprep.subr.mxu0 0.0
  %1752 = vmatpush2.xpose.msra.mxu0 0.0
  %1753 = vmatprep.subr.mxu0 0.0
  %1754 = vmatpush2.xpose.msra.mxu0 0.0
  %1755 = vmatprep.subr.mxu0 0.0
  %1756 = vmatpush2.xpose.msra.mxu0 0.0
  %1757 = vmatprep.subr.mxu0 0.0
  %1758 = vmatpush2.xpose.msra.mxu0 0.0
  %1759 = vmatprep.subr.mxu0 0.0
  %1760 = vmatpush2.xpose.msra.mxu0 0.0
  %1761 = vmatprep.subr.mxu0 0.0
  %1762 = vmatpush2.xpose.msra.mxu0 0.0
  %1763 = vmatprep.subr.mxu0 0.0
  %1764 = vmatpush2.xpose.msra.mxu0 0.0
  %1765 = vmatprep.subr.mxu0 0.0
  %1766 = vmatpush2.xpose.msra.mxu0 0.0
  %1767 = vmatprep.subr.mxu0 0.0
  %1768 = vmatpush2.xpose.msra.mxu0 0.0
  %1769 = vmatprep.subr.mxu0 0.0
  %1770 = vmatpush2.xpose.msra.mxu0 0.0
  %1771 = vmatprep.subr.mxu0 0.0
  %1772 = vmatpush2.xpose.msra.mxu0 0.0
  %1773 = vmatprep.subr.mxu0 0.0
  %1774 = vmatpush2.xpose.msra.mxu0 0.0
  %1775 = vmatprep.subr.mxu0 0.0
  %1776 = vmatpush2.xpose.msra.mxu0 0.0
  %1777 = vmatprep.subr.mxu0 0.0
  %1778 = vmatpush2.xpose.msra.mxu0 0.0
  %1779 = vmatprep.mubr.f32.mxu0 0.0
  %v1780 = vand.u32 %v1613, 4294901760
  %1781 = vmatmul.mubr.f32.gmra.mxu0 %v1780
  %v1782 = vpop.f32.mrf.mxu0
  %v1783 = vadd.f32 %v1692, %v1782
  %v1784 = vpop.f32.mrf.mxu0
  %1785 = vmatprep.mubr.f32.mxu0 0.0
  %v1786 = vand.u32 %v1616, 4294901760
  %1787 = vmatmul.mubr.f32.gmra.mxu0 %v1786
  %v1788 = vpop.f32.mrf.mxu0
  %v1789 = vadd.f32 %v1702, %v1788
  %v1790 = vpop.f32.mrf.mxu0
  %1791 = vdwg.mxu0
  %1792 = vmatprep.subr.mxu0 0.0
  %1793 = vmatpush1.xpose.msra.mxu0 0.0
  %1794 = vmatprep.subr.mxu0 0.0
  %1795 = vmatpush1.xpose.msra.mxu0 0.0
  %1796 = vmatprep.subr.mxu0 0.0
  %1797 = vmatpush1.xpose.msra.mxu0 0.0
  %1798 = vmatprep.subr.mxu0 0.0
  %1799 = vmatpush1.xpose.msra.mxu0 0.0
  %1800 = vmatprep.subr.mxu0 0.0
  %1801 = vmatpush1.xpose.msra.mxu0 0.0
  %1802 = vmatprep.subr.mxu0 0.0
  %1803 = vmatpush1.xpose.msra.mxu0 0.0
  %1804 = vmatprep.subr.mxu0 0.0
  %1805 = vmatpush1.xpose.msra.mxu0 0.0
  %1806 = vmatprep.subr.mxu0 0.0
  %1807 = vmatpush1.xpose.msra.mxu0 0.0
  %1808 = vmatprep.subr.mxu0 0.0
  %1809 = vmatpush1.xpose.msra.mxu0 0.0
  %1810 = vmatprep.subr.mxu0 0.0
  %1811 = vmatpush1.xpose.msra.mxu0 0.0
  %1812 = vmatprep.subr.mxu0 0.0
  %1813 = vmatpush1.xpose.msra.mxu0 0.0
  %1814 = vmatprep.subr.mxu0 0.0
  %1815 = vmatpush1.xpose.msra.mxu0 0.0
  %1816 = vmatprep.subr.mxu0 0.0
  %1817 = vmatpush1.xpose.msra.mxu0 0.0
  %1818 = vmatprep.subr.mxu0 0.0
  %1819 = vmatpush1.xpose.msra.mxu0 0.0
  %1820 = vmatprep.subr.mxu0 0.0
  %v1821 = vand.u32 %v594, 4294901760
  %v1822 = vsub.f32 %v594, %v1821
  %1823 = vmatpush1.xpose.msra.mxu0 %v1822
  %1824 = vmatprep.subr.mxu0 0.0
  %v1825 = vand.u32 %v591, 4294901760
  %v1826 = vsub.f32 %v591, %v1825
  %1827 = vmatpush1.xpose.msra.mxu0 %v1826
  %1828 = vmatprep.subr.mxu0 0.0
  %1829 = vmatpush2.xpose.msra.mxu0 0.0
  %1830 = vmatprep.subr.mxu0 0.0
  %1831 = vmatpush2.xpose.msra.mxu0 0.0
  %1832 = vmatprep.subr.mxu0 0.0
  %1833 = vmatpush2.xpose.msra.mxu0 0.0
  %1834 = vmatprep.subr.mxu0 0.0
  %1835 = vmatpush2.xpose.msra.mxu0 0.0
  %1836 = vmatprep.subr.mxu0 0.0
  %1837 = vmatpush2.xpose.msra.mxu0 0.0
  %1838 = vmatprep.subr.mxu0 0.0
  %1839 = vmatpush2.xpose.msra.mxu0 0.0
  %1840 = vmatprep.subr.mxu0 0.0
  %1841 = vmatpush2.xpose.msra.mxu0 0.0
  %1842 = vmatprep.subr.mxu0 0.0
  %1843 = vmatpush2.xpose.msra.mxu0 0.0
  %1844 = vmatprep.subr.mxu0 0.0
  %1845 = vmatpush2.xpose.msra.mxu0 0.0
  %1846 = vmatprep.subr.mxu0 0.0
  %1847 = vmatpush2.xpose.msra.mxu0 0.0
  %1848 = vmatprep.subr.mxu0 0.0
  %1849 = vmatpush2.xpose.msra.mxu0 0.0
  %1850 = vmatprep.subr.mxu0 0.0
  %1851 = vmatpush2.xpose.msra.mxu0 0.0
  %1852 = vmatprep.subr.mxu0 0.0
  %1853 = vmatpush2.xpose.msra.mxu0 0.0
  %1854 = vmatprep.subr.mxu0 0.0
  %1855 = vmatpush2.xpose.msra.mxu0 0.0
  %1856 = vmatprep.subr.mxu0 0.0
  %1857 = vmatpush2.xpose.msra.mxu0 0.0
  %1858 = vmatprep.subr.mxu0 0.0
  %1859 = vmatpush2.xpose.msra.mxu0 0.0
  %1860 = vmatprep.mubr.f32.mxu0 0.0
  %v1861 = vand.u32 %v1613, 4294901760
  %v1862 = vsub.f32 %v1613, %v1861
  %1863 = vmatmul.mubr.f32.gmra.mxu0 %v1862
  %v1864 = vpop.f32.mrf.mxu0
  %v1865 = vadd.f32 %v1783, %v1864
  %v1866 = vpop.f32.mrf.mxu0
  %1867 = vmatprep.mubr.f32.mxu0 0.0
  %v1868 = vand.u32 %v1616, 4294901760
  %v1869 = vsub.f32 %v1616, %v1868
  %1870 = vmatmul.mubr.f32.gmra.mxu0 %v1869
  %v1871 = vpop.f32.mrf.mxu0
  %v1872 = vadd.f32 %v1789, %v1871
  %v1873 = vpop.f32.mrf.mxu0
  %1874 = vdwg.mxu0
  %1875 = vmatprep.subr.mxu0 0.0
  %1876 = vmatpush1.xpose.msra.mxu0 0.0
  %1877 = vmatprep.subr.mxu0 0.0
  %1878 = vmatpush1.xpose.msra.mxu0 0.0
  %1879 = vmatprep.subr.mxu0 0.0
  %1880 = vmatpush1.xpose.msra.mxu0 0.0
  %1881 = vmatprep.subr.mxu0 0.0
  %1882 = vmatpush1.xpose.msra.mxu0 0.0
  %1883 = vmatprep.subr.mxu0 0.0
  %1884 = vmatpush1.xpose.msra.mxu0 0.0
  %1885 = vmatprep.subr.mxu0 0.0
  %1886 = vmatpush1.xpose.msra.mxu0 0.0
  %1887 = vmatprep.subr.mxu0 0.0
  %1888 = vmatpush1.xpose.msra.mxu0 0.0
  %1889 = vmatprep.subr.mxu0 0.0
  %1890 = vmatpush1.xpose.msra.mxu0 0.0
  %1891 = vmatprep.subr.mxu0 0.0
  %1892 = vmatpush1.xpose.msra.mxu0 0.0
  %1893 = vmatprep.subr.mxu0 0.0
  %1894 = vmatpush1.xpose.msra.mxu0 0.0
  %1895 = vmatprep.subr.mxu0 0.0
  %1896 = vmatpush1.xpose.msra.mxu0 0.0
  %1897 = vmatprep.subr.mxu0 0.0
  %1898 = vmatpush1.xpose.msra.mxu0 0.0
  %1899 = vmatprep.subr.mxu0 0.0
  %1900 = vmatpush1.xpose.msra.mxu0 0.0
  %1901 = vmatprep.subr.mxu0 0.0
  %1902 = vmatpush1.xpose.msra.mxu0 0.0
  %1903 = vmatprep.subr.mxu0 0.0
  %v1904 = vand.u32 %v594, 4294901760
  %1905 = vmatpush1.xpose.msra.mxu0 %v1904
  %1906 = vmatprep.subr.mxu0 0.0
  %v1907 = vand.u32 %v591, 4294901760
  %1908 = vmatpush1.xpose.msra.mxu0 %v1907
  %1909 = vmatprep.subr.mxu0 0.0
  %1910 = vmatpush2.xpose.msra.mxu0 0.0
  %1911 = vmatprep.subr.mxu0 0.0
  %1912 = vmatpush2.xpose.msra.mxu0 0.0
  %1913 = vmatprep.subr.mxu0 0.0
  %1914 = vmatpush2.xpose.msra.mxu0 0.0
  %1915 = vmatprep.subr.mxu0 0.0
  %1916 = vmatpush2.xpose.msra.mxu0 0.0
  %1917 = vmatprep.subr.mxu0 0.0
  %1918 = vmatpush2.xpose.msra.mxu0 0.0
  %1919 = vmatprep.subr.mxu0 0.0
  %1920 = vmatpush2.xpose.msra.mxu0 0.0
  %1921 = vmatprep.subr.mxu0 0.0
  %1922 = vmatpush2.xpose.msra.mxu0 0.0
  %1923 = vmatprep.subr.mxu0 0.0
  %1924 = vmatpush2.xpose.msra.mxu0 0.0
  %1925 = vmatprep.subr.mxu0 0.0
  %1926 = vmatpush2.xpose.msra.mxu0 0.0
  %1927 = vmatprep.subr.mxu0 0.0
  %1928 = vmatpush2.xpose.msra.mxu0 0.0
  %1929 = vmatprep.subr.mxu0 0.0
  %1930 = vmatpush2.xpose.msra.mxu0 0.0
  %1931 = vmatprep.subr.mxu0 0.0
  %1932 = vmatpush2.xpose.msra.mxu0 0.0
  %1933 = vmatprep.subr.mxu0 0.0
  %1934 = vmatpush2.xpose.msra.mxu0 0.0
  %1935 = vmatprep.subr.mxu0 0.0
  %1936 = vmatpush2.xpose.msra.mxu0 0.0
  %1937 = vmatprep.subr.mxu0 0.0
  %1938 = vmatpush2.xpose.msra.mxu0 0.0
  %1939 = vmatprep.subr.mxu0 0.0
  %1940 = vmatpush2.xpose.msra.mxu0 0.0
  %1941 = vmatprep.mubr.f32.mxu0 0.0
  %v1942 = vand.u32 %v1613, 4294901760
  %v1943 = vsub.f32 %v1613, %v1942
  %v1944 = vand.u32 %v1943, 4294901760
  %1945 = vmatmul.mubr.f32.gmra.mxu0 %v1944
  %v1946 = vpop.f32.mrf.mxu0
  %v1947 = vadd.f32 %v1865, %v1946
  %v1948 = vpop.f32.mrf.mxu0
  %1949 = vmatprep.mubr.f32.mxu0 0.0
  %v1950 = vand.u32 %v1616, 4294901760
  %v1951 = vsub.f32 %v1616, %v1950
  %v1952 = vand.u32 %v1951, 4294901760
  %1953 = vmatmul.mubr.f32.gmra.mxu0 %v1952
  %v1954 = vpop.f32.mrf.mxu0
  %v1955 = vadd.f32 %v1872, %v1954
  %v1956 = vpop.f32.mrf.mxu0
  %1957 = vdwg.mxu0
  %1958 = vmatprep.subr.mxu0 0.0
  %1959 = vmatpush1.xpose.msra.mxu0 0.0
  %1960 = vmatprep.subr.mxu0 0.0
  %1961 = vmatpush1.xpose.msra.mxu0 0.0
  %1962 = vmatprep.subr.mxu0 0.0
  %1963 = vmatpush1.xpose.msra.mxu0 0.0
  %1964 = vmatprep.subr.mxu0 0.0
  %1965 = vmatpush1.xpose.msra.mxu0 0.0
  %1966 = vmatprep.subr.mxu0 0.0
  %1967 = vmatpush1.xpose.msra.mxu0 0.0
  %1968 = vmatprep.subr.mxu0 0.0
  %1969 = vmatpush1.xpose.msra.mxu0 0.0
  %1970 = vmatprep.subr.mxu0 0.0
  %1971 = vmatpush1.xpose.msra.mxu0 0.0
  %1972 = vmatprep.subr.mxu0 0.0
  %1973 = vmatpush1.xpose.msra.mxu0 0.0
  %1974 = vmatprep.subr.mxu0 0.0
  %1975 = vmatpush1.xpose.msra.mxu0 0.0
  %1976 = vmatprep.subr.mxu0 0.0
  %1977 = vmatpush1.xpose.msra.mxu0 0.0
  %1978 = vmatprep.subr.mxu0 0.0
  %1979 = vmatpush1.xpose.msra.mxu0 0.0
  %1980 = vmatprep.subr.mxu0 0.0
  %1981 = vmatpush1.xpose.msra.mxu0 0.0
  %1982 = vmatprep.subr.mxu0 0.0
  %1983 = vmatpush1.xpose.msra.mxu0 0.0
  %1984 = vmatprep.subr.mxu0 0.0
  %1985 = vmatpush1.xpose.msra.mxu0 0.0
  %1986 = vmatprep.subr.mxu0 0.0
  %v1987 = vand.u32 %v594, 4294901760
  %v1988 = vsub.f32 %v594, %v1987
  %v1989 = vand.u32 %v1988, 4294901760
  %1990 = vmatpush1.xpose.msra.mxu0 %v1989
  %1991 = vmatprep.subr.mxu0 0.0
  %v1992 = vand.u32 %v591, 4294901760
  %v1993 = vsub.f32 %v591, %v1992
  %v1994 = vand.u32 %v1993, 4294901760
  %1995 = vmatpush1.xpose.msra.mxu0 %v1994
  %1996 = vmatprep.subr.mxu0 0.0
  %1997 = vmatpush2.xpose.msra.mxu0 0.0
  %1998 = vmatprep.subr.mxu0 0.0
  %1999 = vmatpush2.xpose.msra.mxu0 0.0
  %2000 = vmatprep.subr.mxu0 0.0
  %2001 = vmatpush2.xpose.msra.mxu0 0.0
  %2002 = vmatprep.subr.mxu0 0.0
  %2003 = vmatpush2.xpose.msra.mxu0 0.0
  %2004 = vmatprep.subr.mxu0 0.0
  %2005 = vmatpush2.xpose.msra.mxu0 0.0
  %2006 = vmatprep.subr.mxu0 0.0
  %2007 = vmatpush2.xpose.msra.mxu0 0.0
  %2008 = vmatprep.subr.mxu0 0.0
  %2009 = vmatpush2.xpose.msra.mxu0 0.0
  %2010 = vmatprep.subr.mxu0 0.0
  %2011 = vmatpush2.xpose.msra.mxu0 0.0
  %2012 = vmatprep.subr.mxu0 0.0
  %2013 = vmatpush2.xpose.msra.mxu0 0.0
  %2014 = vmatprep.subr.mxu0 0.0
  %2015 = vmatpush2.xpose.msra.mxu0 0.0
  %2016 = vmatprep.subr.mxu0 0.0
  %2017 = vmatpush2.xpose.msra.mxu0 0.0
  %2018 = vmatprep.subr.mxu0 0.0
  %2019 = vmatpush2.xpose.msra.mxu0 0.0
  %2020 = vmatprep.subr.mxu0 0.0
  %2021 = vmatpush2.xpose.msra.mxu0 0.0
  %2022 = vmatprep.subr.mxu0 0.0
  %2023 = vmatpush2.xpose.msra.mxu0 0.0
  %2024 = vmatprep.subr.mxu0 0.0
  %2025 = vmatpush2.xpose.msra.mxu0 0.0
  %2026 = vmatprep.subr.mxu0 0.0
  %2027 = vmatpush2.xpose.msra.mxu0 0.0
  %2028 = vmatprep.mubr.f32.mxu0 0.0
  %v2029 = vand.u32 %v1613, 4294901760
  %2030 = vmatmul.mubr.f32.gmra.mxu0 %v2029
  %v2031 = vpop.f32.mrf.mxu0
  %v2032 = vadd.f32 %v1947, %v2031
  %v2033 = vpop.f32.mrf.mxu0
  %2034 = vmatprep.mubr.f32.mxu0 0.0
  %v2035 = vand.u32 %v1616, 4294901760
  %2036 = vmatmul.mubr.f32.gmra.mxu0 %v2035
  %v2037 = vpop.f32.mrf.mxu0
  %v2038 = vadd.f32 %v1955, %v2037
  %v2039 = vpop.f32.mrf.mxu0
  %2040 = vdwg.mxu0
  %2041 = vmatprep.subr.mxu0 0.0
  %2042 = vmatpush1.xpose.msra.mxu0 0.0
  %2043 = vmatprep.subr.mxu0 0.0
  %2044 = vmatpush1.xpose.msra.mxu0 0.0
  %2045 = vmatprep.subr.mxu0 0.0
  %2046 = vmatpush1.xpose.msra.mxu0 0.0
  %2047 = vmatprep.subr.mxu0 0.0
  %2048 = vmatpush1.xpose.msra.mxu0 0.0
  %2049 = vmatprep.subr.mxu0 0.0
  %2050 = vmatpush1.xpose.msra.mxu0 0.0
  %2051 = vmatprep.subr.mxu0 0.0
  %2052 = vmatpush1.xpose.msra.mxu0 0.0
  %2053 = vmatprep.subr.mxu0 0.0
  %2054 = vmatpush1.xpose.msra.mxu0 0.0
  %2055 = vmatprep.subr.mxu0 0.0
  %2056 = vmatpush1.xpose.msra.mxu0 0.0
  %2057 = vmatprep.subr.mxu0 0.0
  %2058 = vmatpush1.xpose.msra.mxu0 0.0
  %2059 = vmatprep.subr.mxu0 0.0
  %2060 = vmatpush1.xpose.msra.mxu0 0.0
  %2061 = vmatprep.subr.mxu0 0.0
  %2062 = vmatpush1.xpose.msra.mxu0 0.0
  %2063 = vmatprep.subr.mxu0 0.0
  %2064 = vmatpush1.xpose.msra.mxu0 0.0
  %2065 = vmatprep.subr.mxu0 0.0
  %2066 = vmatpush1.xpose.msra.mxu0 0.0
  %2067 = vmatprep.subr.mxu0 0.0
  %2068 = vmatpush1.xpose.msra.mxu0 0.0
  %2069 = vmatprep.subr.mxu0 0.0
  %v2070 = vand.u32 %v594, 4294901760
  %2071 = vmatpush1.xpose.msra.mxu0 %v2070
  %2072 = vmatprep.subr.mxu0 0.0
  %v2073 = vand.u32 %v591, 4294901760
  %2074 = vmatpush1.xpose.msra.mxu0 %v2073
  %2075 = vmatprep.subr.mxu0 0.0
  %2076 = vmatpush2.xpose.msra.mxu0 0.0
  %2077 = vmatprep.subr.mxu0 0.0
  %2078 = vmatpush2.xpose.msra.mxu0 0.0
  %2079 = vmatprep.subr.mxu0 0.0
  %2080 = vmatpush2.xpose.msra.mxu0 0.0
  %2081 = vmatprep.subr.mxu0 0.0
  %2082 = vmatpush2.xpose.msra.mxu0 0.0
  %2083 = vmatprep.subr.mxu0 0.0
  %2084 = vmatpush2.xpose.msra.mxu0 0.0
  %2085 = vmatprep.subr.mxu0 0.0
  %2086 = vmatpush2.xpose.msra.mxu0 0.0
  %2087 = vmatprep.subr.mxu0 0.0
  %2088 = vmatpush2.xpose.msra.mxu0 0.0
  %2089 = vmatprep.subr.mxu0 0.0
  %2090 = vmatpush2.xpose.msra.mxu0 0.0
  %2091 = vmatprep.subr.mxu0 0.0
  %2092 = vmatpush2.xpose.msra.mxu0 0.0
  %2093 = vmatprep.subr.mxu0 0.0
  %2094 = vmatpush2.xpose.msra.mxu0 0.0
  %2095 = vmatprep.subr.mxu0 0.0
  %2096 = vmatpush2.xpose.msra.mxu0 0.0
  %2097 = vmatprep.subr.mxu0 0.0
  %2098 = vmatpush2.xpose.msra.mxu0 0.0
  %2099 = vmatprep.subr.mxu0 0.0
  %2100 = vmatpush2.xpose.msra.mxu0 0.0
  %2101 = vmatprep.subr.mxu0 0.0
  %2102 = vmatpush2.xpose.msra.mxu0 0.0
  %2103 = vmatprep.subr.mxu0 0.0
  %2104 = vmatpush2.xpose.msra.mxu0 0.0
  %2105 = vmatprep.subr.mxu0 0.0
  %2106 = vmatpush2.xpose.msra.mxu0 0.0
  %2107 = vmatprep.mubr.f32.mxu0 0.0
  %v2108 = vand.u32 %v1613, 4294901760
  %2109 = vmatmul.mubr.f32.gmra.mxu0 %v2108
  %v2110 = vpop.f32.mrf.mxu0
  %v2111 = vadd.f32 %v2032, %v2110
  %v2112 = vpop.f32.mrf.mxu0
  %2113 = vmatprep.mubr.f32.mxu0 0.0
  %v2114 = vand.u32 %v1616, 4294901760
  %2115 = vmatmul.mubr.f32.gmra.mxu0 %v2114
  %v2116 = vpop.f32.mrf.mxu0
  %v2117 = vadd.f32 %v2038, %v2116
  %v2118 = vpop.f32.mrf.mxu0
  %2119 = vdwg.mxu0
  %v2120 = vlaneseq
  %v2121 = vshrl.u32 %v2120, 7
  %v2122 = vsub.s32 0, %v2121
  %v2123 = vrot.slane %v25, %v2122
  %2124 = vset.pattern.permute.xlu0 1
  %2125 = vperm.xlu0 %2124, %v2123
  %v2126 = vpop.permute.xlu0 %2125
  %v2128 = vadd.f32 %v2111, %v2126
  %v2129 = vadd.f32 %v2117, %v2126
  %vm2130 = vcmp.gt.f32.partialorder %v1603, 0.5
  %vm2131 = vcmp.gt.f32.partialorder %v1609, 0.5
  %v2132 = vsel %vm2130, %v2128, -100000.0
  %v2133 = vsel %vm2131, %v2129, -100000.0
  %vm2134 = vcmask 113664
  %v2135 = vsel %vm2134, %v2132, -inf
  %2136 = vmax.xlane.f32.xlu0 %v2135
  %v2137 = vpop.xlane.xlu0 %2136
  %vm2138 = vcmask 111616
  %v2139 = vsel %vm2138, %v2133, -inf
  %2140 = vmax.xlane.f32.xlu0 %v2139
  %v2141 = vpop.xlane.xlu0 %2140
  %v2142 = vsub.f32 %v2132, %v2137
  %v2143 = vsub.f32 %v2133, %v2141
  %v2144 = vmul.f32 %v2142, 1.442695
  %v2145 = vpow.pop %v2144
  %v2146 = vmul.f32 %v2143, 1.442695
  %v2147 = vpow.pop %v2146
  %v2148 = vsel %vm2134, %v2145, 0.0
  %2149 = vadd.xlane.f32.xlu0 %v2148
  %v2150 = vpop.xlane.xlu0 %2149
  %v2151 = vsel %vm2138, %v2147, 0.0
  %2152 = vadd.xlane.f32.xlu0 %v2151
  %v2153 = vpop.xlane.xlu0 %2152
  %v2154 = vrcp.pop %v2150
  %v2155 = vrcp.pop %v2153
  %v2156 = vmul.f32 %v2145, %v2154
  %v2157 = vmul.f32 %v2147, %v2155
  %2158 = vst.msk [vmem:[%s5] sm:$0xff] %vm2134, %v2156
  %2159 = vst.msk [vmem:[%s5 + $0x8] sm:$0x3f] %vm2138, %v2157
  %s2160 = scalar_lea.vmem %s1, 28
  %v2161 = vld [vmem:[%s2160] sm:$0xf]
  %v2162 = vld [vmem:[%s2160 + $0x4] sm:$0xf]
  %v2163 = vld [vmem:[%s2160 + $0x8] sm:$0xf]
  %v2164 = vld [vmem:[%s2160 + $0xc] sm:$0xf]
  %v2165 = vld [vmem:[%s2160 + $0x10] sm:$0xf]
  %v2166 = vld [vmem:[%s2160 + $0x14] sm:$0xf]
  %v2167 = vld [vmem:[%s2160 + $0x18] sm:$0xf]
  %s2168 = scalar_lea.vmem %s0, 16
  %v2169 = vld [vmem:[%s2168] sm:$0xff]
  %v2170 = vld [vmem:[%s2168 + $0x8] sm:$0xff]
  %v2178 = vunpack.c.l.b16 %v2161
  %v2179 = vunpack.c.l.b16 %v2162
  %v2180 = vunpack.c.l.b16 %v2163
  %v2181 = vunpack.c.l.b16 %v2164
  %v2182 = vunpack.c.l.b16 %v2165
  %v2183 = vunpack.c.l.b16 %v2166
  %v2184 = vunpack.c.l.b16 %v2167
  %v2185 = vpack.c.b16 %v2179, %v2178
  %v2186 = vpack.c.b16 %v2181, %v2180
  %v2187 = vpack.c.b16 %v2183, %v2182
  %v2188 = vpack.c.b16 %v2184, %v2184
  %v2193 = vsel %vm60, %v2188, 0
  %2195 = vmatprep.subr.bf16.mxu0 0
  %2196 = vmatpush1.bf16.msra.mxu0 0
  %2197 = vmatprep.subr.bf16.mxu0 0
  %2198 = vmatpush1.bf16.msra.mxu0 0
  %2199 = vmatprep.subr.bf16.mxu0 0
  %2200 = vmatpush1.bf16.msra.mxu0 0
  %2201 = vmatprep.subr.bf16.mxu0 0
  %2202 = vmatpush1.bf16.msra.mxu0 0
  %2203 = vmatprep.subr.bf16.mxu0 0
  %2204 = vmatpush1.bf16.msra.mxu0 %v2193
  %2205 = vmatprep.subr.bf16.mxu0 0
  %2206 = vmatpush1.bf16.msra.mxu0 %v2187
  %2207 = vmatprep.subr.bf16.mxu0 0
  %2208 = vmatpush1.bf16.msra.mxu0 %v2186
  %2209 = vmatprep.subr.bf16.mxu0 0
  %2210 = vmatpush1.bf16.msra.mxu0 %v2185
  %2211 = vmatprep.subr.bf16.mxu0 0
  %2212 = vmatpush2.bf16.msra.mxu0 0
  %2213 = vmatprep.subr.bf16.mxu0 0
  %2214 = vmatpush2.bf16.msra.mxu0 0
  %2215 = vmatprep.subr.bf16.mxu0 0
  %2216 = vmatpush2.bf16.msra.mxu0 0
  %2217 = vmatprep.subr.bf16.mxu0 0
  %2218 = vmatpush2.bf16.msra.mxu0 0
  %2219 = vmatprep.subr.bf16.mxu0 0
  %2220 = vmatpush2.bf16.msra.mxu0 0
  %2221 = vmatprep.subr.bf16.mxu0 0
  %2222 = vmatpush2.bf16.msra.mxu0 0
  %2223 = vmatprep.subr.bf16.mxu0 0
  %2224 = vmatpush2.bf16.msra.mxu0 0
  %2225 = vmatprep.subr.bf16.mxu0 0
  %2226 = vmatpush2.bf16.msra.mxu0 0
  %2227 = vmatprep.mubr.bf16.mxu0 0
  %2228 = vmatmul.mubr.bf16.gmra.mxu0 %v58
  %v2229 = vpop.f32.mrf.mxu0
  %v2230 = vadd.f32 0.0, %v2229
  %v2231 = vpop.f32.mrf.mxu0
  %v2232 = vpop.f32.mrf.mxu0
  %v2233 = vadd.f32 0.0, %v2232
  %v2234 = vpop.f32.mrf.mxu0
  %2235 = vdwg.mxu0
  %2236 = vmatprep.subr.mxu0 0.0
  %2237 = vmatpush1.msra.mxu0 0.0
  %2238 = vmatprep.subr.mxu0 0.0
  %2239 = vmatpush1.msra.mxu0 0.0
  %2240 = vmatprep.subr.mxu0 0.0
  %2241 = vmatpush1.msra.mxu0 0.0
  %2242 = vmatprep.subr.mxu0 0.0
  %2243 = vmatpush1.msra.mxu0 0.0
  %2244 = vmatprep.subr.mxu0 0.0
  %2245 = vmatpush1.msra.mxu0 0.0
  %2246 = vmatprep.subr.mxu0 0.0
  %2247 = vmatpush1.msra.mxu0 0.0
  %2248 = vmatprep.subr.mxu0 0.0
  %2249 = vmatpush1.msra.mxu0 0.0
  %2250 = vmatprep.subr.mxu0 0.0
  %2251 = vmatpush1.msra.mxu0 0.0
  %2252 = vmatprep.subr.mxu0 0.0
  %2253 = vmatpush1.msra.mxu0 0.0
  %2254 = vmatprep.subr.mxu0 0.0
  %2255 = vmatpush1.msra.mxu0 0.0
  %2256 = vmatprep.subr.mxu0 0.0
  %2257 = vmatpush1.msra.mxu0 0.0
  %2258 = vmatprep.subr.mxu0 0.0
  %2259 = vmatpush1.msra.mxu0 0.0
  %2260 = vmatprep.subr.mxu0 0.0
  %2261 = vmatpush1.msra.mxu0 0.0
  %2262 = vmatprep.subr.mxu0 0.0
  %2263 = vmatpush1.msra.mxu0 0.0
  %2264 = vmatprep.subr.mxu0 0.0
  %v2265 = vand.u32 %v2170, 4294901760
  %2266 = vmatpush1.msra.mxu0 %v2265
  %2267 = vmatprep.subr.mxu0 0.0
  %v2268 = vand.u32 %v2169, 4294901760
  %2269 = vmatpush1.msra.mxu0 %v2268
  %2270 = vmatprep.subr.mxu0 0.0
  %2271 = vmatpush2.msra.mxu0 0.0
  %2272 = vmatprep.subr.mxu0 0.0
  %2273 = vmatpush2.msra.mxu0 0.0
  %2274 = vmatprep.subr.mxu0 0.0
  %2275 = vmatpush2.msra.mxu0 0.0
  %2276 = vmatprep.subr.mxu0 0.0
  %2277 = vmatpush2.msra.mxu0 0.0
  %2278 = vmatprep.subr.mxu0 0.0
  %2279 = vmatpush2.msra.mxu0 0.0
  %2280 = vmatprep.subr.mxu0 0.0
  %2281 = vmatpush2.msra.mxu0 0.0
  %2282 = vmatprep.subr.mxu0 0.0
  %2283 = vmatpush2.msra.mxu0 0.0
  %2284 = vmatprep.subr.mxu0 0.0
  %2285 = vmatpush2.msra.mxu0 0.0
  %2286 = vmatprep.subr.mxu0 0.0
  %2287 = vmatpush2.msra.mxu0 0.0
  %2288 = vmatprep.subr.mxu0 0.0
  %2289 = vmatpush2.msra.mxu0 0.0
  %2290 = vmatprep.subr.mxu0 0.0
  %2291 = vmatpush2.msra.mxu0 0.0
  %2292 = vmatprep.subr.mxu0 0.0
  %2293 = vmatpush2.msra.mxu0 0.0
  %2294 = vmatprep.subr.mxu0 0.0
  %2295 = vmatpush2.msra.mxu0 0.0
  %2296 = vmatprep.subr.mxu0 0.0
  %2297 = vmatpush2.msra.mxu0 0.0
  %2298 = vmatprep.subr.mxu0 0.0
  %2299 = vmatpush2.msra.mxu0 0.0
  %2300 = vmatprep.subr.mxu0 0.0
  %2301 = vmatpush2.msra.mxu0 0.0
  %2302 = vmatprep.mubr.f32.mxu0 0.0
  %v2303 = vand.u32 %v107, 4294901760
  %v2304 = vsub.f32 %v107, %v2303
  %v2305 = vand.u32 %v2304, 4294901760
  %v2306 = vsub.f32 %v2304, %v2305
  %v2307 = vand.u32 %v2306, 4294901760
  %2308 = vmatmul.mubr.f32.gmra.mxu0 %v2307
  %v2309 = vpop.f32.mrf.mxu0
  %v2310 = vadd.f32 0.0, %v2309
  %v2311 = vpop.f32.mrf.mxu0
  %2312 = vdwg.mxu0
  %2313 = vmatprep.subr.mxu0 0.0
  %2314 = vmatpush1.msra.mxu0 0.0
  %2315 = vmatprep.subr.mxu0 0.0
  %2316 = vmatpush1.msra.mxu0 0.0
  %2317 = vmatprep.subr.mxu0 0.0
  %2318 = vmatpush1.msra.mxu0 0.0
  %2319 = vmatprep.subr.mxu0 0.0
  %2320 = vmatpush1.msra.mxu0 0.0
  %2321 = vmatprep.subr.mxu0 0.0
  %2322 = vmatpush1.msra.mxu0 0.0
  %2323 = vmatprep.subr.mxu0 0.0
  %2324 = vmatpush1.msra.mxu0 0.0
  %2325 = vmatprep.subr.mxu0 0.0
  %2326 = vmatpush1.msra.mxu0 0.0
  %2327 = vmatprep.subr.mxu0 0.0
  %2328 = vmatpush1.msra.mxu0 0.0
  %2329 = vmatprep.subr.mxu0 0.0
  %2330 = vmatpush1.msra.mxu0 0.0
  %2331 = vmatprep.subr.mxu0 0.0
  %2332 = vmatpush1.msra.mxu0 0.0
  %2333 = vmatprep.subr.mxu0 0.0
  %2334 = vmatpush1.msra.mxu0 0.0
  %2335 = vmatprep.subr.mxu0 0.0
  %2336 = vmatpush1.msra.mxu0 0.0
  %2337 = vmatprep.subr.mxu0 0.0
  %2338 = vmatpush1.msra.mxu0 0.0
  %2339 = vmatprep.subr.mxu0 0.0
  %2340 = vmatpush1.msra.mxu0 0.0
  %2341 = vmatprep.subr.mxu0 0.0
  %v2342 = vand.u32 %v2170, 4294901760
  %v2343 = vsub.f32 %v2170, %v2342
  %v2344 = vand.u32 %v2343, 4294901760
  %v2345 = vsub.f32 %v2343, %v2344
  %v2346 = vand.u32 %v2345, 4294901760
  %2347 = vmatpush1.msra.mxu0 %v2346
  %2348 = vmatprep.subr.mxu0 0.0
  %v2349 = vand.u32 %v2169, 4294901760
  %v2350 = vsub.f32 %v2169, %v2349
  %v2351 = vand.u32 %v2350, 4294901760
  %v2352 = vsub.f32 %v2350, %v2351
  %v2353 = vand.u32 %v2352, 4294901760
  %2354 = vmatpush1.msra.mxu0 %v2353
  %2355 = vmatprep.subr.mxu0 0.0
  %2356 = vmatpush2.msra.mxu0 0.0
  %2357 = vmatprep.subr.mxu0 0.0
  %2358 = vmatpush2.msra.mxu0 0.0
  %2359 = vmatprep.subr.mxu0 0.0
  %2360 = vmatpush2.msra.mxu0 0.0
  %2361 = vmatprep.subr.mxu0 0.0
  %2362 = vmatpush2.msra.mxu0 0.0
  %2363 = vmatprep.subr.mxu0 0.0
  %2364 = vmatpush2.msra.mxu0 0.0
  %2365 = vmatprep.subr.mxu0 0.0
  %2366 = vmatpush2.msra.mxu0 0.0
  %2367 = vmatprep.subr.mxu0 0.0
  %2368 = vmatpush2.msra.mxu0 0.0
  %2369 = vmatprep.subr.mxu0 0.0
  %2370 = vmatpush2.msra.mxu0 0.0
  %2371 = vmatprep.subr.mxu0 0.0
  %2372 = vmatpush2.msra.mxu0 0.0
  %2373 = vmatprep.subr.mxu0 0.0
  %2374 = vmatpush2.msra.mxu0 0.0
  %2375 = vmatprep.subr.mxu0 0.0
  %2376 = vmatpush2.msra.mxu0 0.0
  %2377 = vmatprep.subr.mxu0 0.0
  %2378 = vmatpush2.msra.mxu0 0.0
  %2379 = vmatprep.subr.mxu0 0.0
  %2380 = vmatpush2.msra.mxu0 0.0
  %2381 = vmatprep.subr.mxu0 0.0
  %2382 = vmatpush2.msra.mxu0 0.0
  %2383 = vmatprep.subr.mxu0 0.0
  %2384 = vmatpush2.msra.mxu0 0.0
  %2385 = vmatprep.subr.mxu0 0.0
  %2386 = vmatpush2.msra.mxu0 0.0
  %2387 = vmatprep.mubr.f32.mxu0 0.0
  %v2388 = vand.u32 %v107, 4294901760
  %2389 = vmatmul.mubr.f32.gmra.mxu0 %v2388
  %v2390 = vpop.f32.mrf.mxu0
  %v2391 = vadd.f32 %v2310, %v2390
  %v2392 = vpop.f32.mrf.mxu0
  %2393 = vdwg.mxu0
  %2394 = vmatprep.subr.mxu0 0.0
  %2395 = vmatpush1.msra.mxu0 0.0
  %2396 = vmatprep.subr.mxu0 0.0
  %2397 = vmatpush1.msra.mxu0 0.0
  %2398 = vmatprep.subr.mxu0 0.0
  %2399 = vmatpush1.msra.mxu0 0.0
  %2400 = vmatprep.subr.mxu0 0.0
  %2401 = vmatpush1.msra.mxu0 0.0
  %2402 = vmatprep.subr.mxu0 0.0
  %2403 = vmatpush1.msra.mxu0 0.0
  %2404 = vmatprep.subr.mxu0 0.0
  %2405 = vmatpush1.msra.mxu0 0.0
  %2406 = vmatprep.subr.mxu0 0.0
  %2407 = vmatpush1.msra.mxu0 0.0
  %2408 = vmatprep.subr.mxu0 0.0
  %2409 = vmatpush1.msra.mxu0 0.0
  %2410 = vmatprep.subr.mxu0 0.0
  %2411 = vmatpush1.msra.mxu0 0.0
  %2412 = vmatprep.subr.mxu0 0.0
  %2413 = vmatpush1.msra.mxu0 0.0
  %2414 = vmatprep.subr.mxu0 0.0
  %2415 = vmatpush1.msra.mxu0 0.0
  %2416 = vmatprep.subr.mxu0 0.0
  %2417 = vmatpush1.msra.mxu0 0.0
  %2418 = vmatprep.subr.mxu0 0.0
  %2419 = vmatpush1.msra.mxu0 0.0
  %2420 = vmatprep.subr.mxu0 0.0
  %2421 = vmatpush1.msra.mxu0 0.0
  %2422 = vmatprep.subr.mxu0 0.0
  %v2423 = vand.u32 %v2170, 4294901760
  %v2424 = vsub.f32 %v2170, %v2423
  %2425 = vmatpush1.msra.mxu0 %v2424
  %2426 = vmatprep.subr.mxu0 0.0
  %v2427 = vand.u32 %v2169, 4294901760
  %v2428 = vsub.f32 %v2169, %v2427
  %2429 = vmatpush1.msra.mxu0 %v2428
  %2430 = vmatprep.subr.mxu0 0.0
  %2431 = vmatpush2.msra.mxu0 0.0
  %2432 = vmatprep.subr.mxu0 0.0
  %2433 = vmatpush2.msra.mxu0 0.0
  %2434 = vmatprep.subr.mxu0 0.0
  %2435 = vmatpush2.msra.mxu0 0.0
  %2436 = vmatprep.subr.mxu0 0.0
  %2437 = vmatpush2.msra.mxu0 0.0
  %2438 = vmatprep.subr.mxu0 0.0
  %2439 = vmatpush2.msra.mxu0 0.0
  %2440 = vmatprep.subr.mxu0 0.0
  %2441 = vmatpush2.msra.mxu0 0.0
  %2442 = vmatprep.subr.mxu0 0.0
  %2443 = vmatpush2.msra.mxu0 0.0
  %2444 = vmatprep.subr.mxu0 0.0
  %2445 = vmatpush2.msra.mxu0 0.0
  %2446 = vmatprep.subr.mxu0 0.0
  %2447 = vmatpush2.msra.mxu0 0.0
  %2448 = vmatprep.subr.mxu0 0.0
  %2449 = vmatpush2.msra.mxu0 0.0
  %2450 = vmatprep.subr.mxu0 0.0
  %2451 = vmatpush2.msra.mxu0 0.0
  %2452 = vmatprep.subr.mxu0 0.0
  %2453 = vmatpush2.msra.mxu0 0.0
  %2454 = vmatprep.subr.mxu0 0.0
  %2455 = vmatpush2.msra.mxu0 0.0
  %2456 = vmatprep.subr.mxu0 0.0
  %2457 = vmatpush2.msra.mxu0 0.0
  %2458 = vmatprep.subr.mxu0 0.0
  %2459 = vmatpush2.msra.mxu0 0.0
  %2460 = vmatprep.subr.mxu0 0.0
  %2461 = vmatpush2.msra.mxu0 0.0
  %2462 = vmatprep.mubr.f32.mxu0 0.0
  %v2463 = vand.u32 %v107, 4294901760
  %v2464 = vsub.f32 %v107, %v2463
  %2465 = vmatmul.mubr.f32.gmra.mxu0 %v2464
  %v2466 = vpop.f32.mrf.mxu0
  %v2467 = vadd.f32 %v2391, %v2466
  %v2468 = vpop.f32.mrf.mxu0
  %2469 = vdwg.mxu0
  %2470 = vmatprep.subr.mxu0 0.0
  %2471 = vmatpush1.msra.mxu0 0.0
  %2472 = vmatprep.subr.mxu0 0.0
  %2473 = vmatpush1.msra.mxu0 0.0
  %2474 = vmatprep.subr.mxu0 0.0
  %2475 = vmatpush1.msra.mxu0 0.0
  %2476 = vmatprep.subr.mxu0 0.0
  %2477 = vmatpush1.msra.mxu0 0.0
  %2478 = vmatprep.subr.mxu0 0.0
  %2479 = vmatpush1.msra.mxu0 0.0
  %2480 = vmatprep.subr.mxu0 0.0
  %2481 = vmatpush1.msra.mxu0 0.0
  %2482 = vmatprep.subr.mxu0 0.0
  %2483 = vmatpush1.msra.mxu0 0.0
  %2484 = vmatprep.subr.mxu0 0.0
  %2485 = vmatpush1.msra.mxu0 0.0
  %2486 = vmatprep.subr.mxu0 0.0
  %2487 = vmatpush1.msra.mxu0 0.0
  %2488 = vmatprep.subr.mxu0 0.0
  %2489 = vmatpush1.msra.mxu0 0.0
  %2490 = vmatprep.subr.mxu0 0.0
  %2491 = vmatpush1.msra.mxu0 0.0
  %2492 = vmatprep.subr.mxu0 0.0
  %2493 = vmatpush1.msra.mxu0 0.0
  %2494 = vmatprep.subr.mxu0 0.0
  %2495 = vmatpush1.msra.mxu0 0.0
  %2496 = vmatprep.subr.mxu0 0.0
  %2497 = vmatpush1.msra.mxu0 0.0
  %2498 = vmatprep.subr.mxu0 0.0
  %v2499 = vand.u32 %v2170, 4294901760
  %2500 = vmatpush1.msra.mxu0 %v2499
  %2501 = vmatprep.subr.mxu0 0.0
  %v2502 = vand.u32 %v2169, 4294901760
  %2503 = vmatpush1.msra.mxu0 %v2502
  %2504 = vmatprep.subr.mxu0 0.0
  %2505 = vmatpush2.msra.mxu0 0.0
  %2506 = vmatprep.subr.mxu0 0.0
  %2507 = vmatpush2.msra.mxu0 0.0
  %2508 = vmatprep.subr.mxu0 0.0
  %2509 = vmatpush2.msra.mxu0 0.0
  %2510 = vmatprep.subr.mxu0 0.0
  %2511 = vmatpush2.msra.mxu0 0.0
  %2512 = vmatprep.subr.mxu0 0.0
  %2513 = vmatpush2.msra.mxu0 0.0
  %2514 = vmatprep.subr.mxu0 0.0
  %2515 = vmatpush2.msra.mxu0 0.0
  %2516 = vmatprep.subr.mxu0 0.0
  %2517 = vmatpush2.msra.mxu0 0.0
  %2518 = vmatprep.subr.mxu0 0.0
  %2519 = vmatpush2.msra.mxu0 0.0
  %2520 = vmatprep.subr.mxu0 0.0
  %2521 = vmatpush2.msra.mxu0 0.0
  %2522 = vmatprep.subr.mxu0 0.0
  %2523 = vmatpush2.msra.mxu0 0.0
  %2524 = vmatprep.subr.mxu0 0.0
  %2525 = vmatpush2.msra.mxu0 0.0
  %2526 = vmatprep.subr.mxu0 0.0
  %2527 = vmatpush2.msra.mxu0 0.0
  %2528 = vmatprep.subr.mxu0 0.0
  %2529 = vmatpush2.msra.mxu0 0.0
  %2530 = vmatprep.subr.mxu0 0.0
  %2531 = vmatpush2.msra.mxu0 0.0
  %2532 = vmatprep.subr.mxu0 0.0
  %2533 = vmatpush2.msra.mxu0 0.0
  %2534 = vmatprep.subr.mxu0 0.0
  %2535 = vmatpush2.msra.mxu0 0.0
  %2536 = vmatprep.mubr.f32.mxu0 0.0
  %v2537 = vand.u32 %v107, 4294901760
  %v2538 = vsub.f32 %v107, %v2537
  %v2539 = vand.u32 %v2538, 4294901760
  %2540 = vmatmul.mubr.f32.gmra.mxu0 %v2539
  %v2541 = vpop.f32.mrf.mxu0
  %v2542 = vadd.f32 %v2467, %v2541
  %v2543 = vpop.f32.mrf.mxu0
  %2544 = vdwg.mxu0
  %2545 = vmatprep.subr.mxu0 0.0
  %2546 = vmatpush1.msra.mxu0 0.0
  %2547 = vmatprep.subr.mxu0 0.0
  %2548 = vmatpush1.msra.mxu0 0.0
  %2549 = vmatprep.subr.mxu0 0.0
  %2550 = vmatpush1.msra.mxu0 0.0
  %2551 = vmatprep.subr.mxu0 0.0
  %2552 = vmatpush1.msra.mxu0 0.0
  %2553 = vmatprep.subr.mxu0 0.0
  %2554 = vmatpush1.msra.mxu0 0.0
  %2555 = vmatprep.subr.mxu0 0.0
  %2556 = vmatpush1.msra.mxu0 0.0
  %2557 = vmatprep.subr.mxu0 0.0
  %2558 = vmatpush1.msra.mxu0 0.0
  %2559 = vmatprep.subr.mxu0 0.0
  %2560 = vmatpush1.msra.mxu0 0.0
  %2561 = vmatprep.subr.mxu0 0.0
  %2562 = vmatpush1.msra.mxu0 0.0
  %2563 = vmatprep.subr.mxu0 0.0
  %2564 = vmatpush1.msra.mxu0 0.0
  %2565 = vmatprep.subr.mxu0 0.0
  %2566 = vmatpush1.msra.mxu0 0.0
  %2567 = vmatprep.subr.mxu0 0.0
  %2568 = vmatpush1.msra.mxu0 0.0
  %2569 = vmatprep.subr.mxu0 0.0
  %2570 = vmatpush1.msra.mxu0 0.0
  %2571 = vmatprep.subr.mxu0 0.0
  %2572 = vmatpush1.msra.mxu0 0.0
  %2573 = vmatprep.subr.mxu0 0.0
  %v2574 = vand.u32 %v2170, 4294901760
  %v2575 = vsub.f32 %v2170, %v2574
  %v2576 = vand.u32 %v2575, 4294901760
  %2577 = vmatpush1.msra.mxu0 %v2576
  %2578 = vmatprep.subr.mxu0 0.0
  %v2579 = vand.u32 %v2169, 4294901760
  %v2580 = vsub.f32 %v2169, %v2579
  %v2581 = vand.u32 %v2580, 4294901760
  %2582 = vmatpush1.msra.mxu0 %v2581
  %2583 = vmatprep.subr.mxu0 0.0
  %2584 = vmatpush2.msra.mxu0 0.0
  %2585 = vmatprep.subr.mxu0 0.0
  %2586 = vmatpush2.msra.mxu0 0.0
  %2587 = vmatprep.subr.mxu0 0.0
  %2588 = vmatpush2.msra.mxu0 0.0
  %2589 = vmatprep.subr.mxu0 0.0
  %2590 = vmatpush2.msra.mxu0 0.0
  %2591 = vmatprep.subr.mxu0 0.0
  %2592 = vmatpush2.msra.mxu0 0.0
  %2593 = vmatprep.subr.mxu0 0.0
  %2594 = vmatpush2.msra.mxu0 0.0
  %2595 = vmatprep.subr.mxu0 0.0
  %2596 = vmatpush2.msra.mxu0 0.0
  %2597 = vmatprep.subr.mxu0 0.0
  %2598 = vmatpush2.msra.mxu0 0.0
  %2599 = vmatprep.subr.mxu0 0.0
  %2600 = vmatpush2.msra.mxu0 0.0
  %2601 = vmatprep.subr.mxu0 0.0
  %2602 = vmatpush2.msra.mxu0 0.0
  %2603 = vmatprep.subr.mxu0 0.0
  %2604 = vmatpush2.msra.mxu0 0.0
  %2605 = vmatprep.subr.mxu0 0.0
  %2606 = vmatpush2.msra.mxu0 0.0
  %2607 = vmatprep.subr.mxu0 0.0
  %2608 = vmatpush2.msra.mxu0 0.0
  %2609 = vmatprep.subr.mxu0 0.0
  %2610 = vmatpush2.msra.mxu0 0.0
  %2611 = vmatprep.subr.mxu0 0.0
  %2612 = vmatpush2.msra.mxu0 0.0
  %2613 = vmatprep.subr.mxu0 0.0
  %2614 = vmatpush2.msra.mxu0 0.0
  %2615 = vmatprep.mubr.f32.mxu0 0.0
  %v2616 = vand.u32 %v107, 4294901760
  %2617 = vmatmul.mubr.f32.gmra.mxu0 %v2616
  %v2618 = vpop.f32.mrf.mxu0
  %v2619 = vadd.f32 %v2542, %v2618
  %v2620 = vpop.f32.mrf.mxu0
  %2621 = vdwg.mxu0
  %2622 = vmatprep.subr.mxu0 0.0
  %2623 = vmatpush1.msra.mxu0 0.0
  %2624 = vmatprep.subr.mxu0 0.0
  %2625 = vmatpush1.msra.mxu0 0.0
  %2626 = vmatprep.subr.mxu0 0.0
  %2627 = vmatpush1.msra.mxu0 0.0
  %2628 = vmatprep.subr.mxu0 0.0
  %2629 = vmatpush1.msra.mxu0 0.0
  %2630 = vmatprep.subr.mxu0 0.0
  %2631 = vmatpush1.msra.mxu0 0.0
  %2632 = vmatprep.subr.mxu0 0.0
  %2633 = vmatpush1.msra.mxu0 0.0
  %2634 = vmatprep.subr.mxu0 0.0
  %2635 = vmatpush1.msra.mxu0 0.0
  %2636 = vmatprep.subr.mxu0 0.0
  %2637 = vmatpush1.msra.mxu0 0.0
  %2638 = vmatprep.subr.mxu0 0.0
  %2639 = vmatpush1.msra.mxu0 0.0
  %2640 = vmatprep.subr.mxu0 0.0
  %2641 = vmatpush1.msra.mxu0 0.0
  %2642 = vmatprep.subr.mxu0 0.0
  %2643 = vmatpush1.msra.mxu0 0.0
  %2644 = vmatprep.subr.mxu0 0.0
  %2645 = vmatpush1.msra.mxu0 0.0
  %2646 = vmatprep.subr.mxu0 0.0
  %2647 = vmatpush1.msra.mxu0 0.0
  %2648 = vmatprep.subr.mxu0 0.0
  %2649 = vmatpush1.msra.mxu0 0.0
  %2650 = vmatprep.subr.mxu0 0.0
  %v2651 = vand.u32 %v2170, 4294901760
  %2652 = vmatpush1.msra.mxu0 %v2651
  %2653 = vmatprep.subr.mxu0 0.0
  %v2654 = vand.u32 %v2169, 4294901760
  %2655 = vmatpush1.msra.mxu0 %v2654
  %2656 = vmatprep.subr.mxu0 0.0
  %2657 = vmatpush2.msra.mxu0 0.0
  %2658 = vmatprep.subr.mxu0 0.0
  %2659 = vmatpush2.msra.mxu0 0.0
  %2660 = vmatprep.subr.mxu0 0.0
  %2661 = vmatpush2.msra.mxu0 0.0
  %2662 = vmatprep.subr.mxu0 0.0
  %2663 = vmatpush2.msra.mxu0 0.0
  %2664 = vmatprep.subr.mxu0 0.0
  %2665 = vmatpush2.msra.mxu0 0.0
  %2666 = vmatprep.subr.mxu0 0.0
  %2667 = vmatpush2.msra.mxu0 0.0
  %2668 = vmatprep.subr.mxu0 0.0
  %2669 = vmatpush2.msra.mxu0 0.0
  %2670 = vmatprep.subr.mxu0 0.0
  %2671 = vmatpush2.msra.mxu0 0.0
  %2672 = vmatprep.subr.mxu0 0.0
  %2673 = vmatpush2.msra.mxu0 0.0
  %2674 = vmatprep.subr.mxu0 0.0
  %2675 = vmatpush2.msra.mxu0 0.0
  %2676 = vmatprep.subr.mxu0 0.0
  %2677 = vmatpush2.msra.mxu0 0.0
  %2678 = vmatprep.subr.mxu0 0.0
  %2679 = vmatpush2.msra.mxu0 0.0
  %2680 = vmatprep.subr.mxu0 0.0
  %2681 = vmatpush2.msra.mxu0 0.0
  %2682 = vmatprep.subr.mxu0 0.0
  %2683 = vmatpush2.msra.mxu0 0.0
  %2684 = vmatprep.subr.mxu0 0.0
  %2685 = vmatpush2.msra.mxu0 0.0
  %2686 = vmatprep.subr.mxu0 0.0
  %2687 = vmatpush2.msra.mxu0 0.0
  %2688 = vmatprep.mubr.f32.mxu0 0.0
  %v2689 = vand.u32 %v107, 4294901760
  %2690 = vmatmul.mubr.f32.gmra.mxu0 %v2689
  %v2691 = vpop.f32.mrf.mxu0
  %v2692 = vadd.f32 %v2619, %v2691
  %v2693 = vpop.f32.mrf.mxu0
  %2694 = vdwg.mxu0
  %v2695 = vadd.f32 %v2692, %v576
  %v2696 = vlaneseq
  %v2697 = vshrl.u32 %v2696, 7
  %v2698 = vsub.s32 0, %v2697
  %v2699 = vrot.slane %v2695, %v2698
  %v2700 = vmul.f32 %v21, %v2699
  %v2701 = vmul.f32 %v22, %v2699
  %v2702 = vlaneseq
  %v2703 = vshrl.u32 %v2702, 7
  %v2704 = vsub.s32 1, %v2703
  %v2705 = vrot.slane %v2692, %v2704
  %v2706 = vmul.f32 %v21, %v2705
  %v2707 = vmul.f32 %v22, %v2705
  %v2709 = vsel %vm56, %v2230, 0
  %v2712 = vsel %vm56, %v2233, 0
  %v2715 = vsel %vm56, %v2706, 0
  %v2718 = vsel %vm56, %v2707, 0
  %2720 = vmatprep.subr.mxu0 0.0
  %2721 = vmatpush1.xpose.msra.mxu0 0.0
  %2722 = vmatprep.subr.mxu0 0.0
  %2723 = vmatpush1.xpose.msra.mxu0 0.0
  %2724 = vmatprep.subr.mxu0 0.0
  %2725 = vmatpush1.xpose.msra.mxu0 0.0
  %2726 = vmatprep.subr.mxu0 0.0
  %2727 = vmatpush1.xpose.msra.mxu0 0.0
  %2728 = vmatprep.subr.mxu0 0.0
  %2729 = vmatpush1.xpose.msra.mxu0 0.0
  %2730 = vmatprep.subr.mxu0 0.0
  %2731 = vmatpush1.xpose.msra.mxu0 0.0
  %2732 = vmatprep.subr.mxu0 0.0
  %2733 = vmatpush1.xpose.msra.mxu0 0.0
  %2734 = vmatprep.subr.mxu0 0.0
  %2735 = vmatpush1.xpose.msra.mxu0 0.0
  %2736 = vmatprep.subr.mxu0 0.0
  %2737 = vmatpush1.xpose.msra.mxu0 0.0
  %2738 = vmatprep.subr.mxu0 0.0
  %2739 = vmatpush1.xpose.msra.mxu0 0.0
  %2740 = vmatprep.subr.mxu0 0.0
  %2741 = vmatpush1.xpose.msra.mxu0 0.0
  %2742 = vmatprep.subr.mxu0 0.0
  %2743 = vmatpush1.xpose.msra.mxu0 0.0
  %2744 = vmatprep.subr.mxu0 0.0
  %2745 = vmatpush1.xpose.msra.mxu0 0.0
  %2746 = vmatprep.subr.mxu0 0.0
  %2747 = vmatpush1.xpose.msra.mxu0 0.0
  %2748 = vmatprep.subr.mxu0 0.0
  %v2749 = vand.u32 %v2718, 4294901760
  %2750 = vmatpush1.xpose.msra.mxu0 %v2749
  %2751 = vmatprep.subr.mxu0 0.0
  %v2752 = vand.u32 %v2715, 4294901760
  %2753 = vmatpush1.xpose.msra.mxu0 %v2752
  %2754 = vmatprep.subr.mxu0 0.0
  %2755 = vmatpush2.xpose.msra.mxu0 0.0
  %2756 = vmatprep.subr.mxu0 0.0
  %2757 = vmatpush2.xpose.msra.mxu0 0.0
  %2758 = vmatprep.subr.mxu0 0.0
  %2759 = vmatpush2.xpose.msra.mxu0 0.0
  %2760 = vmatprep.subr.mxu0 0.0
  %2761 = vmatpush2.xpose.msra.mxu0 0.0
  %2762 = vmatprep.subr.mxu0 0.0
  %2763 = vmatpush2.xpose.msra.mxu0 0.0
  %2764 = vmatprep.subr.mxu0 0.0
  %2765 = vmatpush2.xpose.msra.mxu0 0.0
  %2766 = vmatprep.subr.mxu0 0.0
  %2767 = vmatpush2.xpose.msra.mxu0 0.0
  %2768 = vmatprep.subr.mxu0 0.0
  %2769 = vmatpush2.xpose.msra.mxu0 0.0
  %2770 = vmatprep.subr.mxu0 0.0
  %2771 = vmatpush2.xpose.msra.mxu0 0.0
  %2772 = vmatprep.subr.mxu0 0.0
  %2773 = vmatpush2.xpose.msra.mxu0 0.0
  %2774 = vmatprep.subr.mxu0 0.0
  %2775 = vmatpush2.xpose.msra.mxu0 0.0
  %2776 = vmatprep.subr.mxu0 0.0
  %2777 = vmatpush2.xpose.msra.mxu0 0.0
  %2778 = vmatprep.subr.mxu0 0.0
  %2779 = vmatpush2.xpose.msra.mxu0 0.0
  %2780 = vmatprep.subr.mxu0 0.0
  %2781 = vmatpush2.xpose.msra.mxu0 0.0
  %2782 = vmatprep.subr.mxu0 0.0
  %2783 = vmatpush2.xpose.msra.mxu0 0.0
  %2784 = vmatprep.subr.mxu0 0.0
  %2785 = vmatpush2.xpose.msra.mxu0 0.0
  %2786 = vmatprep.mubr.f32.mxu0 0.0
  %v2787 = vand.u32 %v2709, 4294901760
  %v2788 = vsub.f32 %v2709, %v2787
  %v2789 = vand.u32 %v2788, 4294901760
  %v2790 = vsub.f32 %v2788, %v2789
  %v2791 = vand.u32 %v2790, 4294901760
  %2792 = vmatmul.mubr.f32.gmra.mxu0 %v2791
  %v2793 = vpop.f32.mrf.mxu0
  %v2794 = vadd.f32 0.0, %v2793
  %v2795 = vpop.f32.mrf.mxu0
  %2796 = vmatprep.mubr.f32.mxu0 0.0
  %v2797 = vand.u32 %v2712, 4294901760
  %v2798 = vsub.f32 %v2712, %v2797
  %v2799 = vand.u32 %v2798, 4294901760
  %v2800 = vsub.f32 %v2798, %v2799
  %v2801 = vand.u32 %v2800, 4294901760
  %2802 = vmatmul.mubr.f32.gmra.mxu0 %v2801
  %v2803 = vpop.f32.mrf.mxu0
  %v2804 = vadd.f32 0.0, %v2803
  %v2805 = vpop.f32.mrf.mxu0
  %2806 = vdwg.mxu0
  %2807 = vmatprep.subr.mxu0 0.0
  %2808 = vmatpush1.xpose.msra.mxu0 0.0
  %2809 = vmatprep.subr.mxu0 0.0
  %2810 = vmatpush1.xpose.msra.mxu0 0.0
  %2811 = vmatprep.subr.mxu0 0.0
  %2812 = vmatpush1.xpose.msra.mxu0 0.0
  %2813 = vmatprep.subr.mxu0 0.0
  %2814 = vmatpush1.xpose.msra.mxu0 0.0
  %2815 = vmatprep.subr.mxu0 0.0
  %2816 = vmatpush1.xpose.msra.mxu0 0.0
  %2817 = vmatprep.subr.mxu0 0.0
  %2818 = vmatpush1.xpose.msra.mxu0 0.0
  %2819 = vmatprep.subr.mxu0 0.0
  %2820 = vmatpush1.xpose.msra.mxu0 0.0
  %2821 = vmatprep.subr.mxu0 0.0
  %2822 = vmatpush1.xpose.msra.mxu0 0.0
  %2823 = vmatprep.subr.mxu0 0.0
  %2824 = vmatpush1.xpose.msra.mxu0 0.0
  %2825 = vmatprep.subr.mxu0 0.0
  %2826 = vmatpush1.xpose.msra.mxu0 0.0
  %2827 = vmatprep.subr.mxu0 0.0
  %2828 = vmatpush1.xpose.msra.mxu0 0.0
  %2829 = vmatprep.subr.mxu0 0.0
  %2830 = vmatpush1.xpose.msra.mxu0 0.0
  %2831 = vmatprep.subr.mxu0 0.0
  %2832 = vmatpush1.xpose.msra.mxu0 0.0
  %2833 = vmatprep.subr.mxu0 0.0
  %2834 = vmatpush1.xpose.msra.mxu0 0.0
  %2835 = vmatprep.subr.mxu0 0.0
  %v2836 = vand.u32 %v2718, 4294901760
  %v2837 = vsub.f32 %v2718, %v2836
  %v2838 = vand.u32 %v2837, 4294901760
  %v2839 = vsub.f32 %v2837, %v2838
  %v2840 = vand.u32 %v2839, 4294901760
  %2841 = vmatpush1.xpose.msra.mxu0 %v2840
  %2842 = vmatprep.subr.mxu0 0.0
  %v2843 = vand.u32 %v2715, 4294901760
  %v2844 = vsub.f32 %v2715, %v2843
  %v2845 = vand.u32 %v2844, 4294901760
  %v2846 = vsub.f32 %v2844, %v2845
  %v2847 = vand.u32 %v2846, 4294901760
  %2848 = vmatpush1.xpose.msra.mxu0 %v2847
  %2849 = vmatprep.subr.mxu0 0.0
  %2850 = vmatpush2.xpose.msra.mxu0 0.0
  %2851 = vmatprep.subr.mxu0 0.0
  %2852 = vmatpush2.xpose.msra.mxu0 0.0
  %2853 = vmatprep.subr.mxu0 0.0
  %2854 = vmatpush2.xpose.msra.mxu0 0.0
  %2855 = vmatprep.subr.mxu0 0.0
  %2856 = vmatpush2.xpose.msra.mxu0 0.0
  %2857 = vmatprep.subr.mxu0 0.0
  %2858 = vmatpush2.xpose.msra.mxu0 0.0
  %2859 = vmatprep.subr.mxu0 0.0
  %2860 = vmatpush2.xpose.msra.mxu0 0.0
  %2861 = vmatprep.subr.mxu0 0.0
  %2862 = vmatpush2.xpose.msra.mxu0 0.0
  %2863 = vmatprep.subr.mxu0 0.0
  %2864 = vmatpush2.xpose.msra.mxu0 0.0
  %2865 = vmatprep.subr.mxu0 0.0
  %2866 = vmatpush2.xpose.msra.mxu0 0.0
  %2867 = vmatprep.subr.mxu0 0.0
  %2868 = vmatpush2.xpose.msra.mxu0 0.0
  %2869 = vmatprep.subr.mxu0 0.0
  %2870 = vmatpush2.xpose.msra.mxu0 0.0
  %2871 = vmatprep.subr.mxu0 0.0
  %2872 = vmatpush2.xpose.msra.mxu0 0.0
  %2873 = vmatprep.subr.mxu0 0.0
  %2874 = vmatpush2.xpose.msra.mxu0 0.0
  %2875 = vmatprep.subr.mxu0 0.0
  %2876 = vmatpush2.xpose.msra.mxu0 0.0
  %2877 = vmatprep.subr.mxu0 0.0
  %2878 = vmatpush2.xpose.msra.mxu0 0.0
  %2879 = vmatprep.subr.mxu0 0.0
  %2880 = vmatpush2.xpose.msra.mxu0 0.0
  %2881 = vmatprep.mubr.f32.mxu0 0.0
  %v2882 = vand.u32 %v2709, 4294901760
  %2883 = vmatmul.mubr.f32.gmra.mxu0 %v2882
  %v2884 = vpop.f32.mrf.mxu0
  %v2885 = vadd.f32 %v2794, %v2884
  %v2886 = vpop.f32.mrf.mxu0
  %2887 = vmatprep.mubr.f32.mxu0 0.0
  %v2888 = vand.u32 %v2712, 4294901760
  %2889 = vmatmul.mubr.f32.gmra.mxu0 %v2888
  %v2890 = vpop.f32.mrf.mxu0
  %v2891 = vadd.f32 %v2804, %v2890
  %v2892 = vpop.f32.mrf.mxu0
  %2893 = vdwg.mxu0
  %2894 = vmatprep.subr.mxu0 0.0
  %2895 = vmatpush1.xpose.msra.mxu0 0.0
  %2896 = vmatprep.subr.mxu0 0.0
  %2897 = vmatpush1.xpose.msra.mxu0 0.0
  %2898 = vmatprep.subr.mxu0 0.0
  %2899 = vmatpush1.xpose.msra.mxu0 0.0
  %2900 = vmatprep.subr.mxu0 0.0
  %2901 = vmatpush1.xpose.msra.mxu0 0.0
  %2902 = vmatprep.subr.mxu0 0.0
  %2903 = vmatpush1.xpose.msra.mxu0 0.0
  %2904 = vmatprep.subr.mxu0 0.0
  %2905 = vmatpush1.xpose.msra.mxu0 0.0
  %2906 = vmatprep.subr.mxu0 0.0
  %2907 = vmatpush1.xpose.msra.mxu0 0.0
  %2908 = vmatprep.subr.mxu0 0.0
  %2909 = vmatpush1.xpose.msra.mxu0 0.0
  %2910 = vmatprep.subr.mxu0 0.0
  %2911 = vmatpush1.xpose.msra.mxu0 0.0
  %2912 = vmatprep.subr.mxu0 0.0
  %2913 = vmatpush1.xpose.msra.mxu0 0.0
  %2914 = vmatprep.subr.mxu0 0.0
  %2915 = vmatpush1.xpose.msra.mxu0 0.0
  %2916 = vmatprep.subr.mxu0 0.0
  %2917 = vmatpush1.xpose.msra.mxu0 0.0
  %2918 = vmatprep.subr.mxu0 0.0
  %2919 = vmatpush1.xpose.msra.mxu0 0.0
  %2920 = vmatprep.subr.mxu0 0.0
  %2921 = vmatpush1.xpose.msra.mxu0 0.0
  %2922 = vmatprep.subr.mxu0 0.0
  %v2923 = vand.u32 %v2718, 4294901760
  %v2924 = vsub.f32 %v2718, %v2923
  %2925 = vmatpush1.xpose.msra.mxu0 %v2924
  %2926 = vmatprep.subr.mxu0 0.0
  %v2927 = vand.u32 %v2715, 4294901760
  %v2928 = vsub.f32 %v2715, %v2927
  %2929 = vmatpush1.xpose.msra.mxu0 %v2928
  %2930 = vmatprep.subr.mxu0 0.0
  %2931 = vmatpush2.xpose.msra.mxu0 0.0
  %2932 = vmatprep.subr.mxu0 0.0
  %2933 = vmatpush2.xpose.msra.mxu0 0.0
  %2934 = vmatprep.subr.mxu0 0.0
  %2935 = vmatpush2.xpose.msra.mxu0 0.0
  %2936 = vmatprep.subr.mxu0 0.0
  %2937 = vmatpush2.xpose.msra.mxu0 0.0
  %2938 = vmatprep.subr.mxu0 0.0
  %2939 = vmatpush2.xpose.msra.mxu0 0.0
  %2940 = vmatprep.subr.mxu0 0.0
  %2941 = vmatpush2.xpose.msra.mxu0 0.0
  %2942 = vmatprep.subr.mxu0 0.0
  %2943 = vmatpush2.xpose.msra.mxu0 0.0
  %2944 = vmatprep.subr.mxu0 0.0
  %2945 = vmatpush2.xpose.msra.mxu0 0.0
  %2946 = vmatprep.subr.mxu0 0.0
  %2947 = vmatpush2.xpose.msra.mxu0 0.0
  %2948 = vmatprep.subr.mxu0 0.0
  %2949 = vmatpush2.xpose.msra.mxu0 0.0
  %2950 = vmatprep.subr.mxu0 0.0
  %2951 = vmatpush2.xpose.msra.mxu0 0.0
  %2952 = vmatprep.subr.mxu0 0.0
  %2953 = vmatpush2.xpose.msra.mxu0 0.0
  %2954 = vmatprep.subr.mxu0 0.0
  %2955 = vmatpush2.xpose.msra.mxu0 0.0
  %2956 = vmatprep.subr.mxu0 0.0
  %2957 = vmatpush2.xpose.msra.mxu0 0.0
  %2958 = vmatprep.subr.mxu0 0.0
  %2959 = vmatpush2.xpose.msra.mxu0 0.0
  %2960 = vmatprep.subr.mxu0 0.0
  %2961 = vmatpush2.xpose.msra.mxu0 0.0
  %2962 = vmatprep.mubr.f32.mxu0 0.0
  %v2963 = vand.u32 %v2709, 4294901760
  %v2964 = vsub.f32 %v2709, %v2963
  %2965 = vmatmul.mubr.f32.gmra.mxu0 %v2964
  %v2966 = vpop.f32.mrf.mxu0
  %v2967 = vadd.f32 %v2885, %v2966
  %v2968 = vpop.f32.mrf.mxu0
  %2969 = vmatprep.mubr.f32.mxu0 0.0
  %v2970 = vand.u32 %v2712, 4294901760
  %v2971 = vsub.f32 %v2712, %v2970
  %2972 = vmatmul.mubr.f32.gmra.mxu0 %v2971
  %v2973 = vpop.f32.mrf.mxu0
  %v2974 = vadd.f32 %v2891, %v2973
  %v2975 = vpop.f32.mrf.mxu0
  %2976 = vdwg.mxu0
  %2977 = vmatprep.subr.mxu0 0.0
  %2978 = vmatpush1.xpose.msra.mxu0 0.0
  %2979 = vmatprep.subr.mxu0 0.0
  %2980 = vmatpush1.xpose.msra.mxu0 0.0
  %2981 = vmatprep.subr.mxu0 0.0
  %2982 = vmatpush1.xpose.msra.mxu0 0.0
  %2983 = vmatprep.subr.mxu0 0.0
  %2984 = vmatpush1.xpose.msra.mxu0 0.0
  %2985 = vmatprep.subr.mxu0 0.0
  %2986 = vmatpush1.xpose.msra.mxu0 0.0
  %2987 = vmatprep.subr.mxu0 0.0
  %2988 = vmatpush1.xpose.msra.mxu0 0.0
  %2989 = vmatprep.subr.mxu0 0.0
  %2990 = vmatpush1.xpose.msra.mxu0 0.0
  %2991 = vmatprep.subr.mxu0 0.0
  %2992 = vmatpush1.xpose.msra.mxu0 0.0
  %2993 = vmatprep.subr.mxu0 0.0
  %2994 = vmatpush1.xpose.msra.mxu0 0.0
  %2995 = vmatprep.subr.mxu0 0.0
  %2996 = vmatpush1.xpose.msra.mxu0 0.0
  %2997 = vmatprep.subr.mxu0 0.0
  %2998 = vmatpush1.xpose.msra.mxu0 0.0
  %2999 = vmatprep.subr.mxu0 0.0
  %3000 = vmatpush1.xpose.msra.mxu0 0.0
  %3001 = vmatprep.subr.mxu0 0.0
  %3002 = vmatpush1.xpose.msra.mxu0 0.0
  %3003 = vmatprep.subr.mxu0 0.0
  %3004 = vmatpush1.xpose.msra.mxu0 0.0
  %3005 = vmatprep.subr.mxu0 0.0
  %v3006 = vand.u32 %v2718, 4294901760
  %3007 = vmatpush1.xpose.msra.mxu0 %v3006
  %3008 = vmatprep.subr.mxu0 0.0
  %v3009 = vand.u32 %v2715, 4294901760
  %3010 = vmatpush1.xpose.msra.mxu0 %v3009
  %3011 = vmatprep.subr.mxu0 0.0
  %3012 = vmatpush2.xpose.msra.mxu0 0.0
  %3013 = vmatprep.subr.mxu0 0.0
  %3014 = vmatpush2.xpose.msra.mxu0 0.0
  %3015 = vmatprep.subr.mxu0 0.0
  %3016 = vmatpush2.xpose.msra.mxu0 0.0
  %3017 = vmatprep.subr.mxu0 0.0
  %3018 = vmatpush2.xpose.msra.mxu0 0.0
  %3019 = vmatprep.subr.mxu0 0.0
  %3020 = vmatpush2.xpose.msra.mxu0 0.0
  %3021 = vmatprep.subr.mxu0 0.0
  %3022 = vmatpush2.xpose.msra.mxu0 0.0
  %3023 = vmatprep.subr.mxu0 0.0
  %3024 = vmatpush2.xpose.msra.mxu0 0.0
  %3025 = vmatprep.subr.mxu0 0.0
  %3026 = vmatpush2.xpose.msra.mxu0 0.0
  %3027 = vmatprep.subr.mxu0 0.0
  %3028 = vmatpush2.xpose.msra.mxu0 0.0
  %3029 = vmatprep.subr.mxu0 0.0
  %3030 = vmatpush2.xpose.msra.mxu0 0.0
  %3031 = vmatprep.subr.mxu0 0.0
  %3032 = vmatpush2.xpose.msra.mxu0 0.0
  %3033 = vmatprep.subr.mxu0 0.0
  %3034 = vmatpush2.xpose.msra.mxu0 0.0
  %3035 = vmatprep.subr.mxu0 0.0
  %3036 = vmatpush2.xpose.msra.mxu0 0.0
  %3037 = vmatprep.subr.mxu0 0.0
  %3038 = vmatpush2.xpose.msra.mxu0 0.0
  %3039 = vmatprep.subr.mxu0 0.0
  %3040 = vmatpush2.xpose.msra.mxu0 0.0
  %3041 = vmatprep.subr.mxu0 0.0
  %3042 = vmatpush2.xpose.msra.mxu0 0.0
  %3043 = vmatprep.mubr.f32.mxu0 0.0
  %v3044 = vand.u32 %v2709, 4294901760
  %v3045 = vsub.f32 %v2709, %v3044
  %v3046 = vand.u32 %v3045, 4294901760
  %3047 = vmatmul.mubr.f32.gmra.mxu0 %v3046
  %v3048 = vpop.f32.mrf.mxu0
  %v3049 = vadd.f32 %v2967, %v3048
  %v3050 = vpop.f32.mrf.mxu0
  %3051 = vmatprep.mubr.f32.mxu0 0.0
  %v3052 = vand.u32 %v2712, 4294901760
  %v3053 = vsub.f32 %v2712, %v3052
  %v3054 = vand.u32 %v3053, 4294901760
  %3055 = vmatmul.mubr.f32.gmra.mxu0 %v3054
  %v3056 = vpop.f32.mrf.mxu0
  %v3057 = vadd.f32 %v2974, %v3056
  %v3058 = vpop.f32.mrf.mxu0
  %3059 = vdwg.mxu0
  %3060 = vmatprep.subr.mxu0 0.0
  %3061 = vmatpush1.xpose.msra.mxu0 0.0
  %3062 = vmatprep.subr.mxu0 0.0
  %3063 = vmatpush1.xpose.msra.mxu0 0.0
  %3064 = vmatprep.subr.mxu0 0.0
  %3065 = vmatpush1.xpose.msra.mxu0 0.0
  %3066 = vmatprep.subr.mxu0 0.0
  %3067 = vmatpush1.xpose.msra.mxu0 0.0
  %3068 = vmatprep.subr.mxu0 0.0
  %3069 = vmatpush1.xpose.msra.mxu0 0.0
  %3070 = vmatprep.subr.mxu0 0.0
  %3071 = vmatpush1.xpose.msra.mxu0 0.0
  %3072 = vmatprep.subr.mxu0 0.0
  %3073 = vmatpush1.xpose.msra.mxu0 0.0
  %3074 = vmatprep.subr.mxu0 0.0
  %3075 = vmatpush1.xpose.msra.mxu0 0.0
  %3076 = vmatprep.subr.mxu0 0.0
  %3077 = vmatpush1.xpose.msra.mxu0 0.0
  %3078 = vmatprep.subr.mxu0 0.0
  %3079 = vmatpush1.xpose.msra.mxu0 0.0
  %3080 = vmatprep.subr.mxu0 0.0
  %3081 = vmatpush1.xpose.msra.mxu0 0.0
  %3082 = vmatprep.subr.mxu0 0.0
  %3083 = vmatpush1.xpose.msra.mxu0 0.0
  %3084 = vmatprep.subr.mxu0 0.0
  %3085 = vmatpush1.xpose.msra.mxu0 0.0
  %3086 = vmatprep.subr.mxu0 0.0
  %3087 = vmatpush1.xpose.msra.mxu0 0.0
  %3088 = vmatprep.subr.mxu0 0.0
  %v3089 = vand.u32 %v2718, 4294901760
  %v3090 = vsub.f32 %v2718, %v3089
  %v3091 = vand.u32 %v3090, 4294901760
  %3092 = vmatpush1.xpose.msra.mxu0 %v3091
  %3093 = vmatprep.subr.mxu0 0.0
  %v3094 = vand.u32 %v2715, 4294901760
  %v3095 = vsub.f32 %v2715, %v3094
  %v3096 = vand.u32 %v3095, 4294901760
  %3097 = vmatpush1.xpose.msra.mxu0 %v3096
  %3098 = vmatprep.subr.mxu0 0.0
  %3099 = vmatpush2.xpose.msra.mxu0 0.0
  %3100 = vmatprep.subr.mxu0 0.0
  %3101 = vmatpush2.xpose.msra.mxu0 0.0
  %3102 = vmatprep.subr.mxu0 0.0
  %3103 = vmatpush2.xpose.msra.mxu0 0.0
  %3104 = vmatprep.subr.mxu0 0.0
  %3105 = vmatpush2.xpose.msra.mxu0 0.0
  %3106 = vmatprep.subr.mxu0 0.0
  %3107 = vmatpush2.xpose.msra.mxu0 0.0
  %3108 = vmatprep.subr.mxu0 0.0
  %3109 = vmatpush2.xpose.msra.mxu0 0.0
  %3110 = vmatprep.subr.mxu0 0.0
  %3111 = vmatpush2.xpose.msra.mxu0 0.0
  %3112 = vmatprep.subr.mxu0 0.0
  %3113 = vmatpush2.xpose.msra.mxu0 0.0
  %3114 = vmatprep.subr.mxu0 0.0
  %3115 = vmatpush2.xpose.msra.mxu0 0.0
  %3116 = vmatprep.subr.mxu0 0.0
  %3117 = vmatpush2.xpose.msra.mxu0 0.0
  %3118 = vmatprep.subr.mxu0 0.0
  %3119 = vmatpush2.xpose.msra.mxu0 0.0
  %3120 = vmatprep.subr.mxu0 0.0
  %3121 = vmatpush2.xpose.msra.mxu0 0.0
  %3122 = vmatprep.subr.mxu0 0.0
  %3123 = vmatpush2.xpose.msra.mxu0 0.0
  %3124 = vmatprep.subr.mxu0 0.0
  %3125 = vmatpush2.xpose.msra.mxu0 0.0
  %3126 = vmatprep.subr.mxu0 0.0
  %3127 = vmatpush2.xpose.msra.mxu0 0.0
  %3128 = vmatprep.subr.mxu0 0.0
  %3129 = vmatpush2.xpose.msra.mxu0 0.0
  %3130 = vmatprep.mubr.f32.mxu0 0.0
  %v3131 = vand.u32 %v2709, 4294901760
  %3132 = vmatmul.mubr.f32.gmra.mxu0 %v3131
  %v3133 = vpop.f32.mrf.mxu0
  %v3134 = vadd.f32 %v3049, %v3133
  %v3135 = vpop.f32.mrf.mxu0
  %3136 = vmatprep.mubr.f32.mxu0 0.0
  %v3137 = vand.u32 %v2712, 4294901760
  %3138 = vmatmul.mubr.f32.gmra.mxu0 %v3137
  %v3139 = vpop.f32.mrf.mxu0
  %v3140 = vadd.f32 %v3057, %v3139
  %v3141 = vpop.f32.mrf.mxu0
  %3142 = vdwg.mxu0
  %3143 = vmatprep.subr.mxu0 0.0
  %3144 = vmatpush1.xpose.msra.mxu0 0.0
  %3145 = vmatprep.subr.mxu0 0.0
  %3146 = vmatpush1.xpose.msra.mxu0 0.0
  %3147 = vmatprep.subr.mxu0 0.0
  %3148 = vmatpush1.xpose.msra.mxu0 0.0
  %3149 = vmatprep.subr.mxu0 0.0
  %3150 = vmatpush1.xpose.msra.mxu0 0.0
  %3151 = vmatprep.subr.mxu0 0.0
  %3152 = vmatpush1.xpose.msra.mxu0 0.0
  %3153 = vmatprep.subr.mxu0 0.0
  %3154 = vmatpush1.xpose.msra.mxu0 0.0
  %3155 = vmatprep.subr.mxu0 0.0
  %3156 = vmatpush1.xpose.msra.mxu0 0.0
  %3157 = vmatprep.subr.mxu0 0.0
  %3158 = vmatpush1.xpose.msra.mxu0 0.0
  %3159 = vmatprep.subr.mxu0 0.0
  %3160 = vmatpush1.xpose.msra.mxu0 0.0
  %3161 = vmatprep.subr.mxu0 0.0
  %3162 = vmatpush1.xpose.msra.mxu0 0.0
  %3163 = vmatprep.subr.mxu0 0.0
  %3164 = vmatpush1.xpose.msra.mxu0 0.0
  %3165 = vmatprep.subr.mxu0 0.0
  %3166 = vmatpush1.xpose.msra.mxu0 0.0
  %3167 = vmatprep.subr.mxu0 0.0
  %3168 = vmatpush1.xpose.msra.mxu0 0.0
  %3169 = vmatprep.subr.mxu0 0.0
  %3170 = vmatpush1.xpose.msra.mxu0 0.0
  %3171 = vmatprep.subr.mxu0 0.0
  %v3172 = vand.u32 %v2718, 4294901760
  %3173 = vmatpush1.xpose.msra.mxu0 %v3172
  %3174 = vmatprep.subr.mxu0 0.0
  %v3175 = vand.u32 %v2715, 4294901760
  %3176 = vmatpush1.xpose.msra.mxu0 %v3175
  %3177 = vmatprep.subr.mxu0 0.0
  %3178 = vmatpush2.xpose.msra.mxu0 0.0
  %3179 = vmatprep.subr.mxu0 0.0
  %3180 = vmatpush2.xpose.msra.mxu0 0.0
  %3181 = vmatprep.subr.mxu0 0.0
  %3182 = vmatpush2.xpose.msra.mxu0 0.0
  %3183 = vmatprep.subr.mxu0 0.0
  %3184 = vmatpush2.xpose.msra.mxu0 0.0
  %3185 = vmatprep.subr.mxu0 0.0
  %3186 = vmatpush2.xpose.msra.mxu0 0.0
  %3187 = vmatprep.subr.mxu0 0.0
  %3188 = vmatpush2.xpose.msra.mxu0 0.0
  %3189 = vmatprep.subr.mxu0 0.0
  %3190 = vmatpush2.xpose.msra.mxu0 0.0
  %3191 = vmatprep.subr.mxu0 0.0
  %3192 = vmatpush2.xpose.msra.mxu0 0.0
  %3193 = vmatprep.subr.mxu0 0.0
  %3194 = vmatpush2.xpose.msra.mxu0 0.0
  %3195 = vmatprep.subr.mxu0 0.0
  %3196 = vmatpush2.xpose.msra.mxu0 0.0
  %3197 = vmatprep.subr.mxu0 0.0
  %3198 = vmatpush2.xpose.msra.mxu0 0.0
  %3199 = vmatprep.subr.mxu0 0.0
  %3200 = vmatpush2.xpose.msra.mxu0 0.0
  %3201 = vmatprep.subr.mxu0 0.0
  %3202 = vmatpush2.xpose.msra.mxu0 0.0
  %3203 = vmatprep.subr.mxu0 0.0
  %3204 = vmatpush2.xpose.msra.mxu0 0.0
  %3205 = vmatprep.subr.mxu0 0.0
  %3206 = vmatpush2.xpose.msra.mxu0 0.0
  %3207 = vmatprep.subr.mxu0 0.0
  %3208 = vmatpush2.xpose.msra.mxu0 0.0
  %3209 = vmatprep.mubr.f32.mxu0 0.0
  %v3210 = vand.u32 %v2709, 4294901760
  %3211 = vmatmul.mubr.f32.gmra.mxu0 %v3210
  %v3212 = vpop.f32.mrf.mxu0
  %v3213 = vadd.f32 %v3134, %v3212
  %v3214 = vpop.f32.mrf.mxu0
  %3215 = vmatprep.mubr.f32.mxu0 0.0
  %v3216 = vand.u32 %v2712, 4294901760
  %3217 = vmatmul.mubr.f32.gmra.mxu0 %v3216
  %v3218 = vpop.f32.mrf.mxu0
  %v3219 = vadd.f32 %v3140, %v3218
  %v3220 = vpop.f32.mrf.mxu0
  %3221 = vdwg.mxu0
  %3222 = vmatprep.subr.mxu0 0.0
  %3223 = vmatpush1.xpose.msra.mxu0 0.0
  %3224 = vmatprep.subr.mxu0 0.0
  %3225 = vmatpush1.xpose.msra.mxu0 0.0
  %3226 = vmatprep.subr.mxu0 0.0
  %3227 = vmatpush1.xpose.msra.mxu0 0.0
  %3228 = vmatprep.subr.mxu0 0.0
  %3229 = vmatpush1.xpose.msra.mxu0 0.0
  %3230 = vmatprep.subr.mxu0 0.0
  %3231 = vmatpush1.xpose.msra.mxu0 0.0
  %3232 = vmatprep.subr.mxu0 0.0
  %3233 = vmatpush1.xpose.msra.mxu0 0.0
  %3234 = vmatprep.subr.mxu0 0.0
  %3235 = vmatpush1.xpose.msra.mxu0 0.0
  %3236 = vmatprep.subr.mxu0 0.0
  %3237 = vmatpush1.xpose.msra.mxu0 0.0
  %3238 = vmatprep.subr.mxu0 0.0
  %3239 = vmatpush1.xpose.msra.mxu0 0.0
  %3240 = vmatprep.subr.mxu0 0.0
  %3241 = vmatpush1.xpose.msra.mxu0 0.0
  %3242 = vmatprep.subr.mxu0 0.0
  %3243 = vmatpush1.xpose.msra.mxu0 0.0
  %3244 = vmatprep.subr.mxu0 0.0
  %3245 = vmatpush1.xpose.msra.mxu0 0.0
  %3246 = vmatprep.subr.mxu0 0.0
  %3247 = vmatpush1.xpose.msra.mxu0 0.0
  %3248 = vmatprep.subr.mxu0 0.0
  %3249 = vmatpush1.xpose.msra.mxu0 0.0
  %3250 = vmatprep.subr.mxu0 0.0
  %v3251 = vand.u32 %v1108, 4294901760
  %3252 = vmatpush1.xpose.msra.mxu0 %v3251
  %3253 = vmatprep.subr.mxu0 0.0
  %v3254 = vand.u32 %v1105, 4294901760
  %3255 = vmatpush1.xpose.msra.mxu0 %v3254
  %3256 = vmatprep.subr.mxu0 0.0
  %3257 = vmatpush2.xpose.msra.mxu0 0.0
  %3258 = vmatprep.subr.mxu0 0.0
  %3259 = vmatpush2.xpose.msra.mxu0 0.0
  %3260 = vmatprep.subr.mxu0 0.0
  %3261 = vmatpush2.xpose.msra.mxu0 0.0
  %3262 = vmatprep.subr.mxu0 0.0
  %3263 = vmatpush2.xpose.msra.mxu0 0.0
  %3264 = vmatprep.subr.mxu0 0.0
  %3265 = vmatpush2.xpose.msra.mxu0 0.0
  %3266 = vmatprep.subr.mxu0 0.0
  %3267 = vmatpush2.xpose.msra.mxu0 0.0
  %3268 = vmatprep.subr.mxu0 0.0
  %3269 = vmatpush2.xpose.msra.mxu0 0.0
  %3270 = vmatprep.subr.mxu0 0.0
  %3271 = vmatpush2.xpose.msra.mxu0 0.0
  %3272 = vmatprep.subr.mxu0 0.0
  %3273 = vmatpush2.xpose.msra.mxu0 0.0
  %3274 = vmatprep.subr.mxu0 0.0
  %3275 = vmatpush2.xpose.msra.mxu0 0.0
  %3276 = vmatprep.subr.mxu0 0.0
  %3277 = vmatpush2.xpose.msra.mxu0 0.0
  %3278 = vmatprep.subr.mxu0 0.0
  %3279 = vmatpush2.xpose.msra.mxu0 0.0
  %3280 = vmatprep.subr.mxu0 0.0
  %3281 = vmatpush2.xpose.msra.mxu0 0.0
  %3282 = vmatprep.subr.mxu0 0.0
  %3283 = vmatpush2.xpose.msra.mxu0 0.0
  %3284 = vmatprep.subr.mxu0 0.0
  %3285 = vmatpush2.xpose.msra.mxu0 0.0
  %3286 = vmatprep.subr.mxu0 0.0
  %3287 = vmatpush2.xpose.msra.mxu0 0.0
  %3288 = vmatprep.mubr.f32.mxu0 0.0
  %v3289 = vand.u32 %v2709, 4294901760
  %v3290 = vsub.f32 %v2709, %v3289
  %v3291 = vand.u32 %v3290, 4294901760
  %v3292 = vsub.f32 %v3290, %v3291
  %v3293 = vand.u32 %v3292, 4294901760
  %3294 = vmatmul.mubr.f32.gmra.mxu0 %v3293
  %v3295 = vpop.f32.mrf.mxu0
  %v3296 = vadd.f32 0.0, %v3295
  %v3297 = vpop.f32.mrf.mxu0
  %3298 = vmatprep.mubr.f32.mxu0 0.0
  %v3299 = vand.u32 %v2712, 4294901760
  %v3300 = vsub.f32 %v2712, %v3299
  %v3301 = vand.u32 %v3300, 4294901760
  %v3302 = vsub.f32 %v3300, %v3301
  %v3303 = vand.u32 %v3302, 4294901760
  %3304 = vmatmul.mubr.f32.gmra.mxu0 %v3303
  %v3305 = vpop.f32.mrf.mxu0
  %v3306 = vadd.f32 0.0, %v3305
  %v3307 = vpop.f32.mrf.mxu0
  %3308 = vdwg.mxu0
  %3309 = vmatprep.subr.mxu0 0.0
  %3310 = vmatpush1.xpose.msra.mxu0 0.0
  %3311 = vmatprep.subr.mxu0 0.0
  %3312 = vmatpush1.xpose.msra.mxu0 0.0
  %3313 = vmatprep.subr.mxu0 0.0
  %3314 = vmatpush1.xpose.msra.mxu0 0.0
  %3315 = vmatprep.subr.mxu0 0.0
  %3316 = vmatpush1.xpose.msra.mxu0 0.0
  %3317 = vmatprep.subr.mxu0 0.0
  %3318 = vmatpush1.xpose.msra.mxu0 0.0
  %3319 = vmatprep.subr.mxu0 0.0
  %3320 = vmatpush1.xpose.msra.mxu0 0.0
  %3321 = vmatprep.subr.mxu0 0.0
  %3322 = vmatpush1.xpose.msra.mxu0 0.0
  %3323 = vmatprep.subr.mxu0 0.0
  %3324 = vmatpush1.xpose.msra.mxu0 0.0
  %3325 = vmatprep.subr.mxu0 0.0
  %3326 = vmatpush1.xpose.msra.mxu0 0.0
  %3327 = vmatprep.subr.mxu0 0.0
  %3328 = vmatpush1.xpose.msra.mxu0 0.0
  %3329 = vmatprep.subr.mxu0 0.0
  %3330 = vmatpush1.xpose.msra.mxu0 0.0
  %3331 = vmatprep.subr.mxu0 0.0
  %3332 = vmatpush1.xpose.msra.mxu0 0.0
  %3333 = vmatprep.subr.mxu0 0.0
  %3334 = vmatpush1.xpose.msra.mxu0 0.0
  %3335 = vmatprep.subr.mxu0 0.0
  %3336 = vmatpush1.xpose.msra.mxu0 0.0
  %3337 = vmatprep.subr.mxu0 0.0
  %v3338 = vand.u32 %v1108, 4294901760
  %v3339 = vsub.f32 %v1108, %v3338
  %v3340 = vand.u32 %v3339, 4294901760
  %v3341 = vsub.f32 %v3339, %v3340
  %v3342 = vand.u32 %v3341, 4294901760
  %3343 = vmatpush1.xpose.msra.mxu0 %v3342
  %3344 = vmatprep.subr.mxu0 0.0
  %v3345 = vand.u32 %v1105, 4294901760
  %v3346 = vsub.f32 %v1105, %v3345
  %v3347 = vand.u32 %v3346, 4294901760
  %v3348 = vsub.f32 %v3346, %v3347
  %v3349 = vand.u32 %v3348, 4294901760
  %3350 = vmatpush1.xpose.msra.mxu0 %v3349
  %3351 = vmatprep.subr.mxu0 0.0
  %3352 = vmatpush2.xpose.msra.mxu0 0.0
  %3353 = vmatprep.subr.mxu0 0.0
  %3354 = vmatpush2.xpose.msra.mxu0 0.0
  %3355 = vmatprep.subr.mxu0 0.0
  %3356 = vmatpush2.xpose.msra.mxu0 0.0
  %3357 = vmatprep.subr.mxu0 0.0
  %3358 = vmatpush2.xpose.msra.mxu0 0.0
  %3359 = vmatprep.subr.mxu0 0.0
  %3360 = vmatpush2.xpose.msra.mxu0 0.0
  %3361 = vmatprep.subr.mxu0 0.0
  %3362 = vmatpush2.xpose.msra.mxu0 0.0
  %3363 = vmatprep.subr.mxu0 0.0
  %3364 = vmatpush2.xpose.msra.mxu0 0.0
  %3365 = vmatprep.subr.mxu0 0.0
  %3366 = vmatpush2.xpose.msra.mxu0 0.0
  %3367 = vmatprep.subr.mxu0 0.0
  %3368 = vmatpush2.xpose.msra.mxu0 0.0
  %3369 = vmatprep.subr.mxu0 0.0
  %3370 = vmatpush2.xpose.msra.mxu0 0.0
  %3371 = vmatprep.subr.mxu0 0.0
  %3372 = vmatpush2.xpose.msra.mxu0 0.0
  %3373 = vmatprep.subr.mxu0 0.0
  %3374 = vmatpush2.xpose.msra.mxu0 0.0
  %3375 = vmatprep.subr.mxu0 0.0
  %3376 = vmatpush2.xpose.msra.mxu0 0.0
  %3377 = vmatprep.subr.mxu0 0.0
  %3378 = vmatpush2.xpose.msra.mxu0 0.0
  %3379 = vmatprep.subr.mxu0 0.0
  %3380 = vmatpush2.xpose.msra.mxu0 0.0
  %3381 = vmatprep.subr.mxu0 0.0
  %3382 = vmatpush2.xpose.msra.mxu0 0.0
  %3383 = vmatprep.mubr.f32.mxu0 0.0
  %v3384 = vand.u32 %v2709, 4294901760
  %3385 = vmatmul.mubr.f32.gmra.mxu0 %v3384
  %v3386 = vpop.f32.mrf.mxu0
  %v3387 = vadd.f32 %v3296, %v3386
  %v3388 = vpop.f32.mrf.mxu0
  %3389 = vmatprep.mubr.f32.mxu0 0.0
  %v3390 = vand.u32 %v2712, 4294901760
  %3391 = vmatmul.mubr.f32.gmra.mxu0 %v3390
  %v3392 = vpop.f32.mrf.mxu0
  %v3393 = vadd.f32 %v3306, %v3392
  %v3394 = vpop.f32.mrf.mxu0
  %3395 = vdwg.mxu0
  %3396 = vmatprep.subr.mxu0 0.0
  %3397 = vmatpush1.xpose.msra.mxu0 0.0
  %3398 = vmatprep.subr.mxu0 0.0
  %3399 = vmatpush1.xpose.msra.mxu0 0.0
  %3400 = vmatprep.subr.mxu0 0.0
  %3401 = vmatpush1.xpose.msra.mxu0 0.0
  %3402 = vmatprep.subr.mxu0 0.0
  %3403 = vmatpush1.xpose.msra.mxu0 0.0
  %3404 = vmatprep.subr.mxu0 0.0
  %3405 = vmatpush1.xpose.msra.mxu0 0.0
  %3406 = vmatprep.subr.mxu0 0.0
  %3407 = vmatpush1.xpose.msra.mxu0 0.0
  %3408 = vmatprep.subr.mxu0 0.0
  %3409 = vmatpush1.xpose.msra.mxu0 0.0
  %3410 = vmatprep.subr.mxu0 0.0
  %3411 = vmatpush1.xpose.msra.mxu0 0.0
  %3412 = vmatprep.subr.mxu0 0.0
  %3413 = vmatpush1.xpose.msra.mxu0 0.0
  %3414 = vmatprep.subr.mxu0 0.0
  %3415 = vmatpush1.xpose.msra.mxu0 0.0
  %3416 = vmatprep.subr.mxu0 0.0
  %3417 = vmatpush1.xpose.msra.mxu0 0.0
  %3418 = vmatprep.subr.mxu0 0.0
  %3419 = vmatpush1.xpose.msra.mxu0 0.0
  %3420 = vmatprep.subr.mxu0 0.0
  %3421 = vmatpush1.xpose.msra.mxu0 0.0
  %3422 = vmatprep.subr.mxu0 0.0
  %3423 = vmatpush1.xpose.msra.mxu0 0.0
  %3424 = vmatprep.subr.mxu0 0.0
  %v3425 = vand.u32 %v1108, 4294901760
  %v3426 = vsub.f32 %v1108, %v3425
  %3427 = vmatpush1.xpose.msra.mxu0 %v3426
  %3428 = vmatprep.subr.mxu0 0.0
  %v3429 = vand.u32 %v1105, 4294901760
  %v3430 = vsub.f32 %v1105, %v3429
  %3431 = vmatpush1.xpose.msra.mxu0 %v3430
  %3432 = vmatprep.subr.mxu0 0.0
  %3433 = vmatpush2.xpose.msra.mxu0 0.0
  %3434 = vmatprep.subr.mxu0 0.0
  %3435 = vmatpush2.xpose.msra.mxu0 0.0
  %3436 = vmatprep.subr.mxu0 0.0
  %3437 = vmatpush2.xpose.msra.mxu0 0.0
  %3438 = vmatprep.subr.mxu0 0.0
  %3439 = vmatpush2.xpose.msra.mxu0 0.0
  %3440 = vmatprep.subr.mxu0 0.0
  %3441 = vmatpush2.xpose.msra.mxu0 0.0
  %3442 = vmatprep.subr.mxu0 0.0
  %3443 = vmatpush2.xpose.msra.mxu0 0.0
  %3444 = vmatprep.subr.mxu0 0.0
  %3445 = vmatpush2.xpose.msra.mxu0 0.0
  %3446 = vmatprep.subr.mxu0 0.0
  %3447 = vmatpush2.xpose.msra.mxu0 0.0
  %3448 = vmatprep.subr.mxu0 0.0
  %3449 = vmatpush2.xpose.msra.mxu0 0.0
  %3450 = vmatprep.subr.mxu0 0.0
  %3451 = vmatpush2.xpose.msra.mxu0 0.0
  %3452 = vmatprep.subr.mxu0 0.0
  %3453 = vmatpush2.xpose.msra.mxu0 0.0
  %3454 = vmatprep.subr.mxu0 0.0
  %3455 = vmatpush2.xpose.msra.mxu0 0.0
  %3456 = vmatprep.subr.mxu0 0.0
  %3457 = vmatpush2.xpose.msra.mxu0 0.0
  %3458 = vmatprep.subr.mxu0 0.0
  %3459 = vmatpush2.xpose.msra.mxu0 0.0
  %3460 = vmatprep.subr.mxu0 0.0
  %3461 = vmatpush2.xpose.msra.mxu0 0.0
  %3462 = vmatprep.subr.mxu0 0.0
  %3463 = vmatpush2.xpose.msra.mxu0 0.0
  %3464 = vmatprep.mubr.f32.mxu0 0.0
  %v3465 = vand.u32 %v2709, 4294901760
  %v3466 = vsub.f32 %v2709, %v3465
  %3467 = vmatmul.mubr.f32.gmra.mxu0 %v3466
  %v3468 = vpop.f32.mrf.mxu0
  %v3469 = vadd.f32 %v3387, %v3468
  %v3470 = vpop.f32.mrf.mxu0
  %3471 = vmatprep.mubr.f32.mxu0 0.0
  %v3472 = vand.u32 %v2712, 4294901760
  %v3473 = vsub.f32 %v2712, %v3472
  %3474 = vmatmul.mubr.f32.gmra.mxu0 %v3473
  %v3475 = vpop.f32.mrf.mxu0
  %v3476 = vadd.f32 %v3393, %v3475
  %v3477 = vpop.f32.mrf.mxu0
  %3478 = vdwg.mxu0
  %3479 = vmatprep.subr.mxu0 0.0
  %3480 = vmatpush1.xpose.msra.mxu0 0.0
  %3481 = vmatprep.subr.mxu0 0.0
  %3482 = vmatpush1.xpose.msra.mxu0 0.0
  %3483 = vmatprep.subr.mxu0 0.0
  %3484 = vmatpush1.xpose.msra.mxu0 0.0
  %3485 = vmatprep.subr.mxu0 0.0
  %3486 = vmatpush1.xpose.msra.mxu0 0.0
  %3487 = vmatprep.subr.mxu0 0.0
  %3488 = vmatpush1.xpose.msra.mxu0 0.0
  %3489 = vmatprep.subr.mxu0 0.0
  %3490 = vmatpush1.xpose.msra.mxu0 0.0
  %3491 = vmatprep.subr.mxu0 0.0
  %3492 = vmatpush1.xpose.msra.mxu0 0.0
  %3493 = vmatprep.subr.mxu0 0.0
  %3494 = vmatpush1.xpose.msra.mxu0 0.0
  %3495 = vmatprep.subr.mxu0 0.0
  %3496 = vmatpush1.xpose.msra.mxu0 0.0
  %3497 = vmatprep.subr.mxu0 0.0
  %3498 = vmatpush1.xpose.msra.mxu0 0.0
  %3499 = vmatprep.subr.mxu0 0.0
  %3500 = vmatpush1.xpose.msra.mxu0 0.0
  %3501 = vmatprep.subr.mxu0 0.0
  %3502 = vmatpush1.xpose.msra.mxu0 0.0
  %3503 = vmatprep.subr.mxu0 0.0
  %3504 = vmatpush1.xpose.msra.mxu0 0.0
  %3505 = vmatprep.subr.mxu0 0.0
  %3506 = vmatpush1.xpose.msra.mxu0 0.0
  %3507 = vmatprep.subr.mxu0 0.0
  %v3508 = vand.u32 %v1108, 4294901760
  %3509 = vmatpush1.xpose.msra.mxu0 %v3508
  %3510 = vmatprep.subr.mxu0 0.0
  %v3511 = vand.u32 %v1105, 4294901760
  %3512 = vmatpush1.xpose.msra.mxu0 %v3511
  %3513 = vmatprep.subr.mxu0 0.0
  %3514 = vmatpush2.xpose.msra.mxu0 0.0
  %3515 = vmatprep.subr.mxu0 0.0
  %3516 = vmatpush2.xpose.msra.mxu0 0.0
  %3517 = vmatprep.subr.mxu0 0.0
  %3518 = vmatpush2.xpose.msra.mxu0 0.0
  %3519 = vmatprep.subr.mxu0 0.0
  %3520 = vmatpush2.xpose.msra.mxu0 0.0
  %3521 = vmatprep.subr.mxu0 0.0
  %3522 = vmatpush2.xpose.msra.mxu0 0.0
  %3523 = vmatprep.subr.mxu0 0.0
  %3524 = vmatpush2.xpose.msra.mxu0 0.0
  %3525 = vmatprep.subr.mxu0 0.0
  %3526 = vmatpush2.xpose.msra.mxu0 0.0
  %3527 = vmatprep.subr.mxu0 0.0
  %3528 = vmatpush2.xpose.msra.mxu0 0.0
  %3529 = vmatprep.subr.mxu0 0.0
  %3530 = vmatpush2.xpose.msra.mxu0 0.0
  %3531 = vmatprep.subr.mxu0 0.0
  %3532 = vmatpush2.xpose.msra.mxu0 0.0
  %3533 = vmatprep.subr.mxu0 0.0
  %3534 = vmatpush2.xpose.msra.mxu0 0.0
  %3535 = vmatprep.subr.mxu0 0.0
  %3536 = vmatpush2.xpose.msra.mxu0 0.0
  %3537 = vmatprep.subr.mxu0 0.0
  %3538 = vmatpush2.xpose.msra.mxu0 0.0
  %3539 = vmatprep.subr.mxu0 0.0
  %3540 = vmatpush2.xpose.msra.mxu0 0.0
  %3541 = vmatprep.subr.mxu0 0.0
  %3542 = vmatpush2.xpose.msra.mxu0 0.0
  %3543 = vmatprep.subr.mxu0 0.0
  %3544 = vmatpush2.xpose.msra.mxu0 0.0
  %3545 = vmatprep.mubr.f32.mxu0 0.0
  %v3546 = vand.u32 %v2709, 4294901760
  %v3547 = vsub.f32 %v2709, %v3546
  %v3548 = vand.u32 %v3547, 4294901760
  %3549 = vmatmul.mubr.f32.gmra.mxu0 %v3548
  %v3550 = vpop.f32.mrf.mxu0
  %v3551 = vadd.f32 %v3469, %v3550
  %v3552 = vpop.f32.mrf.mxu0
  %3553 = vmatprep.mubr.f32.mxu0 0.0
  %v3554 = vand.u32 %v2712, 4294901760
  %v3555 = vsub.f32 %v2712, %v3554
  %v3556 = vand.u32 %v3555, 4294901760
  %3557 = vmatmul.mubr.f32.gmra.mxu0 %v3556
  %v3558 = vpop.f32.mrf.mxu0
  %v3559 = vadd.f32 %v3476, %v3558
  %v3560 = vpop.f32.mrf.mxu0
  %3561 = vdwg.mxu0
  %3562 = vmatprep.subr.mxu0 0.0
  %3563 = vmatpush1.xpose.msra.mxu0 0.0
  %3564 = vmatprep.subr.mxu0 0.0
  %3565 = vmatpush1.xpose.msra.mxu0 0.0
  %3566 = vmatprep.subr.mxu0 0.0
  %3567 = vmatpush1.xpose.msra.mxu0 0.0
  %3568 = vmatprep.subr.mxu0 0.0
  %3569 = vmatpush1.xpose.msra.mxu0 0.0
  %3570 = vmatprep.subr.mxu0 0.0
  %3571 = vmatpush1.xpose.msra.mxu0 0.0
  %3572 = vmatprep.subr.mxu0 0.0
  %3573 = vmatpush1.xpose.msra.mxu0 0.0
  %3574 = vmatprep.subr.mxu0 0.0
  %3575 = vmatpush1.xpose.msra.mxu0 0.0
  %3576 = vmatprep.subr.mxu0 0.0
  %3577 = vmatpush1.xpose.msra.mxu0 0.0
  %3578 = vmatprep.subr.mxu0 0.0
  %3579 = vmatpush1.xpose.msra.mxu0 0.0
  %3580 = vmatprep.subr.mxu0 0.0
  %3581 = vmatpush1.xpose.msra.mxu0 0.0
  %3582 = vmatprep.subr.mxu0 0.0
  %3583 = vmatpush1.xpose.msra.mxu0 0.0
  %3584 = vmatprep.subr.mxu0 0.0
  %3585 = vmatpush1.xpose.msra.mxu0 0.0
  %3586 = vmatprep.subr.mxu0 0.0
  %3587 = vmatpush1.xpose.msra.mxu0 0.0
  %3588 = vmatprep.subr.mxu0 0.0
  %3589 = vmatpush1.xpose.msra.mxu0 0.0
  %3590 = vmatprep.subr.mxu0 0.0
  %v3591 = vand.u32 %v1108, 4294901760
  %v3592 = vsub.f32 %v1108, %v3591
  %v3593 = vand.u32 %v3592, 4294901760
  %3594 = vmatpush1.xpose.msra.mxu0 %v3593
  %3595 = vmatprep.subr.mxu0 0.0
  %v3596 = vand.u32 %v1105, 4294901760
  %v3597 = vsub.f32 %v1105, %v3596
  %v3598 = vand.u32 %v3597, 4294901760
  %3599 = vmatpush1.xpose.msra.mxu0 %v3598
  %3600 = vmatprep.subr.mxu0 0.0
  %3601 = vmatpush2.xpose.msra.mxu0 0.0
  %3602 = vmatprep.subr.mxu0 0.0
  %3603 = vmatpush2.xpose.msra.mxu0 0.0
  %3604 = vmatprep.subr.mxu0 0.0
  %3605 = vmatpush2.xpose.msra.mxu0 0.0
  %3606 = vmatprep.subr.mxu0 0.0
  %3607 = vmatpush2.xpose.msra.mxu0 0.0
  %3608 = vmatprep.subr.mxu0 0.0
  %3609 = vmatpush2.xpose.msra.mxu0 0.0
  %3610 = vmatprep.subr.mxu0 0.0
  %3611 = vmatpush2.xpose.msra.mxu0 0.0
  %3612 = vmatprep.subr.mxu0 0.0
  %3613 = vmatpush2.xpose.msra.mxu0 0.0
  %3614 = vmatprep.subr.mxu0 0.0
  %3615 = vmatpush2.xpose.msra.mxu0 0.0
  %3616 = vmatprep.subr.mxu0 0.0
  %3617 = vmatpush2.xpose.msra.mxu0 0.0
  %3618 = vmatprep.subr.mxu0 0.0
  %3619 = vmatpush2.xpose.msra.mxu0 0.0
  %3620 = vmatprep.subr.mxu0 0.0
  %3621 = vmatpush2.xpose.msra.mxu0 0.0
  %3622 = vmatprep.subr.mxu0 0.0
  %3623 = vmatpush2.xpose.msra.mxu0 0.0
  %3624 = vmatprep.subr.mxu0 0.0
  %3625 = vmatpush2.xpose.msra.mxu0 0.0
  %3626 = vmatprep.subr.mxu0 0.0
  %3627 = vmatpush2.xpose.msra.mxu0 0.0
  %3628 = vmatprep.subr.mxu0 0.0
  %3629 = vmatpush2.xpose.msra.mxu0 0.0
  %3630 = vmatprep.subr.mxu0 0.0
  %3631 = vmatpush2.xpose.msra.mxu0 0.0
  %3632 = vmatprep.mubr.f32.mxu0 0.0
  %v3633 = vand.u32 %v2709, 4294901760
  %3634 = vmatmul.mubr.f32.gmra.mxu0 %v3633
  %v3635 = vpop.f32.mrf.mxu0
  %v3636 = vadd.f32 %v3551, %v3635
  %v3637 = vpop.f32.mrf.mxu0
  %3638 = vmatprep.mubr.f32.mxu0 0.0
  %v3639 = vand.u32 %v2712, 4294901760
  %3640 = vmatmul.mubr.f32.gmra.mxu0 %v3639
  %v3641 = vpop.f32.mrf.mxu0
  %v3642 = vadd.f32 %v3559, %v3641
  %v3643 = vpop.f32.mrf.mxu0
  %3644 = vdwg.mxu0
  %3645 = vmatprep.subr.mxu0 0.0
  %3646 = vmatpush1.xpose.msra.mxu0 0.0
  %3647 = vmatprep.subr.mxu0 0.0
  %3648 = vmatpush1.xpose.msra.mxu0 0.0
  %3649 = vmatprep.subr.mxu0 0.0
  %3650 = vmatpush1.xpose.msra.mxu0 0.0
  %3651 = vmatprep.subr.mxu0 0.0
  %3652 = vmatpush1.xpose.msra.mxu0 0.0
  %3653 = vmatprep.subr.mxu0 0.0
  %3654 = vmatpush1.xpose.msra.mxu0 0.0
  %3655 = vmatprep.subr.mxu0 0.0
  %3656 = vmatpush1.xpose.msra.mxu0 0.0
  %3657 = vmatprep.subr.mxu0 0.0
  %3658 = vmatpush1.xpose.msra.mxu0 0.0
  %3659 = vmatprep.subr.mxu0 0.0
  %3660 = vmatpush1.xpose.msra.mxu0 0.0
  %3661 = vmatprep.subr.mxu0 0.0
  %3662 = vmatpush1.xpose.msra.mxu0 0.0
  %3663 = vmatprep.subr.mxu0 0.0
  %3664 = vmatpush1.xpose.msra.mxu0 0.0
  %3665 = vmatprep.subr.mxu0 0.0
  %3666 = vmatpush1.xpose.msra.mxu0 0.0
  %3667 = vmatprep.subr.mxu0 0.0
  %3668 = vmatpush1.xpose.msra.mxu0 0.0
  %3669 = vmatprep.subr.mxu0 0.0
  %3670 = vmatpush1.xpose.msra.mxu0 0.0
  %3671 = vmatprep.subr.mxu0 0.0
  %3672 = vmatpush1.xpose.msra.mxu0 0.0
  %3673 = vmatprep.subr.mxu0 0.0
  %v3674 = vand.u32 %v1108, 4294901760
  %3675 = vmatpush1.xpose.msra.mxu0 %v3674
  %3676 = vmatprep.subr.mxu0 0.0
  %v3677 = vand.u32 %v1105, 4294901760
  %3678 = vmatpush1.xpose.msra.mxu0 %v3677
  %3679 = vmatprep.subr.mxu0 0.0
  %3680 = vmatpush2.xpose.msra.mxu0 0.0
  %3681 = vmatprep.subr.mxu0 0.0
  %3682 = vmatpush2.xpose.msra.mxu0 0.0
  %3683 = vmatprep.subr.mxu0 0.0
  %3684 = vmatpush2.xpose.msra.mxu0 0.0
  %3685 = vmatprep.subr.mxu0 0.0
  %3686 = vmatpush2.xpose.msra.mxu0 0.0
  %3687 = vmatprep.subr.mxu0 0.0
  %3688 = vmatpush2.xpose.msra.mxu0 0.0
  %3689 = vmatprep.subr.mxu0 0.0
  %3690 = vmatpush2.xpose.msra.mxu0 0.0
  %3691 = vmatprep.subr.mxu0 0.0
  %3692 = vmatpush2.xpose.msra.mxu0 0.0
  %3693 = vmatprep.subr.mxu0 0.0
  %3694 = vmatpush2.xpose.msra.mxu0 0.0
  %3695 = vmatprep.subr.mxu0 0.0
  %3696 = vmatpush2.xpose.msra.mxu0 0.0
  %3697 = vmatprep.subr.mxu0 0.0
  %3698 = vmatpush2.xpose.msra.mxu0 0.0
  %3699 = vmatprep.subr.mxu0 0.0
  %3700 = vmatpush2.xpose.msra.mxu0 0.0
  %3701 = vmatprep.subr.mxu0 0.0
  %3702 = vmatpush2.xpose.msra.mxu0 0.0
  %3703 = vmatprep.subr.mxu0 0.0
  %3704 = vmatpush2.xpose.msra.mxu0 0.0
  %3705 = vmatprep.subr.mxu0 0.0
  %3706 = vmatpush2.xpose.msra.mxu0 0.0
  %3707 = vmatprep.subr.mxu0 0.0
  %3708 = vmatpush2.xpose.msra.mxu0 0.0
  %3709 = vmatprep.subr.mxu0 0.0
  %3710 = vmatpush2.xpose.msra.mxu0 0.0
  %3711 = vmatprep.mubr.f32.mxu0 0.0
  %v3712 = vand.u32 %v2709, 4294901760
  %3713 = vmatmul.mubr.f32.gmra.mxu0 %v3712
  %v3714 = vpop.f32.mrf.mxu0
  %v3715 = vadd.f32 %v3636, %v3714
  %v3716 = vpop.f32.mrf.mxu0
  %3717 = vmatprep.mubr.f32.mxu0 0.0
  %v3718 = vand.u32 %v2712, 4294901760
  %3719 = vmatmul.mubr.f32.gmra.mxu0 %v3718
  %v3720 = vpop.f32.mrf.mxu0
  %v3721 = vadd.f32 %v3642, %v3720
  %v3722 = vpop.f32.mrf.mxu0
  %3723 = vdwg.mxu0
  %v3725 = vsel %vm56, %v2700, 0
  %v3728 = vsel %vm56, %v2701, 0
  %3730 = vmatprep.subr.mxu0 0.0
  %3731 = vmatpush1.xpose.msra.mxu0 0.0
  %3732 = vmatprep.subr.mxu0 0.0
  %3733 = vmatpush1.xpose.msra.mxu0 0.0
  %3734 = vmatprep.subr.mxu0 0.0
  %3735 = vmatpush1.xpose.msra.mxu0 0.0
  %3736 = vmatprep.subr.mxu0 0.0
  %3737 = vmatpush1.xpose.msra.mxu0 0.0
  %3738 = vmatprep.subr.mxu0 0.0
  %3739 = vmatpush1.xpose.msra.mxu0 0.0
  %3740 = vmatprep.subr.mxu0 0.0
  %3741 = vmatpush1.xpose.msra.mxu0 0.0
  %3742 = vmatprep.subr.mxu0 0.0
  %3743 = vmatpush1.xpose.msra.mxu0 0.0
  %3744 = vmatprep.subr.mxu0 0.0
  %3745 = vmatpush1.xpose.msra.mxu0 0.0
  %3746 = vmatprep.subr.mxu0 0.0
  %3747 = vmatpush1.xpose.msra.mxu0 0.0
  %3748 = vmatprep.subr.mxu0 0.0
  %3749 = vmatpush1.xpose.msra.mxu0 0.0
  %3750 = vmatprep.subr.mxu0 0.0
  %3751 = vmatpush1.xpose.msra.mxu0 0.0
  %3752 = vmatprep.subr.mxu0 0.0
  %3753 = vmatpush1.xpose.msra.mxu0 0.0
  %3754 = vmatprep.subr.mxu0 0.0
  %3755 = vmatpush1.xpose.msra.mxu0 0.0
  %3756 = vmatprep.subr.mxu0 0.0
  %3757 = vmatpush1.xpose.msra.mxu0 0.0
  %3758 = vmatprep.subr.mxu0 0.0
  %v3759 = vand.u32 %v2712, 4294901760
  %3760 = vmatpush1.xpose.msra.mxu0 %v3759
  %3761 = vmatprep.subr.mxu0 0.0
  %v3762 = vand.u32 %v2709, 4294901760
  %3763 = vmatpush1.xpose.msra.mxu0 %v3762
  %3764 = vmatprep.subr.mxu0 0.0
  %3765 = vmatpush2.xpose.msra.mxu0 0.0
  %3766 = vmatprep.subr.mxu0 0.0
  %3767 = vmatpush2.xpose.msra.mxu0 0.0
  %3768 = vmatprep.subr.mxu0 0.0
  %3769 = vmatpush2.xpose.msra.mxu0 0.0
  %3770 = vmatprep.subr.mxu0 0.0
  %3771 = vmatpush2.xpose.msra.mxu0 0.0
  %3772 = vmatprep.subr.mxu0 0.0
  %3773 = vmatpush2.xpose.msra.mxu0 0.0
  %3774 = vmatprep.subr.mxu0 0.0
  %3775 = vmatpush2.xpose.msra.mxu0 0.0
  %3776 = vmatprep.subr.mxu0 0.0
  %3777 = vmatpush2.xpose.msra.mxu0 0.0
  %3778 = vmatprep.subr.mxu0 0.0
  %3779 = vmatpush2.xpose.msra.mxu0 0.0
  %3780 = vmatprep.subr.mxu0 0.0
  %3781 = vmatpush2.xpose.msra.mxu0 0.0
  %3782 = vmatprep.subr.mxu0 0.0
  %3783 = vmatpush2.xpose.msra.mxu0 0.0
  %3784 = vmatprep.subr.mxu0 0.0
  %3785 = vmatpush2.xpose.msra.mxu0 0.0
  %3786 = vmatprep.subr.mxu0 0.0
  %3787 = vmatpush2.xpose.msra.mxu0 0.0
  %3788 = vmatprep.subr.mxu0 0.0
  %3789 = vmatpush2.xpose.msra.mxu0 0.0
  %3790 = vmatprep.subr.mxu0 0.0
  %3791 = vmatpush2.xpose.msra.mxu0 0.0
  %3792 = vmatprep.subr.mxu0 0.0
  %3793 = vmatpush2.xpose.msra.mxu0 0.0
  %3794 = vmatprep.subr.mxu0 0.0
  %3795 = vmatpush2.xpose.msra.mxu0 0.0
  %3796 = vmatprep.mubr.f32.mxu0 0.0
  %v3797 = vand.u32 %v3725, 4294901760
  %v3798 = vsub.f32 %v3725, %v3797
  %v3799 = vand.u32 %v3798, 4294901760
  %v3800 = vsub.f32 %v3798, %v3799
  %v3801 = vand.u32 %v3800, 4294901760
  %3802 = vmatmul.mubr.f32.gmra.mxu0 %v3801
  %v3803 = vpop.f32.mrf.mxu0
  %v3804 = vadd.f32 %v3213, %v3803
  %v3805 = vpop.f32.mrf.mxu0
  %3806 = vmatprep.mubr.f32.mxu0 0.0
  %v3807 = vand.u32 %v3728, 4294901760
  %v3808 = vsub.f32 %v3728, %v3807
  %v3809 = vand.u32 %v3808, 4294901760
  %v3810 = vsub.f32 %v3808, %v3809
  %v3811 = vand.u32 %v3810, 4294901760
  %3812 = vmatmul.mubr.f32.gmra.mxu0 %v3811
  %v3813 = vpop.f32.mrf.mxu0
  %v3814 = vadd.f32 %v3219, %v3813
  %v3815 = vpop.f32.mrf.mxu0
  %3816 = vdwg.mxu0
  %3817 = vmatprep.subr.mxu0 0.0
  %3818 = vmatpush1.xpose.msra.mxu0 0.0
  %3819 = vmatprep.subr.mxu0 0.0
  %3820 = vmatpush1.xpose.msra.mxu0 0.0
  %3821 = vmatprep.subr.mxu0 0.0
  %3822 = vmatpush1.xpose.msra.mxu0 0.0
  %3823 = vmatprep.subr.mxu0 0.0
  %3824 = vmatpush1.xpose.msra.mxu0 0.0
  %3825 = vmatprep.subr.mxu0 0.0
  %3826 = vmatpush1.xpose.msra.mxu0 0.0
  %3827 = vmatprep.subr.mxu0 0.0
  %3828 = vmatpush1.xpose.msra.mxu0 0.0
  %3829 = vmatprep.subr.mxu0 0.0
  %3830 = vmatpush1.xpose.msra.mxu0 0.0
  %3831 = vmatprep.subr.mxu0 0.0
  %3832 = vmatpush1.xpose.msra.mxu0 0.0
  %3833 = vmatprep.subr.mxu0 0.0
  %3834 = vmatpush1.xpose.msra.mxu0 0.0
  %3835 = vmatprep.subr.mxu0 0.0
  %3836 = vmatpush1.xpose.msra.mxu0 0.0
  %3837 = vmatprep.subr.mxu0 0.0
  %3838 = vmatpush1.xpose.msra.mxu0 0.0
  %3839 = vmatprep.subr.mxu0 0.0
  %3840 = vmatpush1.xpose.msra.mxu0 0.0
  %3841 = vmatprep.subr.mxu0 0.0
  %3842 = vmatpush1.xpose.msra.mxu0 0.0
  %3843 = vmatprep.subr.mxu0 0.0
  %3844 = vmatpush1.xpose.msra.mxu0 0.0
  %3845 = vmatprep.subr.mxu0 0.0
  %v3846 = vand.u32 %v2712, 4294901760
  %v3847 = vsub.f32 %v2712, %v3846
  %v3848 = vand.u32 %v3847, 4294901760
  %v3849 = vsub.f32 %v3847, %v3848
  %v3850 = vand.u32 %v3849, 4294901760
  %3851 = vmatpush1.xpose.msra.mxu0 %v3850
  %3852 = vmatprep.subr.mxu0 0.0
  %v3853 = vand.u32 %v2709, 4294901760
  %v3854 = vsub.f32 %v2709, %v3853
  %v3855 = vand.u32 %v3854, 4294901760
  %v3856 = vsub.f32 %v3854, %v3855
  %v3857 = vand.u32 %v3856, 4294901760
  %3858 = vmatpush1.xpose.msra.mxu0 %v3857
  %3859 = vmatprep.subr.mxu0 0.0
  %3860 = vmatpush2.xpose.msra.mxu0 0.0
  %3861 = vmatprep.subr.mxu0 0.0
  %3862 = vmatpush2.xpose.msra.mxu0 0.0
  %3863 = vmatprep.subr.mxu0 0.0
  %3864 = vmatpush2.xpose.msra.mxu0 0.0
  %3865 = vmatprep.subr.mxu0 0.0
  %3866 = vmatpush2.xpose.msra.mxu0 0.0
  %3867 = vmatprep.subr.mxu0 0.0
  %3868 = vmatpush2.xpose.msra.mxu0 0.0
  %3869 = vmatprep.subr.mxu0 0.0
  %3870 = vmatpush2.xpose.msra.mxu0 0.0
  %3871 = vmatprep.subr.mxu0 0.0
  %3872 = vmatpush2.xpose.msra.mxu0 0.0
  %3873 = vmatprep.subr.mxu0 0.0
  %3874 = vmatpush2.xpose.msra.mxu0 0.0
  %3875 = vmatprep.subr.mxu0 0.0
  %3876 = vmatpush2.xpose.msra.mxu0 0.0
  %3877 = vmatprep.subr.mxu0 0.0
  %3878 = vmatpush2.xpose.msra.mxu0 0.0
  %3879 = vmatprep.subr.mxu0 0.0
  %3880 = vmatpush2.xpose.msra.mxu0 0.0
  %3881 = vmatprep.subr.mxu0 0.0
  %3882 = vmatpush2.xpose.msra.mxu0 0.0
  %3883 = vmatprep.subr.mxu0 0.0
  %3884 = vmatpush2.xpose.msra.mxu0 0.0
  %3885 = vmatprep.subr.mxu0 0.0
  %3886 = vmatpush2.xpose.msra.mxu0 0.0
  %3887 = vmatprep.subr.mxu0 0.0
  %3888 = vmatpush2.xpose.msra.mxu0 0.0
  %3889 = vmatprep.subr.mxu0 0.0
  %3890 = vmatpush2.xpose.msra.mxu0 0.0
  %3891 = vmatprep.mubr.f32.mxu0 0.0
  %v3892 = vand.u32 %v3725, 4294901760
  %3893 = vmatmul.mubr.f32.gmra.mxu0 %v3892
  %v3894 = vpop.f32.mrf.mxu0
  %v3895 = vadd.f32 %v3804, %v3894
  %v3896 = vpop.f32.mrf.mxu0
  %3897 = vmatprep.mubr.f32.mxu0 0.0
  %v3898 = vand.u32 %v3728, 4294901760
  %3899 = vmatmul.mubr.f32.gmra.mxu0 %v3898
  %v3900 = vpop.f32.mrf.mxu0
  %v3901 = vadd.f32 %v3814, %v3900
  %v3902 = vpop.f32.mrf.mxu0
  %3903 = vdwg.mxu0
  %3904 = vmatprep.subr.mxu0 0.0
  %3905 = vmatpush1.xpose.msra.mxu0 0.0
  %3906 = vmatprep.subr.mxu0 0.0
  %3907 = vmatpush1.xpose.msra.mxu0 0.0
  %3908 = vmatprep.subr.mxu0 0.0
  %3909 = vmatpush1.xpose.msra.mxu0 0.0
  %3910 = vmatprep.subr.mxu0 0.0
  %3911 = vmatpush1.xpose.msra.mxu0 0.0
  %3912 = vmatprep.subr.mxu0 0.0
  %3913 = vmatpush1.xpose.msra.mxu0 0.0
  %3914 = vmatprep.subr.mxu0 0.0
  %3915 = vmatpush1.xpose.msra.mxu0 0.0
  %3916 = vmatprep.subr.mxu0 0.0
  %3917 = vmatpush1.xpose.msra.mxu0 0.0
  %3918 = vmatprep.subr.mxu0 0.0
  %3919 = vmatpush1.xpose.msra.mxu0 0.0
  %3920 = vmatprep.subr.mxu0 0.0
  %3921 = vmatpush1.xpose.msra.mxu0 0.0
  %3922 = vmatprep.subr.mxu0 0.0
  %3923 = vmatpush1.xpose.msra.mxu0 0.0
  %3924 = vmatprep.subr.mxu0 0.0
  %3925 = vmatpush1.xpose.msra.mxu0 0.0
  %3926 = vmatprep.subr.mxu0 0.0
  %3927 = vmatpush1.xpose.msra.mxu0 0.0
  %3928 = vmatprep.subr.mxu0 0.0
  %3929 = vmatpush1.xpose.msra.mxu0 0.0
  %3930 = vmatprep.subr.mxu0 0.0
  %3931 = vmatpush1.xpose.msra.mxu0 0.0
  %3932 = vmatprep.subr.mxu0 0.0
  %v3933 = vand.u32 %v2712, 4294901760
  %v3934 = vsub.f32 %v2712, %v3933
  %3935 = vmatpush1.xpose.msra.mxu0 %v3934
  %3936 = vmatprep.subr.mxu0 0.0
  %v3937 = vand.u32 %v2709, 4294901760
  %v3938 = vsub.f32 %v2709, %v3937
  %3939 = vmatpush1.xpose.msra.mxu0 %v3938
  %3940 = vmatprep.subr.mxu0 0.0
  %3941 = vmatpush2.xpose.msra.mxu0 0.0
  %3942 = vmatprep.subr.mxu0 0.0
  %3943 = vmatpush2.xpose.msra.mxu0 0.0
  %3944 = vmatprep.subr.mxu0 0.0
  %3945 = vmatpush2.xpose.msra.mxu0 0.0
  %3946 = vmatprep.subr.mxu0 0.0
  %3947 = vmatpush2.xpose.msra.mxu0 0.0
  %3948 = vmatprep.subr.mxu0 0.0
  %3949 = vmatpush2.xpose.msra.mxu0 0.0
  %3950 = vmatprep.subr.mxu0 0.0
  %3951 = vmatpush2.xpose.msra.mxu0 0.0
  %3952 = vmatprep.subr.mxu0 0.0
  %3953 = vmatpush2.xpose.msra.mxu0 0.0
  %3954 = vmatprep.subr.mxu0 0.0
  %3955 = vmatpush2.xpose.msra.mxu0 0.0
  %3956 = vmatprep.subr.mxu0 0.0
  %3957 = vmatpush2.xpose.msra.mxu0 0.0
  %3958 = vmatprep.subr.mxu0 0.0
  %3959 = vmatpush2.xpose.msra.mxu0 0.0
  %3960 = vmatprep.subr.mxu0 0.0
  %3961 = vmatpush2.xpose.msra.mxu0 0.0
  %3962 = vmatprep.subr.mxu0 0.0
  %3963 = vmatpush2.xpose.msra.mxu0 0.0
  %3964 = vmatprep.subr.mxu0 0.0
  %3965 = vmatpush2.xpose.msra.mxu0 0.0
  %3966 = vmatprep.subr.mxu0 0.0
  %3967 = vmatpush2.xpose.msra.mxu0 0.0
  %3968 = vmatprep.subr.mxu0 0.0
  %3969 = vmatpush2.xpose.msra.mxu0 0.0
  %3970 = vmatprep.subr.mxu0 0.0
  %3971 = vmatpush2.xpose.msra.mxu0 0.0
  %3972 = vmatprep.mubr.f32.mxu0 0.0
  %v3973 = vand.u32 %v3725, 4294901760
  %v3974 = vsub.f32 %v3725, %v3973
  %3975 = vmatmul.mubr.f32.gmra.mxu0 %v3974
  %v3976 = vpop.f32.mrf.mxu0
  %v3977 = vadd.f32 %v3895, %v3976
  %v3978 = vpop.f32.mrf.mxu0
  %3979 = vmatprep.mubr.f32.mxu0 0.0
  %v3980 = vand.u32 %v3728, 4294901760
  %v3981 = vsub.f32 %v3728, %v3980
  %3982 = vmatmul.mubr.f32.gmra.mxu0 %v3981
  %v3983 = vpop.f32.mrf.mxu0
  %v3984 = vadd.f32 %v3901, %v3983
  %v3985 = vpop.f32.mrf.mxu0
  %3986 = vdwg.mxu0
  %3987 = vmatprep.subr.mxu0 0.0
  %3988 = vmatpush1.xpose.msra.mxu0 0.0
  %3989 = vmatprep.subr.mxu0 0.0
  %3990 = vmatpush1.xpose.msra.mxu0 0.0
  %3991 = vmatprep.subr.mxu0 0.0
  %3992 = vmatpush1.xpose.msra.mxu0 0.0
  %3993 = vmatprep.subr.mxu0 0.0
  %3994 = vmatpush1.xpose.msra.mxu0 0.0
  %3995 = vmatprep.subr.mxu0 0.0
  %3996 = vmatpush1.xpose.msra.mxu0 0.0
  %3997 = vmatprep.subr.mxu0 0.0
  %3998 = vmatpush1.xpose.msra.mxu0 0.0
  %3999 = vmatprep.subr.mxu0 0.0
  %4000 = vmatpush1.xpose.msra.mxu0 0.0
  %4001 = vmatprep.subr.mxu0 0.0
  %4002 = vmatpush1.xpose.msra.mxu0 0.0
  %4003 = vmatprep.subr.mxu0 0.0
  %4004 = vmatpush1.xpose.msra.mxu0 0.0
  %4005 = vmatprep.subr.mxu0 0.0
  %4006 = vmatpush1.xpose.msra.mxu0 0.0
  %4007 = vmatprep.subr.mxu0 0.0
  %4008 = vmatpush1.xpose.msra.mxu0 0.0
  %4009 = vmatprep.subr.mxu0 0.0
  %4010 = vmatpush1.xpose.msra.mxu0 0.0
  %4011 = vmatprep.subr.mxu0 0.0
  %4012 = vmatpush1.xpose.msra.mxu0 0.0
  %4013 = vmatprep.subr.mxu0 0.0
  %4014 = vmatpush1.xpose.msra.mxu0 0.0
  %4015 = vmatprep.subr.mxu0 0.0
  %v4016 = vand.u32 %v2712, 4294901760
  %4017 = vmatpush1.xpose.msra.mxu0 %v4016
  %4018 = vmatprep.subr.mxu0 0.0
  %v4019 = vand.u32 %v2709, 4294901760
  %4020 = vmatpush1.xpose.msra.mxu0 %v4019
  %4021 = vmatprep.subr.mxu0 0.0
  %4022 = vmatpush2.xpose.msra.mxu0 0.0
  %4023 = vmatprep.subr.mxu0 0.0
  %4024 = vmatpush2.xpose.msra.mxu0 0.0
  %4025 = vmatprep.subr.mxu0 0.0
  %4026 = vmatpush2.xpose.msra.mxu0 0.0
  %4027 = vmatprep.subr.mxu0 0.0
  %4028 = vmatpush2.xpose.msra.mxu0 0.0
  %4029 = vmatprep.subr.mxu0 0.0
  %4030 = vmatpush2.xpose.msra.mxu0 0.0
  %4031 = vmatprep.subr.mxu0 0.0
  %4032 = vmatpush2.xpose.msra.mxu0 0.0
  %4033 = vmatprep.subr.mxu0 0.0
  %4034 = vmatpush2.xpose.msra.mxu0 0.0
  %4035 = vmatprep.subr.mxu0 0.0
  %4036 = vmatpush2.xpose.msra.mxu0 0.0
  %4037 = vmatprep.subr.mxu0 0.0
  %4038 = vmatpush2.xpose.msra.mxu0 0.0
  %4039 = vmatprep.subr.mxu0 0.0
  %4040 = vmatpush2.xpose.msra.mxu0 0.0
  %4041 = vmatprep.subr.mxu0 0.0
  %4042 = vmatpush2.xpose.msra.mxu0 0.0
  %4043 = vmatprep.subr.mxu0 0.0
  %4044 = vmatpush2.xpose.msra.mxu0 0.0
  %4045 = vmatprep.subr.mxu0 0.0
  %4046 = vmatpush2.xpose.msra.mxu0 0.0
  %4047 = vmatprep.subr.mxu0 0.0
  %4048 = vmatpush2.xpose.msra.mxu0 0.0
  %4049 = vmatprep.subr.mxu0 0.0
  %4050 = vmatpush2.xpose.msra.mxu0 0.0
  %4051 = vmatprep.subr.mxu0 0.0
  %4052 = vmatpush2.xpose.msra.mxu0 0.0
  %4053 = vmatprep.mubr.f32.mxu0 0.0
  %v4054 = vand.u32 %v3725, 4294901760
  %v4055 = vsub.f32 %v3725, %v4054
  %v4056 = vand.u32 %v4055, 4294901760
  %4057 = vmatmul.mubr.f32.gmra.mxu0 %v4056
  %v4058 = vpop.f32.mrf.mxu0
  %v4059 = vadd.f32 %v3977, %v4058
  %v4060 = vpop.f32.mrf.mxu0
  %4061 = vmatprep.mubr.f32.mxu0 0.0
  %v4062 = vand.u32 %v3728, 4294901760
  %v4063 = vsub.f32 %v3728, %v4062
  %v4064 = vand.u32 %v4063, 4294901760
  %4065 = vmatmul.mubr.f32.gmra.mxu0 %v4064
  %v4066 = vpop.f32.mrf.mxu0
  %v4067 = vadd.f32 %v3984, %v4066
  %v4068 = vpop.f32.mrf.mxu0
  %4069 = vdwg.mxu0
  %4070 = vmatprep.subr.mxu0 0.0
  %4071 = vmatpush1.xpose.msra.mxu0 0.0
  %4072 = vmatprep.subr.mxu0 0.0
  %4073 = vmatpush1.xpose.msra.mxu0 0.0
  %4074 = vmatprep.subr.mxu0 0.0
  %4075 = vmatpush1.xpose.msra.mxu0 0.0
  %4076 = vmatprep.subr.mxu0 0.0
  %4077 = vmatpush1.xpose.msra.mxu0 0.0
  %4078 = vmatprep.subr.mxu0 0.0
  %4079 = vmatpush1.xpose.msra.mxu0 0.0
  %4080 = vmatprep.subr.mxu0 0.0
  %4081 = vmatpush1.xpose.msra.mxu0 0.0
  %4082 = vmatprep.subr.mxu0 0.0
  %4083 = vmatpush1.xpose.msra.mxu0 0.0
  %4084 = vmatprep.subr.mxu0 0.0
  %4085 = vmatpush1.xpose.msra.mxu0 0.0
  %4086 = vmatprep.subr.mxu0 0.0
  %4087 = vmatpush1.xpose.msra.mxu0 0.0
  %4088 = vmatprep.subr.mxu0 0.0
  %4089 = vmatpush1.xpose.msra.mxu0 0.0
  %4090 = vmatprep.subr.mxu0 0.0
  %4091 = vmatpush1.xpose.msra.mxu0 0.0
  %4092 = vmatprep.subr.mxu0 0.0
  %4093 = vmatpush1.xpose.msra.mxu0 0.0
  %4094 = vmatprep.subr.mxu0 0.0
  %4095 = vmatpush1.xpose.msra.mxu0 0.0
  %4096 = vmatprep.subr.mxu0 0.0
  %4097 = vmatpush1.xpose.msra.mxu0 0.0
  %4098 = vmatprep.subr.mxu0 0.0
  %v4099 = vand.u32 %v2712, 4294901760
  %v4100 = vsub.f32 %v2712, %v4099
  %v4101 = vand.u32 %v4100, 4294901760
  %4102 = vmatpush1.xpose.msra.mxu0 %v4101
  %4103 = vmatprep.subr.mxu0 0.0
  %v4104 = vand.u32 %v2709, 4294901760
  %v4105 = vsub.f32 %v2709, %v4104
  %v4106 = vand.u32 %v4105, 4294901760
  %4107 = vmatpush1.xpose.msra.mxu0 %v4106
  %4108 = vmatprep.subr.mxu0 0.0
  %4109 = vmatpush2.xpose.msra.mxu0 0.0
  %4110 = vmatprep.subr.mxu0 0.0
  %4111 = vmatpush2.xpose.msra.mxu0 0.0
  %4112 = vmatprep.subr.mxu0 0.0
  %4113 = vmatpush2.xpose.msra.mxu0 0.0
  %4114 = vmatprep.subr.mxu0 0.0
  %4115 = vmatpush2.xpose.msra.mxu0 0.0
  %4116 = vmatprep.subr.mxu0 0.0
  %4117 = vmatpush2.xpose.msra.mxu0 0.0
  %4118 = vmatprep.subr.mxu0 0.0
  %4119 = vmatpush2.xpose.msra.mxu0 0.0
  %4120 = vmatprep.subr.mxu0 0.0
  %4121 = vmatpush2.xpose.msra.mxu0 0.0
  %4122 = vmatprep.subr.mxu0 0.0
  %4123 = vmatpush2.xpose.msra.mxu0 0.0
  %4124 = vmatprep.subr.mxu0 0.0
  %4125 = vmatpush2.xpose.msra.mxu0 0.0
  %4126 = vmatprep.subr.mxu0 0.0
  %4127 = vmatpush2.xpose.msra.mxu0 0.0
  %4128 = vmatprep.subr.mxu0 0.0
  %4129 = vmatpush2.xpose.msra.mxu0 0.0
  %4130 = vmatprep.subr.mxu0 0.0
  %4131 = vmatpush2.xpose.msra.mxu0 0.0
  %4132 = vmatprep.subr.mxu0 0.0
  %4133 = vmatpush2.xpose.msra.mxu0 0.0
  %4134 = vmatprep.subr.mxu0 0.0
  %4135 = vmatpush2.xpose.msra.mxu0 0.0
  %4136 = vmatprep.subr.mxu0 0.0
  %4137 = vmatpush2.xpose.msra.mxu0 0.0
  %4138 = vmatprep.subr.mxu0 0.0
  %4139 = vmatpush2.xpose.msra.mxu0 0.0
  %4140 = vmatprep.mubr.f32.mxu0 0.0
  %v4141 = vand.u32 %v3725, 4294901760
  %4142 = vmatmul.mubr.f32.gmra.mxu0 %v4141
  %v4143 = vpop.f32.mrf.mxu0
  %v4144 = vadd.f32 %v4059, %v4143
  %v4145 = vpop.f32.mrf.mxu0
  %4146 = vmatprep.mubr.f32.mxu0 0.0
  %v4147 = vand.u32 %v3728, 4294901760
  %4148 = vmatmul.mubr.f32.gmra.mxu0 %v4147
  %v4149 = vpop.f32.mrf.mxu0
  %v4150 = vadd.f32 %v4067, %v4149
  %v4151 = vpop.f32.mrf.mxu0
  %4152 = vdwg.mxu0
  %4153 = vmatprep.subr.mxu0 0.0
  %4154 = vmatpush1.xpose.msra.mxu0 0.0
  %4155 = vmatprep.subr.mxu0 0.0
  %4156 = vmatpush1.xpose.msra.mxu0 0.0
  %4157 = vmatprep.subr.mxu0 0.0
  %4158 = vmatpush1.xpose.msra.mxu0 0.0
  %4159 = vmatprep.subr.mxu0 0.0
  %4160 = vmatpush1.xpose.msra.mxu0 0.0
  %4161 = vmatprep.subr.mxu0 0.0
  %4162 = vmatpush1.xpose.msra.mxu0 0.0
  %4163 = vmatprep.subr.mxu0 0.0
  %4164 = vmatpush1.xpose.msra.mxu0 0.0
  %4165 = vmatprep.subr.mxu0 0.0
  %4166 = vmatpush1.xpose.msra.mxu0 0.0
  %4167 = vmatprep.subr.mxu0 0.0
  %4168 = vmatpush1.xpose.msra.mxu0 0.0
  %4169 = vmatprep.subr.mxu0 0.0
  %4170 = vmatpush1.xpose.msra.mxu0 0.0
  %4171 = vmatprep.subr.mxu0 0.0
  %4172 = vmatpush1.xpose.msra.mxu0 0.0
  %4173 = vmatprep.subr.mxu0 0.0
  %4174 = vmatpush1.xpose.msra.mxu0 0.0
  %4175 = vmatprep.subr.mxu0 0.0
  %4176 = vmatpush1.xpose.msra.mxu0 0.0
  %4177 = vmatprep.subr.mxu0 0.0
  %4178 = vmatpush1.xpose.msra.mxu0 0.0
  %4179 = vmatprep.subr.mxu0 0.0
  %4180 = vmatpush1.xpose.msra.mxu0 0.0
  %4181 = vmatprep.subr.mxu0 0.0
  %v4182 = vand.u32 %v2712, 4294901760
  %4183 = vmatpush1.xpose.msra.mxu0 %v4182
  %4184 = vmatprep.subr.mxu0 0.0
  %v4185 = vand.u32 %v2709, 4294901760
  %4186 = vmatpush1.xpose.msra.mxu0 %v4185
  %4187 = vmatprep.subr.mxu0 0.0
  %4188 = vmatpush2.xpose.msra.mxu0 0.0
  %4189 = vmatprep.subr.mxu0 0.0
  %4190 = vmatpush2.xpose.msra.mxu0 0.0
  %4191 = vmatprep.subr.mxu0 0.0
  %4192 = vmatpush2.xpose.msra.mxu0 0.0
  %4193 = vmatprep.subr.mxu0 0.0
  %4194 = vmatpush2.xpose.msra.mxu0 0.0
  %4195 = vmatprep.subr.mxu0 0.0
  %4196 = vmatpush2.xpose.msra.mxu0 0.0
  %4197 = vmatprep.subr.mxu0 0.0
  %4198 = vmatpush2.xpose.msra.mxu0 0.0
  %4199 = vmatprep.subr.mxu0 0.0
  %4200 = vmatpush2.xpose.msra.mxu0 0.0
  %4201 = vmatprep.subr.mxu0 0.0
  %4202 = vmatpush2.xpose.msra.mxu0 0.0
  %4203 = vmatprep.subr.mxu0 0.0
  %4204 = vmatpush2.xpose.msra.mxu0 0.0
  %4205 = vmatprep.subr.mxu0 0.0
  %4206 = vmatpush2.xpose.msra.mxu0 0.0
  %4207 = vmatprep.subr.mxu0 0.0
  %4208 = vmatpush2.xpose.msra.mxu0 0.0
  %4209 = vmatprep.subr.mxu0 0.0
  %4210 = vmatpush2.xpose.msra.mxu0 0.0
  %4211 = vmatprep.subr.mxu0 0.0
  %4212 = vmatpush2.xpose.msra.mxu0 0.0
  %4213 = vmatprep.subr.mxu0 0.0
  %4214 = vmatpush2.xpose.msra.mxu0 0.0
  %4215 = vmatprep.subr.mxu0 0.0
  %4216 = vmatpush2.xpose.msra.mxu0 0.0
  %4217 = vmatprep.subr.mxu0 0.0
  %4218 = vmatpush2.xpose.msra.mxu0 0.0
  %4219 = vmatprep.mubr.f32.mxu0 0.0
  %v4220 = vand.u32 %v3725, 4294901760
  %4221 = vmatmul.mubr.f32.gmra.mxu0 %v4220
  %v4222 = vpop.f32.mrf.mxu0
  %v4223 = vadd.f32 %v4144, %v4222
  %v4224 = vpop.f32.mrf.mxu0
  %4225 = vmatprep.mubr.f32.mxu0 0.0
  %v4226 = vand.u32 %v3728, 4294901760
  %4227 = vmatmul.mubr.f32.gmra.mxu0 %v4226
  %v4228 = vpop.f32.mrf.mxu0
  %v4229 = vadd.f32 %v4150, %v4228
  %v4230 = vpop.f32.mrf.mxu0
  %4231 = vdwg.mxu0
  %v4232 = vadd.f32 %v4223, %v2126
  %v4233 = vadd.f32 %v4229, %v2126
  %vm4234 = vcmp.gt.f32.partialorder %v3715, 0.5
  %vm4235 = vcmp.gt.f32.partialorder %v3721, 0.5
  %v4236 = vsel %vm4234, %v4232, -100000.0
  %v4237 = vsel %vm4235, %v4233, -100000.0
  %v4238 = vsel %vm2134, %v4236, -inf
  %4239 = vmax.xlane.f32.xlu0 %v4238
  %v4240 = vpop.xlane.xlu0 %4239
  %v4241 = vsel %vm2138, %v4237, -inf
  %4242 = vmax.xlane.f32.xlu0 %v4241
  %v4243 = vpop.xlane.xlu0 %4242
  %v4244 = vsub.f32 %v4236, %v4240
  %v4245 = vsub.f32 %v4237, %v4243
  %v4246 = vmul.f32 %v4244, 1.442695
  %v4247 = vpow.pop %v4246
  %v4248 = vmul.f32 %v4245, 1.442695
  %v4249 = vpow.pop %v4248
  %v4250 = vsel %vm2134, %v4247, 0.0
  %4251 = vadd.xlane.f32.xlu0 %v4250
  %v4252 = vpop.xlane.xlu0 %4251
  %v4253 = vsel %vm2138, %v4249, 0.0
  %4254 = vadd.xlane.f32.xlu0 %v4253
  %v4255 = vpop.xlane.xlu0 %4254
  %v4256 = vrcp.pop %v4252
  %v4257 = vrcp.pop %v4255
  %v4258 = vmul.f32 %v4247, %v4256
  %v4259 = vmul.f32 %v4249, %v4257
  %s4260 = scalar_lea.vmem %s5, 16
  %4261 = vst.msk [vmem:[%s4260] sm:$0xff] %vm2134, %v4258
  %4262 = vst.msk [vmem:[%s4260 + $0x8] sm:$0x3f] %vm2138, %v4259
  // Predicated region
  $region22: #{pi_pooling_softmax_forward.3} parent=0 // pred_check
    _
  $region23: #{pi_pooling_softmax_forward.3} parent=0 // pred_check_branch
    %4264 = sbr.rel (0) target = $region25
  $region24: #{pi_pooling_softmax_forward.3} parent=0 // pred_region
    _
  $region25: #{pi_pooling_softmax_forward.3} parent=0 // pred_fallthru
    _
  // Predicated region
  $region26: #{pi_pooling_softmax_forward.3} parent=0 // pred_check
    _
  $region27: #{pi_pooling_softmax_forward.3} parent=0 // pred_check_branch
    %4266 = sbr.rel (0) target = $region29
  $region28: #{pi_pooling_softmax_forward.3} parent=0 // pred_region
    _
  $region29: #{pi_pooling_softmax_forward.3} parent=0 // pred_fallthru
    _

</llo_original>
